<compile_context>
chip_gen: v7x
topology: tpu7x:2x2x1
jax: 0.10.0
libtpu: 0.0.40
codegen_flags: <defaults>
</compile_context>

<pallas_src>
import numpy as np
from itertools import product

import jax
import jax.numpy as jnp
from jax.experimental import pallas as pl
from jax.experimental.pallas import tpu as pltpu

# ----------------------- configuration (small shapes) -----------------------
INPUT_SHAPE = (1, 8, 8)        # (C, H, W) as in the PyTorch module
BATCH = 2
NUM_CONV_FEATURES = [8]        # num_conv_layers = 1
CONV_KERNEL_SIDES = [3]
NUM_FC_LAYERS = 1              # single Linear, no trailing ReLU

Cout = NUM_CONV_FEATURES[0]
K = CONV_KERNEL_SIDES[0]
H, W = INPUT_SHAPE[1], INPUT_SHAPE[2]
PAD = int(K / 2.0)


# ------------- mirror of simple_meta_net.__init__ shape bookkeeping ---------
def build_shape_dict():
    coupling_params = {
        "num_layers": 2,
        "vertical": {"stride": [(2, 2)], "num_features": [4], "kernel_side": [3]},
        "horizontal": {"stride": [(2, 2), (2, 2)], "kernel_side": [3, 3]},
    }
    num_layers = coupling_params["num_layers"]
    v_stride = coupling_params["vertical"]["stride"]
    v_num_features = coupling_params["vertical"]["num_features"]
    v_kernel_side = coupling_params["vertical"]["kernel_side"]
    h_kernel_side = coupling_params["horizontal"]["kernel_side"]

    shape_dict = {"layer_shape": [INPUT_SHAPE]}
    layer_side = INPUT_SHAPE[1]
    for l in range(num_layers - 1):
        k = v_kernel_side[l]
        layer_side = int(np.floor((layer_side - k + 1) / float(v_stride[0][0])))
        shape_dict["layer_shape"].append((v_num_features[l], layer_side, layer_side))

    total = 0
    for l in range(num_layers - 1):
        key = "coupling_shape_{}{}".format(l, l + 1)
        k = v_kernel_side[l]
        sb = shape_dict["layer_shape"][l]
        st = shape_dict["layer_shape"][l + 1]
        shape_dict[key] = (st[0] * st[1] * st[2], sb[0] * k ** 2)
        total += shape_dict[key][0] * shape_dict[key][1]
    for l in range(num_layers):
        key = "coupling_shape_{}{}".format(l, l)
        k = h_kernel_side[l]
        s = shape_dict["layer_shape"][l]
        shape_dict[key] = (s[0] * s[1] * s[2], s[0] * k ** 2)
        total += shape_dict[key][0] * shape_dict[key][1]
    return shape_dict, total, num_layers


SHAPE_DICT, TOTAL_COUPLINGS, NUM_LAYERS = build_shape_dict()
FC_IN = Cout * H * W                                        # 8*8*8 = 512
FC_OUT = TOTAL_COUPLINGS                                    # 2196
FC_OUT_PAD = ((FC_OUT + 127) // 128) * 128                  # 2304 (lane multiple)
MPAD = 8                                                    # sublane-padded batch


# ------------------------------ Pallas kernel --------------------------------
def fused_kernel(x_ref, we_ref, cb_ref, wfc_ref, bfc_ref, o_ref):
    """conv(as Toeplitz matmul) + bias + ReLU + Linear, all in one step.

    x_ref:   (MPAD, H*W)           flattened (unpadded) single-channel input
    we_ref:  (H*W, FC_IN)          Toeplitz conv matrix (channel-major columns)
    cb_ref:  (1, FC_IN)            conv bias expanded per output feature
    wfc_ref: (FC_IN, FC_OUT_PAD)   FC weight, pre-transposed + zero-padded
    bfc_ref: (1, FC_OUT_PAD)       FC bias, zero-padded
    o_ref:   (MPAD, FC_OUT_PAD)
    """
    feat = jnp.dot(x_ref[...], we_ref[...],
                   preferred_element_type=jnp.float32) + cb_ref[...]
    feat = jnp.maximum(feat, 0.0)                            # (MPAD, FC_IN)
    o_ref[...] = jnp.dot(feat, wfc_ref[...],
                         preferred_element_type=jnp.float32) + bfc_ref[...]


def fused_forward(x_flat, we, cb, wfc, bfc):
    return pl.pallas_call(
        fused_kernel,
        out_shape=jax.ShapeDtypeStruct((MPAD, FC_OUT_PAD), jnp.float32),
        grid=(1,),
        in_specs=[
            pl.BlockSpec((MPAD, H * W), lambda i: (0, 0)),
            pl.BlockSpec((H * W, FC_IN), lambda i: (0, 0)),
            pl.BlockSpec((1, FC_IN), lambda i: (0, 0)),
            pl.BlockSpec((FC_IN, FC_OUT_PAD), lambda i: (0, 0)),
            pl.BlockSpec((1, FC_OUT_PAD), lambda i: (0, 0)),
        ],
        out_specs=pl.BlockSpec((MPAD, FC_OUT_PAD), lambda i: (0, 0)),
        compiler_params=pltpu.CompilerParams(
            dimension_semantics=("arbitrary",)),
    )(x_flat, we, cb, wfc, bfc)


# ------------------------ parameter init & preprocessing ---------------------
def init_params(key):
    """Raw parameters, matching the PyTorch module's shapes."""
    k1, k2, k3, k4 = jax.random.split(key, 4)
    fan_in_conv = 1 * K * K
    conv_w = jax.random.uniform(
        k1, (Cout, K, K), jnp.float32, -1.0, 1.0) / np.sqrt(fan_in_conv)
    conv_b = jax.random.uniform(
        k2, (Cout,), jnp.float32, -1.0, 1.0) / np.sqrt(fan_in_conv)
    fc_w = jax.random.uniform(
        k3, (FC_OUT, FC_IN), jnp.float32, -1.0, 1.0) / np.sqrt(FC_IN)
    fc_b = jax.random.uniform(
        k4, (FC_OUT,), jnp.float32, -1.0, 1.0) / np.sqrt(FC_IN)
    return conv_w, conv_b, fc_w, fc_b


def prepare_params(conv_w, conv_b, fc_w, fc_b):
    """One-time preprocessing (done at init, NOT per forward).

    * conv -> Toeplitz matrix (H*W, Cout*H*W); zero padding of the conv input
      is absorbed (out-of-range taps omitted).  Column order is channel-major
      (c*H*W + h*W + w) so it matches torch's x.reshape(batch, -1).
    * fc weight transposed to (FC_IN, FC_OUT_PAD) and zero-padded on N.
    """
    cw = np.asarray(conv_w)                                  # (Cout, K, K)
    we = np.zeros((H * W, FC_IN), np.float32)
    c_cols = np.arange(Cout) * (H * W)
    for kh in range(K):
        for kw in range(K):
            for h in range(H):
                ih = h + kh - PAD
                if ih < 0 or ih >= H:
                    continue
                for w in range(W):
                    iw = w + kw - PAD
                    if iw < 0 or iw >= W:
                        continue
                    we[ih * W + iw, c_cols + h * W + w] = cw[:, kh, kw]

    cb = np.repeat(np.asarray(conv_b), H * W)[None, :].astype(np.float32)

    wfc = np.zeros((FC_IN, FC_OUT_PAD), np.float32)
    wfc[:, :FC_OUT] = np.asarray(fc_w).T
    bfc = np.zeros((1, FC_OUT_PAD), np.float32)
    bfc[0, :FC_OUT] = np.asarray(fc_b)

    return (jnp.asarray(we), jnp.asarray(cb),
            jnp.asarray(wfc), jnp.asarray(bfc))


# --------------------------------- wrapper -----------------------------------
def forward(x, prepped):
    """x: (B, 1, H, W) float32 (NCHW, like PyTorch). Returns coupling dict."""
    we, cb, wfc, bfc = prepped
    B = x.shape[0]

    # flatten the single input channel; pad batch rows to a sublane multiple
    x_flat = x.reshape(B, H * W).astype(jnp.float32)
    x_flat = jnp.pad(x_flat, ((0, MPAD - B), (0, 0)))

    y = fused_forward(x_flat, we, cb, wfc, bfc)[:B, :FC_OUT]   # (B, FC_OUT)

    # split into coupling matrices (pure glue, matches PyTorch slicing order)
    coupling_dict = {}
    last = 0
    for i, j in product(range(NUM_LAYERS), range(NUM_LAYERS)):
        if j < i:
            continue
        shp = SHAPE_DICT["coupling_shape_{}{}".format(i, j)]
        n = shp[0] * shp[1]
        coupling_dict["couplings_{}{}".format(i, j)] = (
            y[:, last:last + n].reshape(-1, shp[0], shp[1]))
        last += n
    return coupling_dict


# ------------------------------ reference check ------------------------------
def forward_ref(x, params):
    conv_w, conv_b, fc_w, fc_b = params
    B = x.shape[0]
    out = jax.lax.conv_general_dilated(
        x, conv_w[:, None, :, :], window_strides=(1, 1),
        padding=((PAD, PAD), (PAD, PAD)),
        dimension_numbers=("NCHW", "OIHW", "NCHW"))
    out = jnp.maximum(out + conv_b[None, :, None, None], 0.0)
    feat = out.reshape(B, -1)
    return feat @ fc_w.T + fc_b[None, :]


if __name__ == "__main__":
    key = jax.random.PRNGKey(0)
    kx, kp = jax.random.split(key)
    x = jax.random.normal(kx, (BATCH, 1, H, W), jnp.float32)
    params = init_params(kp)
    prepped = prepare_params(*params)          # one-time weight preprocessing

    couplings = forward(x, prepped)
    couplings = jax.block_until_ready(couplings)

    # correctness vs plain-JAX reference (reassemble flat vector from dict)
    flat = jnp.concatenate(
        [couplings["couplings_00"].reshape(BATCH, -1),
         couplings["couplings_01"].reshape(BATCH, -1),
         couplings["couplings_11"].reshape(BATCH, -1)], axis=1)
    ref = forward_ref(x, params)
    np.testing.assert_allclose(np.asarray(flat), np.asarray(ref),
                               rtol=1e-5, atol=2e-5)

    # sanity-check output shapes of the coupling dict
    assert couplings["couplings_00"].shape == (BATCH,) + tuple(SHAPE_DICT["coupling_shape_00"])
    assert couplings["couplings_01"].shape == (BATCH,) + tuple(SHAPE_DICT["coupling_shape_01"])
    assert couplings["couplings_11"].shape == (BATCH,) + tuple(SHAPE_DICT["coupling_shape_11"])

    print("KERNEL_OK")
</pallas_src>

<mosaic_0001>
module attributes {stable_mosaic.version = 11 : i64} {
  func.func @fused_kernel(%arg0: i32, %arg1: memref<8x64xf32, #tpu.memory_space<vmem>>, %arg2: memref<64x512xf32, #tpu.memory_space<vmem>>, %arg3: memref<1x512xf32, #tpu.memory_space<vmem>>, %arg4: memref<512x2304xf32, #tpu.memory_space<vmem>>, %arg5: memref<1x2304xf32, #tpu.memory_space<vmem>>, %arg6: memref<8x2304xf32, #tpu.memory_space<vmem>>) attributes {dimension_semantics = [#tpu.dimension_semantics<arbitrary>], iteration_bounds = array<i64: 1>, scalar_prefetch = 0 : i64, scratch_operands = 0 : i64, tpu.core_type = #tpu.core_type<tc>, window_params = [{pipeline_mode = #tpu.pipeline_mode<synchronous>, transform_indices = @transform_0, window_bounds = array<i64: 8, 64>}, {pipeline_mode = #tpu.pipeline_mode<synchronous>, transform_indices = @transform_1, window_bounds = array<i64: 64, 512>}, {pipeline_mode = #tpu.pipeline_mode<synchronous>, transform_indices = @transform_2, window_bounds = array<i64: 1, 512>}, {pipeline_mode = #tpu.pipeline_mode<synchronous>, transform_indices = @transform_3, window_bounds = array<i64: 512, 2304>}, {pipeline_mode = #tpu.pipeline_mode<synchronous>, transform_indices = @transform_4, window_bounds = array<i64: 1, 2304>}, {pipeline_mode = #tpu.pipeline_mode<synchronous>, transform_indices = @transform_5, window_bounds = array<i64: 8, 2304>}]} {
    %c0 = arith.constant 0 : index
    %c0_0 = arith.constant 0 : index
    %0 = vector.load %arg1[%c0, %c0_0] : memref<8x64xf32, #tpu.memory_space<vmem>>, vector<8x64xf32>
    %c0_1 = arith.constant 0 : index
    %c0_2 = arith.constant 0 : index
    %1 = vector.load %arg2[%c0_1, %c0_2] : memref<64x512xf32, #tpu.memory_space<vmem>>, vector<64x512xf32>
    %cst = arith.constant dense<0.000000e+00> : vector<8x512xf32>
    %2 = tpu.matmul %0, %1, %cst {dimension_numbers = #tpu.dot_dimension_numbers<[1], [0], [0], [1], [0, 0, 1, 1], [], []>} : vector<8x64xf32>, vector<64x512xf32>, vector<8x512xf32> -> vector<8x512xf32>
    %c0_3 = arith.constant 0 : index
    %c0_4 = arith.constant 0 : index
    %3 = vector.load %arg3[%c0_3, %c0_4] : memref<1x512xf32, #tpu.memory_space<vmem>>, vector<1x512xf32>
    %4 = vector.broadcast %3 : vector<1x512xf32> to vector<8x512xf32>
    %5 = arith.addf %2, %4 : vector<8x512xf32>
    %cst_5 = arith.constant 0.000000e+00 : f32
    %6 = vector.broadcast %cst_5 : f32 to vector<8x512xf32>
    %7 = arith.maximumf %5, %6 : vector<8x512xf32>
    %c0_6 = arith.constant 0 : index
    %c0_7 = arith.constant 0 : index
    %8 = vector.load %arg4[%c0_6, %c0_7] : memref<512x2304xf32, #tpu.memory_space<vmem>>, vector<512x2304xf32>
    %cst_8 = arith.constant dense<0.000000e+00> : vector<8x2304xf32>
    %9 = tpu.matmul %7, %8, %cst_8 {dimension_numbers = #tpu.dot_dimension_numbers<[1], [0], [0], [1], [0, 0, 1, 1], [], []>} : vector<8x512xf32>, vector<512x2304xf32>, vector<8x2304xf32> -> vector<8x2304xf32>
    %c0_9 = arith.constant 0 : index
    %c0_10 = arith.constant 0 : index
    %10 = vector.load %arg5[%c0_9, %c0_10] : memref<1x2304xf32, #tpu.memory_space<vmem>>, vector<1x2304xf32>
    %11 = vector.broadcast %10 : vector<1x2304xf32> to vector<8x2304xf32>
    %12 = arith.addf %9, %11 : vector<8x2304xf32>
    %c0_11 = arith.constant 0 : index
    %c0_12 = arith.constant 0 : index
    %13 = vector.load %arg6[%c0_11, %c0_12] : memref<8x2304xf32, #tpu.memory_space<vmem>>, vector<8x2304xf32>
    tpu.vector_store %arg6[%c0_11, %c0_12], %12 {strides = array<i32>} : memref<8x2304xf32, #tpu.memory_space<vmem>>, vector<8x2304xf32>,
    return
  }
  func.func @transform_0(%arg0: i32) -> (i32, i32) {
    %c0_i32 = arith.constant 0 : i32
    %c0_i32_0 = arith.constant 0 : i32
    %c0_i32_1 = arith.constant 0 : i32
    return %c0_i32, %c0_i32_0 : i32, i32
  }
  func.func @transform_1(%arg0: i32) -> (i32, i32) {
    %c0_i32 = arith.constant 0 : i32
    %c0_i32_0 = arith.constant 0 : i32
    %c0_i32_1 = arith.constant 0 : i32
    return %c0_i32, %c0_i32_0 : i32, i32
  }
  func.func @transform_2(%arg0: i32) -> (i32, i32) {
    %c0_i32 = arith.constant 0 : i32
    %c0_i32_0 = arith.constant 0 : i32
    %c0_i32_1 = arith.constant 0 : i32
    return %c0_i32, %c0_i32_0 : i32, i32
  }
  func.func @transform_3(%arg0: i32) -> (i32, i32) {
    %c0_i32 = arith.constant 0 : i32
    %c0_i32_0 = arith.constant 0 : i32
    %c0_i32_1 = arith.constant 0 : i32
    return %c0_i32, %c0_i32_0 : i32, i32
  }
  func.func @transform_4(%arg0: i32) -> (i32, i32) {
    %c0_i32 = arith.constant 0 : i32
    %c0_i32_0 = arith.constant 0 : i32
    %c0_i32_1 = arith.constant 0 : i32
    return %c0_i32, %c0_i32_0 : i32, i32
  }
  func.func @transform_5(%arg0: i32) -> (i32, i32) {
    %c0_i32 = arith.constant 0 : i32
    %c0_i32_0 = arith.constant 0 : i32
    %c0_i32_1 = arith.constant 0 : i32
    return %c0_i32, %c0_i32_0 : i32, i32
  }
}

</mosaic_0001>

<llo_original>
// kernel: tpu_custom_call.1
$region0: #{tpu_custom_call.1}
  #allocation0 [shape = 'u32[]', space=smem, size = 0x4, offset = 0x4, fixed_abs, tag = 'smem constant byte address 0x4 - core index']
  #allocation1 [shape = 'u32[144,128]{1,0:T(1,128)}', space=vmem, size = 0x12000, scoped, tag = 'internal scratch']
  %s0 = inlined_call_operand.hbm [shape: f32[8,64], index: 0, kind: input, shape index: {}]
  %s1 = inlined_call_operand.hbm [shape: f32[64,512], index: 1, kind: input, shape index: {}]
  %s2 = inlined_call_operand.hbm [shape: f32[1,512], index: 2, kind: input, shape index: {}]
  %s3 = inlined_call_operand.hbm [shape: f32[512,2304], index: 3, kind: input, shape index: {}]
  %s4 = inlined_call_operand.hbm [shape: f32[1,2304], index: 4, kind: input, shape index: {}]
  %s5 = inlined_call_operand.hbm [shape: f32[8,2304], index: 5, kind: output, shape index: {}]
  %s6 = sld [smem:[#allocation0]]
  $region50: #{tpu_custom_call.1} parent=0
    _
  %s8 = ssub.s32 1, %s6
  %s9 = scalar_select 0, %s8, %s6
  $region1: #{tpu_custom_call.1} parent=0
    #allocation2 [shape = 'u8[4096]{0}', space=vmem, size = 0x1000, scoped, tag = 'input window, operand 0, single buffered']
    #allocation3 [shape = 's32[1]{0}', space=sflag, size = 0x4, scoped, tag = 'scoped memory for tpu_custom_call.1']
    #allocation4 [shape = 's32[1]{0}', space=sflag, size = 0x4, scoped, tag = 'scoped memory for tpu_custom_call.1']
    #allocation5 [shape = 'u8[131072]{0}', space=vmem, size = 0x20000, scoped, tag = 'input window, operand 1, single buffered']
    #allocation6 [shape = 's32[1]{0}', space=sflag, size = 0x4, scoped, tag = 'scoped memory for tpu_custom_call.1']
    #allocation7 [shape = 'u8[2048]{0}', space=vmem, size = 0x800, scoped, tag = 'input window, operand 2, single buffered']
    #allocation8 [shape = 'u8[4718592]{0}', space=vmem, size = 0x480000, scoped, tag = 'input window, operand 3, single buffered']
    #allocation9 [shape = 's32[1]{0}', space=sflag, size = 0x4, scoped, tag = 'scoped memory for tpu_custom_call.1']
    #allocation10 [shape = 'u8[9216]{0}', space=vmem, size = 0x2400, scoped, tag = 'input window, operand 4, single buffered']
    #allocation11 [shape = 'u8[73728]{0}', space=vmem, size = 0x12000, scoped, tag = 'output window, operand 0, single buffered']
    %10 = vsyncpa [#allocation3], 0
    %11 = vsyncpa [#allocation6], 0
    %12 = vsyncpa [#allocation9], 0
    %13 = vsyncpa [#allocation4], 0
    // Predicated region
    $region2: #{tpu_custom_call.1} parent=1 // pred_check
      _
    $region3: #{tpu_custom_call.1} parent=1 // pred_check_branch
      %15 = sbr.rel (0) target = $region5
    $region4: #{tpu_custom_call.1} parent=1 // pred_region
      %s17 = ssub.s32 128, 128
      %18 = vsyncadd [#allocation3], %s17
      %s20 = sshll.u32 [#allocation2], 4
      %s21 = int_to_ptr.vmem [resolvable:$true] %s20
      %23 = dma.hbm_to_vmem [thread:$0]  %s0, 128, %s21, [#allocation3]
    $region5: #{tpu_custom_call.1} parent=1 // pred_fallthru
      _
    // Predicated region
    $region6: #{tpu_custom_call.1} parent=1 // pred_check
      _
    $region7: #{tpu_custom_call.1} parent=1 // pred_check_branch
      %25 = sbr.rel (0) target = $region9
    $region8: #{tpu_custom_call.1} parent=1 // pred_region
      %s27 = ssub.s32 4096, 4096
      %28 = vsyncadd [#allocation6], %s27
      %s29 = sshll.u32 [#allocation5], 4
      %s30 = int_to_ptr.vmem [resolvable:$true] %s29
      %35 = dma.hbm_to_vmem [thread:$0]  %s1, 4096, %s30, [#allocation6], 512, 512, 32
    $region9: #{tpu_custom_call.1} parent=1 // pred_fallthru
      _
    // Predicated region
    $region10: #{tpu_custom_call.1} parent=1 // pred_check
      _
    $region11: #{tpu_custom_call.1} parent=1 // pred_check_branch
      %37 = sbr.rel (0) target = $region13
    $region12: #{tpu_custom_call.1} parent=1 // pred_region
      %s39 = ssub.s32 64, 64
      %40 = vsyncadd [#allocation6], %s39
      %s42 = sshll.u32 [#allocation7], 4
      %s43 = int_to_ptr.vmem [resolvable:$true] %s42
      %45 = dma.hbm_to_vmem [thread:$0]  %s2, 64, %s43, [#allocation6]
    $region13: #{tpu_custom_call.1} parent=1 // pred_fallthru
      _
    // Predicated region
    $region14: #{tpu_custom_call.1} parent=1 // pred_check
      _
    $region15: #{tpu_custom_call.1} parent=1 // pred_check_branch
      %47 = sbr.rel (0) target = $region17
    $region16: #{tpu_custom_call.1} parent=1 // pred_region
      %s49 = ssub.s32 147456, 147456
      %50 = vsyncadd [#allocation9], %s49
      %s51 = sshll.u32 [#allocation8], 4
      %s52 = int_to_ptr.vmem [resolvable:$true] %s51
      %57 = dma.hbm_to_vmem [thread:$0]  %s3, 147456, %s52, [#allocation9], 2304, 2304, 144
    $region17: #{tpu_custom_call.1} parent=1 // pred_fallthru
      _
    // Predicated region
    $region18: #{tpu_custom_call.1} parent=1 // pred_check
      _
    $region19: #{tpu_custom_call.1} parent=1 // pred_check_branch
      %59 = sbr.rel (0) target = $region21
    $region20: #{tpu_custom_call.1} parent=1 // pred_region
      %s61 = ssub.s32 288, 288
      %62 = vsyncadd [#allocation9], %s61
      %s64 = sshll.u32 [#allocation10], 4
      %s65 = int_to_ptr.vmem [resolvable:$true] %s64
      %67 = dma.hbm_to_vmem [thread:$0]  %s4, 288, %s65, [#allocation9]
    $region21: #{tpu_custom_call.1} parent=1 // pred_fallthru
      _
    // Predicated region
    $region22: #{tpu_custom_call.1} parent=1 // pred_check
      _
    $region23: #{tpu_custom_call.1} parent=1 // pred_check_branch
      %69 = sbr.rel (0) target = $region25
    $region24: #{tpu_custom_call.1} parent=1 // pred_region
      %70 = dma.done [#allocation3], 128
    $region25: #{tpu_custom_call.1} parent=1 // pred_fallthru
      _
    // Predicated region
    $region26: #{tpu_custom_call.1} parent=1 // pred_check
      _
    $region27: #{tpu_custom_call.1} parent=1 // pred_check_branch
      %72 = sbr.rel (0) target = $region29
    $region28: #{tpu_custom_call.1} parent=1 // pred_region
      %73 = dma.done [#allocation6], 4096
    $region29: #{tpu_custom_call.1} parent=1 // pred_fallthru
      _
    // Predicated region
    $region30: #{tpu_custom_call.1} parent=1 // pred_check
      _
    $region31: #{tpu_custom_call.1} parent=1 // pred_check_branch
      %75 = sbr.rel (0) target = $region33
    $region32: #{tpu_custom_call.1} parent=1 // pred_region
      %76 = dma.done [#allocation6], 64
    $region33: #{tpu_custom_call.1} parent=1 // pred_fallthru
      _
    // Predicated region
    $region34: #{tpu_custom_call.1} parent=1 // pred_check
      _
    $region35: #{tpu_custom_call.1} parent=1 // pred_check_branch
      %78 = sbr.rel (0) target = $region37
    $region36: #{tpu_custom_call.1} parent=1 // pred_region
      %79 = dma.done [#allocation9], 147456
    $region37: #{tpu_custom_call.1} parent=1 // pred_fallthru
      _
    // Predicated region
    $region38: #{tpu_custom_call.1} parent=1 // pred_check
      _
    $region39: #{tpu_custom_call.1} parent=1 // pred_check_branch
      %81 = sbr.rel (0) target = $region41
    $region40: #{tpu_custom_call.1} parent=1 // pred_region
      %82 = dma.done [#allocation9], 288
    $region41: #{tpu_custom_call.1} parent=1 // pred_fallthru
      _
    %v83 = vld [vmem:[#allocation2] sm:$0xff]
    %v84 = vld [vmem:[#allocation5] sm:$0xff]
    %v85 = vld [vmem:[#allocation5 + $0x8] sm:$0xff]
    %v86 = vld [vmem:[#allocation5 + $0x10] sm:$0xff]
    %v87 = vld [vmem:[#allocation5 + $0x18] sm:$0xff]
    %v88 = vld [vmem:[#allocation5 + $0x20] sm:$0xff]
    %v89 = vld [vmem:[#allocation5 + $0x28] sm:$0xff]
    %v90 = vld [vmem:[#allocation5 + $0x30] sm:$0xff]
    %v91 = vld [vmem:[#allocation5 + $0x38] sm:$0xff]
    %v92 = vld [vmem:[#allocation5 + $0x40] sm:$0xff]
    %v93 = vld [vmem:[#allocation5 + $0x48] sm:$0xff]
    %v94 = vld [vmem:[#allocation5 + $0x50] sm:$0xff]
    %v95 = vld [vmem:[#allocation5 + $0x58] sm:$0xff]
    %v96 = vld [vmem:[#allocation5 + $0x60] sm:$0xff]
    %v97 = vld [vmem:[#allocation5 + $0x68] sm:$0xff]
    %v98 = vld [vmem:[#allocation5 + $0x70] sm:$0xff]
    %v99 = vld [vmem:[#allocation5 + $0x78] sm:$0xff]
    %v100 = vld [vmem:[#allocation5 + $0x80] sm:$0xff]
    %v101 = vld [vmem:[#allocation5 + $0x88] sm:$0xff]
    %v102 = vld [vmem:[#allocation5 + $0x90] sm:$0xff]
    %v103 = vld [vmem:[#allocation5 + $0x98] sm:$0xff]
    %v104 = vld [vmem:[#allocation5 + $0xa0] sm:$0xff]
    %v105 = vld [vmem:[#allocation5 + $0xa8] sm:$0xff]
    %v106 = vld [vmem:[#allocation5 + $0xb0] sm:$0xff]
    %v107 = vld [vmem:[#allocation5 + $0xb8] sm:$0xff]
    %v108 = vld [vmem:[#allocation5 + $0xc0] sm:$0xff]
    %v109 = vld [vmem:[#allocation5 + $0xc8] sm:$0xff]
    %v110 = vld [vmem:[#allocation5 + $0xd0] sm:$0xff]
    %v111 = vld [vmem:[#allocation5 + $0xd8] sm:$0xff]
    %v112 = vld [vmem:[#allocation5 + $0xe0] sm:$0xff]
    %v113 = vld [vmem:[#allocation5 + $0xe8] sm:$0xff]
    %v114 = vld [vmem:[#allocation5 + $0xf0] sm:$0xff]
    %v115 = vld [vmem:[#allocation5 + $0xf8] sm:$0xff]
    %v116 = vld [vmem:[#allocation7] sm:$0xf]
    %v118 = vlaneseq
    %v119 = vshrl.u32 %v118, 7
    %v120 = vsub.s32 0, %v119
    %v121 = vrot.slane %v116, %v120
    %v122 = vlaneseq
    %v123 = vshrl.u32 %v122, 7
    %v124 = vsub.s32 1, %v123
    %v125 = vrot.slane %v116, %v124
    %v126 = vlaneseq
    %v127 = vshrl.u32 %v126, 7
    %v128 = vsub.s32 2, %v127
    %v129 = vrot.slane %v116, %v128
    %v130 = vlaneseq
    %v131 = vshrl.u32 %v130, 7
    %v132 = vsub.s32 3, %v131
    %v133 = vrot.slane %v116, %v132
    %vm138 = vcmask 523264
    %v140 = vsel %vm138, %v83, 0
    %142 = vmatprep.subr.mxu0 %v85
    %143 = vmatpush1.msra.mxu0 %v84
    %144 = vmatprep.subr.mxu0 %v89
    %145 = vmatpush1.msra.mxu0 %v88
    %146 = vmatprep.subr.mxu0 %v93
    %147 = vmatpush1.msra.mxu0 %v92
    %148 = vmatprep.subr.mxu0 %v97
    %149 = vmatpush1.msra.mxu0 %v96
    %150 = vmatprep.subr.mxu0 %v101
    %151 = vmatpush1.msra.mxu0 %v100
    %152 = vmatprep.subr.mxu0 %v105
    %153 = vmatpush1.msra.mxu0 %v104
    %154 = vmatprep.subr.mxu0 %v109
    %155 = vmatpush1.msra.mxu0 %v108
    %156 = vmatprep.subr.mxu0 %v113
    %157 = vmatpush1.msra.mxu0 %v112
    %158 = vmatprep.subr.mxu0 0.0
    %159 = vmatpush1.msra.mxu0 0.0
    %160 = vmatprep.subr.mxu0 0.0
    %161 = vmatpush1.msra.mxu0 0.0
    %162 = vmatprep.subr.mxu0 0.0
    %163 = vmatpush1.msra.mxu0 0.0
    %164 = vmatprep.subr.mxu0 0.0
    %165 = vmatpush1.msra.mxu0 0.0
    %166 = vmatprep.subr.mxu0 0.0
    %167 = vmatpush1.msra.mxu0 0.0
    %168 = vmatprep.subr.mxu0 0.0
    %169 = vmatpush1.msra.mxu0 0.0
    %170 = vmatprep.subr.mxu0 0.0
    %171 = vmatpush1.msra.mxu0 0.0
    %172 = vmatprep.subr.mxu0 0.0
    %173 = vmatpush1.msra.mxu0 0.0
    %174 = vmatprep.subr.mxu0 0.0
    %175 = vmatpush1.msra.mxu0 0.0
    %176 = vmatprep.subr.mxu0 0.0
    %177 = vmatpush1.msra.mxu0 0.0
    %178 = vmatprep.subr.mxu0 0.0
    %179 = vmatpush1.msra.mxu0 0.0
    %180 = vmatprep.subr.mxu0 0.0
    %181 = vmatpush1.msra.mxu0 0.0
    %182 = vmatprep.subr.mxu0 0.0
    %183 = vmatpush1.msra.mxu0 0.0
    %184 = vmatprep.subr.mxu0 0.0
    %185 = vmatpush1.msra.mxu0 0.0
    %186 = vmatprep.subr.mxu0 0.0
    %187 = vmatpush1.msra.mxu0 0.0
    %188 = vmatprep.subr.mxu0 0.0
    %189 = vmatpush1.msra.mxu0 0.0
    %190 = vmatprep.subr.mxu0 0.0
    %191 = vmatpush1.msra.mxu0 0.0
    %192 = vmatprep.subr.mxu0 0.0
    %193 = vmatpush1.msra.mxu0 0.0
    %194 = vmatprep.subr.mxu0 0.0
    %195 = vmatpush1.msra.mxu0 0.0
    %196 = vmatprep.subr.mxu0 0.0
    %197 = vmatpush1.msra.mxu0 0.0
    %198 = vmatprep.subr.mxu0 0.0
    %199 = vmatpush1.msra.mxu0 0.0
    %200 = vmatprep.subr.mxu0 0.0
    %201 = vmatpush1.msra.mxu0 0.0
    %202 = vmatprep.subr.mxu0 0.0
    %203 = vmatpush1.msra.mxu0 0.0
    %204 = vmatprep.subr.mxu0 0.0
    %205 = vmatpush1.msra.mxu0 0.0
    %206 = vmatprep.mubr.f32.mxu0 0.0
    %207 = vmatmul.mubr.f32.gmra.mrb[0].mxu0 %v140
    %v208 = vpop.f32.mrb[0].mxu0
    %v209 = vadd.f32 %v121, %v208
    %v210 = vpop.f32.mrb[0].mxu0
    %v211 = vadd.f32 %v125, %v210
    %212 = vdwg.mxu0
    %213 = vmatprep.subr.mxu0 %v87
    %214 = vmatpush1.msra.mxu0 %v86
    %215 = vmatprep.subr.mxu0 %v91
    %216 = vmatpush1.msra.mxu0 %v90
    %217 = vmatprep.subr.mxu0 %v95
    %218 = vmatpush1.msra.mxu0 %v94
    %219 = vmatprep.subr.mxu0 %v99
    %220 = vmatpush1.msra.mxu0 %v98
    %221 = vmatprep.subr.mxu0 %v103
    %222 = vmatpush1.msra.mxu0 %v102
    %223 = vmatprep.subr.mxu0 %v107
    %224 = vmatpush1.msra.mxu0 %v106
    %225 = vmatprep.subr.mxu0 %v111
    %226 = vmatpush1.msra.mxu0 %v110
    %227 = vmatprep.subr.mxu0 %v115
    %228 = vmatpush1.msra.mxu0 %v114
    %229 = vmatprep.subr.mxu0 0.0
    %230 = vmatpush1.msra.mxu0 0.0
    %231 = vmatprep.subr.mxu0 0.0
    %232 = vmatpush1.msra.mxu0 0.0
    %233 = vmatprep.subr.mxu0 0.0
    %234 = vmatpush1.msra.mxu0 0.0
    %235 = vmatprep.subr.mxu0 0.0
    %236 = vmatpush1.msra.mxu0 0.0
    %237 = vmatprep.subr.mxu0 0.0
    %238 = vmatpush1.msra.mxu0 0.0
    %239 = vmatprep.subr.mxu0 0.0
    %240 = vmatpush1.msra.mxu0 0.0
    %241 = vmatprep.subr.mxu0 0.0
    %242 = vmatpush1.msra.mxu0 0.0
    %243 = vmatprep.subr.mxu0 0.0
    %244 = vmatpush1.msra.mxu0 0.0
    %245 = vmatprep.subr.mxu0 0.0
    %246 = vmatpush1.msra.mxu0 0.0
    %247 = vmatprep.subr.mxu0 0.0
    %248 = vmatpush1.msra.mxu0 0.0
    %249 = vmatprep.subr.mxu0 0.0
    %250 = vmatpush1.msra.mxu0 0.0
    %251 = vmatprep.subr.mxu0 0.0
    %252 = vmatpush1.msra.mxu0 0.0
    %253 = vmatprep.subr.mxu0 0.0
    %254 = vmatpush1.msra.mxu0 0.0
    %255 = vmatprep.subr.mxu0 0.0
    %256 = vmatpush1.msra.mxu0 0.0
    %257 = vmatprep.subr.mxu0 0.0
    %258 = vmatpush1.msra.mxu0 0.0
    %259 = vmatprep.subr.mxu0 0.0
    %260 = vmatpush1.msra.mxu0 0.0
    %261 = vmatprep.subr.mxu0 0.0
    %262 = vmatpush1.msra.mxu0 0.0
    %263 = vmatprep.subr.mxu0 0.0
    %264 = vmatpush1.msra.mxu0 0.0
    %265 = vmatprep.subr.mxu0 0.0
    %266 = vmatpush1.msra.mxu0 0.0
    %267 = vmatprep.subr.mxu0 0.0
    %268 = vmatpush1.msra.mxu0 0.0
    %269 = vmatprep.subr.mxu0 0.0
    %270 = vmatpush1.msra.mxu0 0.0
    %271 = vmatprep.subr.mxu0 0.0
    %272 = vmatpush1.msra.mxu0 0.0
    %273 = vmatprep.subr.mxu0 0.0
    %274 = vmatpush1.msra.mxu0 0.0
    %275 = vmatprep.subr.mxu0 0.0
    %276 = vmatpush1.msra.mxu0 0.0
    %277 = vmatprep.mubr.f32.mxu0 0.0
    %278 = vmatmul.mubr.f32.gmra.mrb[0].mxu0 %v140
    %v279 = vpop.f32.mrb[0].mxu0
    %v280 = vadd.f32 %v129, %v279
    %v281 = vpop.f32.mrb[0].mxu0
    %v282 = vadd.f32 %v133, %v281
    %283 = vdwg.mxu0
    %v284 = vmax.f32 %v209, 0.0
    %v285 = vmax.f32 %v211, 0.0
    %v286 = vmax.f32 %v280, 0.0
    %v287 = vmax.f32 %v282, 0.0
    %v288 = vld [vmem:[#allocation8] sm:$0xff]
    %v289 = vld [vmem:[#allocation8 + $0x8] sm:$0xff]
    %v290 = vld [vmem:[#allocation8 + $0x10] sm:$0xff]
    %v291 = vld [vmem:[#allocation8 + $0x18] sm:$0xff]
    %v292 = vld [vmem:[#allocation8 + $0x20] sm:$0xff]
    %v293 = vld [vmem:[#allocation8 + $0x28] sm:$0xff]
    %v294 = vld [vmem:[#allocation8 + $0x30] sm:$0xff]
    %v295 = vld [vmem:[#allocation8 + $0x38] sm:$0xff]
    %v296 = vld [vmem:[#allocation8 + $0x40] sm:$0xff]
    %v297 = vld [vmem:[#allocation8 + $0x48] sm:$0xff]
    %v298 = vld [vmem:[#allocation8 + $0x50] sm:$0xff]
    %v299 = vld [vmem:[#allocation8 + $0x58] sm:$0xff]
    %v300 = vld [vmem:[#allocation8 + $0x60] sm:$0xff]
    %v301 = vld [vmem:[#allocation8 + $0x68] sm:$0xff]
    %v302 = vld [vmem:[#allocation8 + $0x70] sm:$0xff]
    %v303 = vld [vmem:[#allocation8 + $0x78] sm:$0xff]
    %v304 = vld [vmem:[#allocation8 + $0x80] sm:$0xff]
    %v305 = vld [vmem:[#allocation8 + $0x88] sm:$0xff]
    %v306 = vld [vmem:[#allocation8 + $0x90] sm:$0xff]
    %v307 = vld [vmem:[#allocation8 + $0x98] sm:$0xff]
    %v308 = vld [vmem:[#allocation8 + $0xa0] sm:$0xff]
    %v309 = vld [vmem:[#allocation8 + $0xa8] sm:$0xff]
    %v310 = vld [vmem:[#allocation8 + $0xb0] sm:$0xff]
    %v311 = vld [vmem:[#allocation8 + $0xb8] sm:$0xff]
    %v312 = vld [vmem:[#allocation8 + $0xc0] sm:$0xff]
    %v313 = vld [vmem:[#allocation8 + $0xc8] sm:$0xff]
    %v314 = vld [vmem:[#allocation8 + $0xd0] sm:$0xff]
    %v315 = vld [vmem:[#allocation8 + $0xd8] sm:$0xff]
    %v316 = vld [vmem:[#allocation8 + $0xe0] sm:$0xff]
    %v317 = vld [vmem:[#allocation8 + $0xe8] sm:$0xff]
    %v318 = vld [vmem:[#allocation8 + $0xf0] sm:$0xff]
    %v319 = vld [vmem:[#allocation8 + $0xf8] sm:$0xff]
    %v320 = vld [vmem:[#allocation8 + $0x100] sm:$0xff]
    %v321 = vld [vmem:[#allocation8 + $0x108] sm:$0xff]
    %v322 = vld [vmem:[#allocation8 + $0x110] sm:$0xff]
    %v323 = vld [vmem:[#allocation8 + $0x118] sm:$0xff]
    %v324 = vld [vmem:[#allocation8 + $0x120] sm:$0xff]
    %v325 = vld [vmem:[#allocation8 + $0x128] sm:$0xff]
    %v326 = vld [vmem:[#allocation8 + $0x130] sm:$0xff]
    %v327 = vld [vmem:[#allocation8 + $0x138] sm:$0xff]
    %v328 = vld [vmem:[#allocation8 + $0x140] sm:$0xff]
    %v329 = vld [vmem:[#allocation8 + $0x148] sm:$0xff]
    %v330 = vld [vmem:[#allocation8 + $0x150] sm:$0xff]
    %v331 = vld [vmem:[#allocation8 + $0x158] sm:$0xff]
    %v332 = vld [vmem:[#allocation8 + $0x160] sm:$0xff]
    %v333 = vld [vmem:[#allocation8 + $0x168] sm:$0xff]
    %v334 = vld [vmem:[#allocation8 + $0x170] sm:$0xff]
    %v335 = vld [vmem:[#allocation8 + $0x178] sm:$0xff]
    %v336 = vld [vmem:[#allocation8 + $0x180] sm:$0xff]
    %v337 = vld [vmem:[#allocation8 + $0x188] sm:$0xff]
    %v338 = vld [vmem:[#allocation8 + $0x190] sm:$0xff]
    %v339 = vld [vmem:[#allocation8 + $0x198] sm:$0xff]
    %v340 = vld [vmem:[#allocation8 + $0x1a0] sm:$0xff]
    %v341 = vld [vmem:[#allocation8 + $0x1a8] sm:$0xff]
    %v342 = vld [vmem:[#allocation8 + $0x1b0] sm:$0xff]
    %v343 = vld [vmem:[#allocation8 + $0x1b8] sm:$0xff]
    %v344 = vld [vmem:[#allocation8 + $0x1c0] sm:$0xff]
    %v345 = vld [vmem:[#allocation8 + $0x1c8] sm:$0xff]
    %v346 = vld [vmem:[#allocation8 + $0x1d0] sm:$0xff]
    %v347 = vld [vmem:[#allocation8 + $0x1d8] sm:$0xff]
    %v348 = vld [vmem:[#allocation8 + $0x1e0] sm:$0xff]
    %v349 = vld [vmem:[#allocation8 + $0x1e8] sm:$0xff]
    %v350 = vld [vmem:[#allocation8 + $0x1f0] sm:$0xff]
    %v351 = vld [vmem:[#allocation8 + $0x1f8] sm:$0xff]
    %v352 = vld [vmem:[#allocation8 + $0x200] sm:$0xff]
    %v353 = vld [vmem:[#allocation8 + $0x208] sm:$0xff]
    %v354 = vld [vmem:[#allocation8 + $0x210] sm:$0xff]
    %v355 = vld [vmem:[#allocation8 + $0x218] sm:$0xff]
    %v356 = vld [vmem:[#allocation8 + $0x220] sm:$0xff]
    %v357 = vld [vmem:[#allocation8 + $0x228] sm:$0xff]
    %v358 = vld [vmem:[#allocation8 + $0x230] sm:$0xff]
    %v359 = vld [vmem:[#allocation8 + $0x238] sm:$0xff]
    %v360 = vld [vmem:[#allocation8 + $0x240] sm:$0xff]
    %v361 = vld [vmem:[#allocation8 + $0x248] sm:$0xff]
    %v362 = vld [vmem:[#allocation8 + $0x250] sm:$0xff]
    %v363 = vld [vmem:[#allocation8 + $0x258] sm:$0xff]
    %v364 = vld [vmem:[#allocation8 + $0x260] sm:$0xff]
    %v365 = vld [vmem:[#allocation8 + $0x268] sm:$0xff]
    %v366 = vld [vmem:[#allocation8 + $0x270] sm:$0xff]
    %v367 = vld [vmem:[#allocation8 + $0x278] sm:$0xff]
    %v368 = vld [vmem:[#allocation8 + $0x280] sm:$0xff]
    %v369 = vld [vmem:[#allocation8 + $0x288] sm:$0xff]
    %v370 = vld [vmem:[#allocation8 + $0x290] sm:$0xff]
    %v371 = vld [vmem:[#allocation8 + $0x298] sm:$0xff]
    %v372 = vld [vmem:[#allocation8 + $0x2a0] sm:$0xff]
    %v373 = vld [vmem:[#allocation8 + $0x2a8] sm:$0xff]
    %v374 = vld [vmem:[#allocation8 + $0x2b0] sm:$0xff]
    %v375 = vld [vmem:[#allocation8 + $0x2b8] sm:$0xff]
    %v376 = vld [vmem:[#allocation8 + $0x2c0] sm:$0xff]
    %v377 = vld [vmem:[#allocation8 + $0x2c8] sm:$0xff]
    %v378 = vld [vmem:[#allocation8 + $0x2d0] sm:$0xff]
    %v379 = vld [vmem:[#allocation8 + $0x2d8] sm:$0xff]
    %v380 = vld [vmem:[#allocation8 + $0x2e0] sm:$0xff]
    %v381 = vld [vmem:[#allocation8 + $0x2e8] sm:$0xff]
    %v382 = vld [vmem:[#allocation8 + $0x2f0] sm:$0xff]
    %v383 = vld [vmem:[#allocation8 + $0x2f8] sm:$0xff]
    %v384 = vld [vmem:[#allocation8 + $0x300] sm:$0xff]
    %v385 = vld [vmem:[#allocation8 + $0x308] sm:$0xff]
    %v386 = vld [vmem:[#allocation8 + $0x310] sm:$0xff]
    %v387 = vld [vmem:[#allocation8 + $0x318] sm:$0xff]
    %v388 = vld [vmem:[#allocation8 + $0x320] sm:$0xff]
    %v389 = vld [vmem:[#allocation8 + $0x328] sm:$0xff]
    %v390 = vld [vmem:[#allocation8 + $0x330] sm:$0xff]
    %v391 = vld [vmem:[#allocation8 + $0x338] sm:$0xff]
    %v392 = vld [vmem:[#allocation8 + $0x340] sm:$0xff]
    %v393 = vld [vmem:[#allocation8 + $0x348] sm:$0xff]
    %v394 = vld [vmem:[#allocation8 + $0x350] sm:$0xff]
    %v395 = vld [vmem:[#allocation8 + $0x358] sm:$0xff]
    %v396 = vld [vmem:[#allocation8 + $0x360] sm:$0xff]
    %v397 = vld [vmem:[#allocation8 + $0x368] sm:$0xff]
    %v398 = vld [vmem:[#allocation8 + $0x370] sm:$0xff]
    %v399 = vld [vmem:[#allocation8 + $0x378] sm:$0xff]
    %v400 = vld [vmem:[#allocation8 + $0x380] sm:$0xff]
    %v401 = vld [vmem:[#allocation8 + $0x388] sm:$0xff]
    %v402 = vld [vmem:[#allocation8 + $0x390] sm:$0xff]
    %v403 = vld [vmem:[#allocation8 + $0x398] sm:$0xff]
    %v404 = vld [vmem:[#allocation8 + $0x3a0] sm:$0xff]
    %v405 = vld [vmem:[#allocation8 + $0x3a8] sm:$0xff]
    %v406 = vld [vmem:[#allocation8 + $0x3b0] sm:$0xff]
    %v407 = vld [vmem:[#allocation8 + $0x3b8] sm:$0xff]
    %v408 = vld [vmem:[#allocation8 + $0x3c0] sm:$0xff]
    %v409 = vld [vmem:[#allocation8 + $0x3c8] sm:$0xff]
    %v410 = vld [vmem:[#allocation8 + $0x3d0] sm:$0xff]
    %v411 = vld [vmem:[#allocation8 + $0x3d8] sm:$0xff]
    %v412 = vld [vmem:[#allocation8 + $0x3e0] sm:$0xff]
    %v413 = vld [vmem:[#allocation8 + $0x3e8] sm:$0xff]
    %v414 = vld [vmem:[#allocation8 + $0x3f0] sm:$0xff]
    %v415 = vld [vmem:[#allocation8 + $0x3f8] sm:$0xff]
    %v416 = vld [vmem:[#allocation8 + $0x400] sm:$0xff]
    %v417 = vld [vmem:[#allocation8 + $0x408] sm:$0xff]
    %v418 = vld [vmem:[#allocation8 + $0x410] sm:$0xff]
    %v419 = vld [vmem:[#allocation8 + $0x418] sm:$0xff]
    %v420 = vld [vmem:[#allocation8 + $0x420] sm:$0xff]
    %v421 = vld [vmem:[#allocation8 + $0x428] sm:$0xff]
    %v422 = vld [vmem:[#allocation8 + $0x430] sm:$0xff]
    %v423 = vld [vmem:[#allocation8 + $0x438] sm:$0xff]
    %v424 = vld [vmem:[#allocation8 + $0x440] sm:$0xff]
    %v425 = vld [vmem:[#allocation8 + $0x448] sm:$0xff]
    %v426 = vld [vmem:[#allocation8 + $0x450] sm:$0xff]
    %v427 = vld [vmem:[#allocation8 + $0x458] sm:$0xff]
    %v428 = vld [vmem:[#allocation8 + $0x460] sm:$0xff]
    %v429 = vld [vmem:[#allocation8 + $0x468] sm:$0xff]
    %v430 = vld [vmem:[#allocation8 + $0x470] sm:$0xff]
    %v431 = vld [vmem:[#allocation8 + $0x478] sm:$0xff]
    %v432 = vld [vmem:[#allocation8 + $0x480] sm:$0xff]
    %v433 = vld [vmem:[#allocation8 + $0x488] sm:$0xff]
    %v434 = vld [vmem:[#allocation8 + $0x490] sm:$0xff]
    %v435 = vld [vmem:[#allocation8 + $0x498] sm:$0xff]
    %v436 = vld [vmem:[#allocation8 + $0x4a0] sm:$0xff]
    %v437 = vld [vmem:[#allocation8 + $0x4a8] sm:$0xff]
    %v438 = vld [vmem:[#allocation8 + $0x4b0] sm:$0xff]
    %v439 = vld [vmem:[#allocation8 + $0x4b8] sm:$0xff]
    %v440 = vld [vmem:[#allocation8 + $0x4c0] sm:$0xff]
    %v441 = vld [vmem:[#allocation8 + $0x4c8] sm:$0xff]
    %v442 = vld [vmem:[#allocation8 + $0x4d0] sm:$0xff]
    %v443 = vld [vmem:[#allocation8 + $0x4d8] sm:$0xff]
    %v444 = vld [vmem:[#allocation8 + $0x4e0] sm:$0xff]
    %v445 = vld [vmem:[#allocation8 + $0x4e8] sm:$0xff]
    %v446 = vld [vmem:[#allocation8 + $0x4f0] sm:$0xff]
    %v447 = vld [vmem:[#allocation8 + $0x4f8] sm:$0xff]
    %v448 = vld [vmem:[#allocation8 + $0x500] sm:$0xff]
    %v449 = vld [vmem:[#allocation8 + $0x508] sm:$0xff]
    %v450 = vld [vmem:[#allocation8 + $0x510] sm:$0xff]
    %v451 = vld [vmem:[#allocation8 + $0x518] sm:$0xff]
    %v452 = vld [vmem:[#allocation8 + $0x520] sm:$0xff]
    %v453 = vld [vmem:[#allocation8 + $0x528] sm:$0xff]
    %v454 = vld [vmem:[#allocation8 + $0x530] sm:$0xff]
    %v455 = vld [vmem:[#allocation8 + $0x538] sm:$0xff]
    %v456 = vld [vmem:[#allocation8 + $0x540] sm:$0xff]
    %v457 = vld [vmem:[#allocation8 + $0x548] sm:$0xff]
    %v458 = vld [vmem:[#allocation8 + $0x550] sm:$0xff]
    %v459 = vld [vmem:[#allocation8 + $0x558] sm:$0xff]
    %v460 = vld [vmem:[#allocation8 + $0x560] sm:$0xff]
    %v461 = vld [vmem:[#allocation8 + $0x568] sm:$0xff]
    %v462 = vld [vmem:[#allocation8 + $0x570] sm:$0xff]
    %v463 = vld [vmem:[#allocation8 + $0x578] sm:$0xff]
    %v464 = vld [vmem:[#allocation8 + $0x580] sm:$0xff]
    %v465 = vld [vmem:[#allocation8 + $0x588] sm:$0xff]
    %v466 = vld [vmem:[#allocation8 + $0x590] sm:$0xff]
    %v467 = vld [vmem:[#allocation8 + $0x598] sm:$0xff]
    %v468 = vld [vmem:[#allocation8 + $0x5a0] sm:$0xff]
    %v469 = vld [vmem:[#allocation8 + $0x5a8] sm:$0xff]
    %v470 = vld [vmem:[#allocation8 + $0x5b0] sm:$0xff]
    %v471 = vld [vmem:[#allocation8 + $0x5b8] sm:$0xff]
    %v472 = vld [vmem:[#allocation8 + $0x5c0] sm:$0xff]
    %v473 = vld [vmem:[#allocation8 + $0x5c8] sm:$0xff]
    %v474 = vld [vmem:[#allocation8 + $0x5d0] sm:$0xff]
    %v475 = vld [vmem:[#allocation8 + $0x5d8] sm:$0xff]
    %v476 = vld [vmem:[#allocation8 + $0x5e0] sm:$0xff]
    %v477 = vld [vmem:[#allocation8 + $0x5e8] sm:$0xff]
    %v478 = vld [vmem:[#allocation8 + $0x5f0] sm:$0xff]
    %v479 = vld [vmem:[#allocation8 + $0x5f8] sm:$0xff]
    %v480 = vld [vmem:[#allocation8 + $0x600] sm:$0xff]
    %v481 = vld [vmem:[#allocation8 + $0x608] sm:$0xff]
    %v482 = vld [vmem:[#allocation8 + $0x610] sm:$0xff]
    %v483 = vld [vmem:[#allocation8 + $0x618] sm:$0xff]
    %v484 = vld [vmem:[#allocation8 + $0x620] sm:$0xff]
    %v485 = vld [vmem:[#allocation8 + $0x628] sm:$0xff]
    %v486 = vld [vmem:[#allocation8 + $0x630] sm:$0xff]
    %v487 = vld [vmem:[#allocation8 + $0x638] sm:$0xff]
    %v488 = vld [vmem:[#allocation8 + $0x640] sm:$0xff]
    %v489 = vld [vmem:[#allocation8 + $0x648] sm:$0xff]
    %v490 = vld [vmem:[#allocation8 + $0x650] sm:$0xff]
    %v491 = vld [vmem:[#allocation8 + $0x658] sm:$0xff]
    %v492 = vld [vmem:[#allocation8 + $0x660] sm:$0xff]
    %v493 = vld [vmem:[#allocation8 + $0x668] sm:$0xff]
    %v494 = vld [vmem:[#allocation8 + $0x670] sm:$0xff]
    %v495 = vld [vmem:[#allocation8 + $0x678] sm:$0xff]
    %v496 = vld [vmem:[#allocation8 + $0x680] sm:$0xff]
    %v497 = vld [vmem:[#allocation8 + $0x688] sm:$0xff]
    %v498 = vld [vmem:[#allocation8 + $0x690] sm:$0xff]
    %v499 = vld [vmem:[#allocation8 + $0x698] sm:$0xff]
    %v500 = vld [vmem:[#allocation8 + $0x6a0] sm:$0xff]
    %v501 = vld [vmem:[#allocation8 + $0x6a8] sm:$0xff]
    %v502 = vld [vmem:[#allocation8 + $0x6b0] sm:$0xff]
    %v503 = vld [vmem:[#allocation8 + $0x6b8] sm:$0xff]
    %v504 = vld [vmem:[#allocation8 + $0x6c0] sm:$0xff]
    %v505 = vld [vmem:[#allocation8 + $0x6c8] sm:$0xff]
    %v506 = vld [vmem:[#allocation8 + $0x6d0] sm:$0xff]
    %v507 = vld [vmem:[#allocation8 + $0x6d8] sm:$0xff]
    %v508 = vld [vmem:[#allocation8 + $0x6e0] sm:$0xff]
    %v509 = vld [vmem:[#allocation8 + $0x6e8] sm:$0xff]
    %v510 = vld [vmem:[#allocation8 + $0x6f0] sm:$0xff]
    %v511 = vld [vmem:[#allocation8 + $0x6f8] sm:$0xff]
    %v512 = vld [vmem:[#allocation8 + $0x700] sm:$0xff]
    %v513 = vld [vmem:[#allocation8 + $0x708] sm:$0xff]
    %v514 = vld [vmem:[#allocation8 + $0x710] sm:$0xff]
    %v515 = vld [vmem:[#allocation8 + $0x718] sm:$0xff]
    %v516 = vld [vmem:[#allocation8 + $0x720] sm:$0xff]
    %v517 = vld [vmem:[#allocation8 + $0x728] sm:$0xff]
    %v518 = vld [vmem:[#allocation8 + $0x730] sm:$0xff]
    %v519 = vld [vmem:[#allocation8 + $0x738] sm:$0xff]
    %v520 = vld [vmem:[#allocation8 + $0x740] sm:$0xff]
    %v521 = vld [vmem:[#allocation8 + $0x748] sm:$0xff]
    %v522 = vld [vmem:[#allocation8 + $0x750] sm:$0xff]
    %v523 = vld [vmem:[#allocation8 + $0x758] sm:$0xff]
    %v524 = vld [vmem:[#allocation8 + $0x760] sm:$0xff]
    %v525 = vld [vmem:[#allocation8 + $0x768] sm:$0xff]
    %v526 = vld [vmem:[#allocation8 + $0x770] sm:$0xff]
    %v527 = vld [vmem:[#allocation8 + $0x778] sm:$0xff]
    %v528 = vld [vmem:[#allocation8 + $0x780] sm:$0xff]
    %v529 = vld [vmem:[#allocation8 + $0x788] sm:$0xff]
    %v530 = vld [vmem:[#allocation8 + $0x790] sm:$0xff]
    %v531 = vld [vmem:[#allocation8 + $0x798] sm:$0xff]
    %v532 = vld [vmem:[#allocation8 + $0x7a0] sm:$0xff]
    %v533 = vld [vmem:[#allocation8 + $0x7a8] sm:$0xff]
    %v534 = vld [vmem:[#allocation8 + $0x7b0] sm:$0xff]
    %v535 = vld [vmem:[#allocation8 + $0x7b8] sm:$0xff]
    %v536 = vld [vmem:[#allocation8 + $0x7c0] sm:$0xff]
    %v537 = vld [vmem:[#allocation8 + $0x7c8] sm:$0xff]
    %v538 = vld [vmem:[#allocation8 + $0x7d0] sm:$0xff]
    %v539 = vld [vmem:[#allocation8 + $0x7d8] sm:$0xff]
    %v540 = vld [vmem:[#allocation8 + $0x7e0] sm:$0xff]
    %v541 = vld [vmem:[#allocation8 + $0x7e8] sm:$0xff]
    %v542 = vld [vmem:[#allocation8 + $0x7f0] sm:$0xff]
    %v543 = vld [vmem:[#allocation8 + $0x7f8] sm:$0xff]
    %v544 = vld [vmem:[#allocation8 + $0x800] sm:$0xff]
    %v545 = vld [vmem:[#allocation8 + $0x808] sm:$0xff]
    %v546 = vld [vmem:[#allocation8 + $0x810] sm:$0xff]
    %v547 = vld [vmem:[#allocation8 + $0x818] sm:$0xff]
    %v548 = vld [vmem:[#allocation8 + $0x820] sm:$0xff]
    %v549 = vld [vmem:[#allocation8 + $0x828] sm:$0xff]
    %v550 = vld [vmem:[#allocation8 + $0x830] sm:$0xff]
    %v551 = vld [vmem:[#allocation8 + $0x838] sm:$0xff]
    %v552 = vld [vmem:[#allocation8 + $0x840] sm:$0xff]
    %v553 = vld [vmem:[#allocation8 + $0x848] sm:$0xff]
    %v554 = vld [vmem:[#allocation8 + $0x850] sm:$0xff]
    %v555 = vld [vmem:[#allocation8 + $0x858] sm:$0xff]
    %v556 = vld [vmem:[#allocation8 + $0x860] sm:$0xff]
    %v557 = vld [vmem:[#allocation8 + $0x868] sm:$0xff]
    %v558 = vld [vmem:[#allocation8 + $0x870] sm:$0xff]
    %v559 = vld [vmem:[#allocation8 + $0x878] sm:$0xff]
    %v560 = vld [vmem:[#allocation8 + $0x880] sm:$0xff]
    %v561 = vld [vmem:[#allocation8 + $0x888] sm:$0xff]
    %v562 = vld [vmem:[#allocation8 + $0x890] sm:$0xff]
    %v563 = vld [vmem:[#allocation8 + $0x898] sm:$0xff]
    %v564 = vld [vmem:[#allocation8 + $0x8a0] sm:$0xff]
    %v565 = vld [vmem:[#allocation8 + $0x8a8] sm:$0xff]
    %v566 = vld [vmem:[#allocation8 + $0x8b0] sm:$0xff]
    %v567 = vld [vmem:[#allocation8 + $0x8b8] sm:$0xff]
    %v568 = vld [vmem:[#allocation8 + $0x8c0] sm:$0xff]
    %v569 = vld [vmem:[#allocation8 + $0x8c8] sm:$0xff]
    %v570 = vld [vmem:[#allocation8 + $0x8d0] sm:$0xff]
    %v571 = vld [vmem:[#allocation8 + $0x8d8] sm:$0xff]
    %v572 = vld [vmem:[#allocation8 + $0x8e0] sm:$0xff]
    %v573 = vld [vmem:[#allocation8 + $0x8e8] sm:$0xff]
    %v574 = vld [vmem:[#allocation8 + $0x8f0] sm:$0xff]
    %v575 = vld [vmem:[#allocation8 + $0x8f8] sm:$0xff]
    %v576 = vld [vmem:[#allocation8 + $0x900] sm:$0xff]
    %v577 = vld [vmem:[#allocation8 + $0x908] sm:$0xff]
    %v578 = vld [vmem:[#allocation8 + $0x910] sm:$0xff]
    %v579 = vld [vmem:[#allocation8 + $0x918] sm:$0xff]
    %v580 = vld [vmem:[#allocation8 + $0x920] sm:$0xff]
    %v581 = vld [vmem:[#allocation8 + $0x928] sm:$0xff]
    %v582 = vld [vmem:[#allocation8 + $0x930] sm:$0xff]
    %v583 = vld [vmem:[#allocation8 + $0x938] sm:$0xff]
    %v584 = vld [vmem:[#allocation8 + $0x940] sm:$0xff]
    %v585 = vld [vmem:[#allocation8 + $0x948] sm:$0xff]
    %v586 = vld [vmem:[#allocation8 + $0x950] sm:$0xff]
    %v587 = vld [vmem:[#allocation8 + $0x958] sm:$0xff]
    %v588 = vld [vmem:[#allocation8 + $0x960] sm:$0xff]
    %v589 = vld [vmem:[#allocation8 + $0x968] sm:$0xff]
    %v590 = vld [vmem:[#allocation8 + $0x970] sm:$0xff]
    %v591 = vld [vmem:[#allocation8 + $0x978] sm:$0xff]
    %v592 = vld [vmem:[#allocation8 + $0x980] sm:$0xff]
    %v593 = vld [vmem:[#allocation8 + $0x988] sm:$0xff]
    %v594 = vld [vmem:[#allocation8 + $0x990] sm:$0xff]
    %v595 = vld [vmem:[#allocation8 + $0x998] sm:$0xff]
    %v596 = vld [vmem:[#allocation8 + $0x9a0] sm:$0xff]
    %v597 = vld [vmem:[#allocation8 + $0x9a8] sm:$0xff]
    %v598 = vld [vmem:[#allocation8 + $0x9b0] sm:$0xff]
    %v599 = vld [vmem:[#allocation8 + $0x9b8] sm:$0xff]
    %v600 = vld [vmem:[#allocation8 + $0x9c0] sm:$0xff]
    %v601 = vld [vmem:[#allocation8 + $0x9c8] sm:$0xff]
    %v602 = vld [vmem:[#allocation8 + $0x9d0] sm:$0xff]
    %v603 = vld [vmem:[#allocation8 + $0x9d8] sm:$0xff]
    %v604 = vld [vmem:[#allocation8 + $0x9e0] sm:$0xff]
    %v605 = vld [vmem:[#allocation8 + $0x9e8] sm:$0xff]
    %v606 = vld [vmem:[#allocation8 + $0x9f0] sm:$0xff]
    %v607 = vld [vmem:[#allocation8 + $0x9f8] sm:$0xff]
    %v608 = vld [vmem:[#allocation8 + $0xa00] sm:$0xff]
    %v609 = vld [vmem:[#allocation8 + $0xa08] sm:$0xff]
    %v610 = vld [vmem:[#allocation8 + $0xa10] sm:$0xff]
    %v611 = vld [vmem:[#allocation8 + $0xa18] sm:$0xff]
    %v612 = vld [vmem:[#allocation8 + $0xa20] sm:$0xff]
    %v613 = vld [vmem:[#allocation8 + $0xa28] sm:$0xff]
    %v614 = vld [vmem:[#allocation8 + $0xa30] sm:$0xff]
    %v615 = vld [vmem:[#allocation8 + $0xa38] sm:$0xff]
    %v616 = vld [vmem:[#allocation8 + $0xa40] sm:$0xff]
    %v617 = vld [vmem:[#allocation8 + $0xa48] sm:$0xff]
    %v618 = vld [vmem:[#allocation8 + $0xa50] sm:$0xff]
    %v619 = vld [vmem:[#allocation8 + $0xa58] sm:$0xff]
    %v620 = vld [vmem:[#allocation8 + $0xa60] sm:$0xff]
    %v621 = vld [vmem:[#allocation8 + $0xa68] sm:$0xff]
    %v622 = vld [vmem:[#allocation8 + $0xa70] sm:$0xff]
    %v623 = vld [vmem:[#allocation8 + $0xa78] sm:$0xff]
    %v624 = vld [vmem:[#allocation8 + $0xa80] sm:$0xff]
    %v625 = vld [vmem:[#allocation8 + $0xa88] sm:$0xff]
    %v626 = vld [vmem:[#allocation8 + $0xa90] sm:$0xff]
    %v627 = vld [vmem:[#allocation8 + $0xa98] sm:$0xff]
    %v628 = vld [vmem:[#allocation8 + $0xaa0] sm:$0xff]
    %v629 = vld [vmem:[#allocation8 + $0xaa8] sm:$0xff]
    %v630 = vld [vmem:[#allocation8 + $0xab0] sm:$0xff]
    %v631 = vld [vmem:[#allocation8 + $0xab8] sm:$0xff]
    %v632 = vld [vmem:[#allocation8 + $0xac0] sm:$0xff]
    %v633 = vld [vmem:[#allocation8 + $0xac8] sm:$0xff]
    %v634 = vld [vmem:[#allocation8 + $0xad0] sm:$0xff]
    %v635 = vld [vmem:[#allocation8 + $0xad8] sm:$0xff]
    %v636 = vld [vmem:[#allocation8 + $0xae0] sm:$0xff]
    %v637 = vld [vmem:[#allocation8 + $0xae8] sm:$0xff]
    %v638 = vld [vmem:[#allocation8 + $0xaf0] sm:$0xff]
    %v639 = vld [vmem:[#allocation8 + $0xaf8] sm:$0xff]
    %v640 = vld [vmem:[#allocation8 + $0xb00] sm:$0xff]
    %v641 = vld [vmem:[#allocation8 + $0xb08] sm:$0xff]
    %v642 = vld [vmem:[#allocation8 + $0xb10] sm:$0xff]
    %v643 = vld [vmem:[#allocation8 + $0xb18] sm:$0xff]
    %v644 = vld [vmem:[#allocation8 + $0xb20] sm:$0xff]
    %v645 = vld [vmem:[#allocation8 + $0xb28] sm:$0xff]
    %v646 = vld [vmem:[#allocation8 + $0xb30] sm:$0xff]
    %v647 = vld [vmem:[#allocation8 + $0xb38] sm:$0xff]
    %v648 = vld [vmem:[#allocation8 + $0xb40] sm:$0xff]
    %v649 = vld [vmem:[#allocation8 + $0xb48] sm:$0xff]
    %v650 = vld [vmem:[#allocation8 + $0xb50] sm:$0xff]
    %v651 = vld [vmem:[#allocation8 + $0xb58] sm:$0xff]
    %v652 = vld [vmem:[#allocation8 + $0xb60] sm:$0xff]
    %v653 = vld [vmem:[#allocation8 + $0xb68] sm:$0xff]
    %v654 = vld [vmem:[#allocation8 + $0xb70] sm:$0xff]
    %v655 = vld [vmem:[#allocation8 + $0xb78] sm:$0xff]
    %v656 = vld [vmem:[#allocation8 + $0xb80] sm:$0xff]
    %v657 = vld [vmem:[#allocation8 + $0xb88] sm:$0xff]
    %v658 = vld [vmem:[#allocation8 + $0xb90] sm:$0xff]
    %v659 = vld [vmem:[#allocation8 + $0xb98] sm:$0xff]
    %v660 = vld [vmem:[#allocation8 + $0xba0] sm:$0xff]
    %v661 = vld [vmem:[#allocation8 + $0xba8] sm:$0xff]
    %v662 = vld [vmem:[#allocation8 + $0xbb0] sm:$0xff]
    %v663 = vld [vmem:[#allocation8 + $0xbb8] sm:$0xff]
    %v664 = vld [vmem:[#allocation8 + $0xbc0] sm:$0xff]
    %v665 = vld [vmem:[#allocation8 + $0xbc8] sm:$0xff]
    %v666 = vld [vmem:[#allocation8 + $0xbd0] sm:$0xff]
    %v667 = vld [vmem:[#allocation8 + $0xbd8] sm:$0xff]
    %v668 = vld [vmem:[#allocation8 + $0xbe0] sm:$0xff]
    %v669 = vld [vmem:[#allocation8 + $0xbe8] sm:$0xff]
    %v670 = vld [vmem:[#allocation8 + $0xbf0] sm:$0xff]
    %v671 = vld [vmem:[#allocation8 + $0xbf8] sm:$0xff]
    %v672 = vld [vmem:[#allocation8 + $0xc00] sm:$0xff]
    %v673 = vld [vmem:[#allocation8 + $0xc08] sm:$0xff]
    %v674 = vld [vmem:[#allocation8 + $0xc10] sm:$0xff]
    %v675 = vld [vmem:[#allocation8 + $0xc18] sm:$0xff]
    %v676 = vld [vmem:[#allocation8 + $0xc20] sm:$0xff]
    %v677 = vld [vmem:[#allocation8 + $0xc28] sm:$0xff]
    %v678 = vld [vmem:[#allocation8 + $0xc30] sm:$0xff]
    %v679 = vld [vmem:[#allocation8 + $0xc38] sm:$0xff]
    %v680 = vld [vmem:[#allocation8 + $0xc40] sm:$0xff]
    %v681 = vld [vmem:[#allocation8 + $0xc48] sm:$0xff]
    %v682 = vld [vmem:[#allocation8 + $0xc50] sm:$0xff]
    %v683 = vld [vmem:[#allocation8 + $0xc58] sm:$0xff]
    %v684 = vld [vmem:[#allocation8 + $0xc60] sm:$0xff]
    %v685 = vld [vmem:[#allocation8 + $0xc68] sm:$0xff]
    %v686 = vld [vmem:[#allocation8 + $0xc70] sm:$0xff]
    %v687 = vld [vmem:[#allocation8 + $0xc78] sm:$0xff]
    %v688 = vld [vmem:[#allocation8 + $0xc80] sm:$0xff]
    %v689 = vld [vmem:[#allocation8 + $0xc88] sm:$0xff]
    %v690 = vld [vmem:[#allocation8 + $0xc90] sm:$0xff]
    %v691 = vld [vmem:[#allocation8 + $0xc98] sm:$0xff]
    %v692 = vld [vmem:[#allocation8 + $0xca0] sm:$0xff]
    %v693 = vld [vmem:[#allocation8 + $0xca8] sm:$0xff]
    %v694 = vld [vmem:[#allocation8 + $0xcb0] sm:$0xff]
    %v695 = vld [vmem:[#allocation8 + $0xcb8] sm:$0xff]
    %v696 = vld [vmem:[#allocation8 + $0xcc0] sm:$0xff]
    %v697 = vld [vmem:[#allocation8 + $0xcc8] sm:$0xff]
    %v698 = vld [vmem:[#allocation8 + $0xcd0] sm:$0xff]
    %v699 = vld [vmem:[#allocation8 + $0xcd8] sm:$0xff]
    %v700 = vld [vmem:[#allocation8 + $0xce0] sm:$0xff]
    %v701 = vld [vmem:[#allocation8 + $0xce8] sm:$0xff]
    %v702 = vld [vmem:[#allocation8 + $0xcf0] sm:$0xff]
    %v703 = vld [vmem:[#allocation8 + $0xcf8] sm:$0xff]
    %v704 = vld [vmem:[#allocation8 + $0xd00] sm:$0xff]
    %v705 = vld [vmem:[#allocation8 + $0xd08] sm:$0xff]
    %v706 = vld [vmem:[#allocation8 + $0xd10] sm:$0xff]
    %v707 = vld [vmem:[#allocation8 + $0xd18] sm:$0xff]
    %v708 = vld [vmem:[#allocation8 + $0xd20] sm:$0xff]
    %v709 = vld [vmem:[#allocation8 + $0xd28] sm:$0xff]
    %v710 = vld [vmem:[#allocation8 + $0xd30] sm:$0xff]
    %v711 = vld [vmem:[#allocation8 + $0xd38] sm:$0xff]
    %v712 = vld [vmem:[#allocation8 + $0xd40] sm:$0xff]
    %v713 = vld [vmem:[#allocation8 + $0xd48] sm:$0xff]
    %v714 = vld [vmem:[#allocation8 + $0xd50] sm:$0xff]
    %v715 = vld [vmem:[#allocation8 + $0xd58] sm:$0xff]
    %v716 = vld [vmem:[#allocation8 + $0xd60] sm:$0xff]
    %v717 = vld [vmem:[#allocation8 + $0xd68] sm:$0xff]
    %v718 = vld [vmem:[#allocation8 + $0xd70] sm:$0xff]
    %v719 = vld [vmem:[#allocation8 + $0xd78] sm:$0xff]
    %v720 = vld [vmem:[#allocation8 + $0xd80] sm:$0xff]
    %v721 = vld [vmem:[#allocation8 + $0xd88] sm:$0xff]
    %v722 = vld [vmem:[#allocation8 + $0xd90] sm:$0xff]
    %v723 = vld [vmem:[#allocation8 + $0xd98] sm:$0xff]
    %v724 = vld [vmem:[#allocation8 + $0xda0] sm:$0xff]
    %v725 = vld [vmem:[#allocation8 + $0xda8] sm:$0xff]
    %v726 = vld [vmem:[#allocation8 + $0xdb0] sm:$0xff]
    %v727 = vld [vmem:[#allocation8 + $0xdb8] sm:$0xff]
    %v728 = vld [vmem:[#allocation8 + $0xdc0] sm:$0xff]
    %v729 = vld [vmem:[#allocation8 + $0xdc8] sm:$0xff]
    %v730 = vld [vmem:[#allocation8 + $0xdd0] sm:$0xff]
    %v731 = vld [vmem:[#allocation8 + $0xdd8] sm:$0xff]
    %v732 = vld [vmem:[#allocation8 + $0xde0] sm:$0xff]
    %v733 = vld [vmem:[#allocation8 + $0xde8] sm:$0xff]
    %v734 = vld [vmem:[#allocation8 + $0xdf0] sm:$0xff]
    %v735 = vld [vmem:[#allocation8 + $0xdf8] sm:$0xff]
    %v736 = vld [vmem:[#allocation8 + $0xe00] sm:$0xff]
    %v737 = vld [vmem:[#allocation8 + $0xe08] sm:$0xff]
    %v738 = vld [vmem:[#allocation8 + $0xe10] sm:$0xff]
    %v739 = vld [vmem:[#allocation8 + $0xe18] sm:$0xff]
    %v740 = vld [vmem:[#allocation8 + $0xe20] sm:$0xff]
    %v741 = vld [vmem:[#allocation8 + $0xe28] sm:$0xff]
    %v742 = vld [vmem:[#allocation8 + $0xe30] sm:$0xff]
    %v743 = vld [vmem:[#allocation8 + $0xe38] sm:$0xff]
    %v744 = vld [vmem:[#allocation8 + $0xe40] sm:$0xff]
    %v745 = vld [vmem:[#allocation8 + $0xe48] sm:$0xff]
    %v746 = vld [vmem:[#allocation8 + $0xe50] sm:$0xff]
    %v747 = vld [vmem:[#allocation8 + $0xe58] sm:$0xff]
    %v748 = vld [vmem:[#allocation8 + $0xe60] sm:$0xff]
    %v749 = vld [vmem:[#allocation8 + $0xe68] sm:$0xff]
    %v750 = vld [vmem:[#allocation8 + $0xe70] sm:$0xff]
    %v751 = vld [vmem:[#allocation8 + $0xe78] sm:$0xff]
    %v752 = vld [vmem:[#allocation8 + $0xe80] sm:$0xff]
    %v753 = vld [vmem:[#allocation8 + $0xe88] sm:$0xff]
    %v754 = vld [vmem:[#allocation8 + $0xe90] sm:$0xff]
    %v755 = vld [vmem:[#allocation8 + $0xe98] sm:$0xff]
    %v756 = vld [vmem:[#allocation8 + $0xea0] sm:$0xff]
    %v757 = vld [vmem:[#allocation8 + $0xea8] sm:$0xff]
    %v758 = vld [vmem:[#allocation8 + $0xeb0] sm:$0xff]
    %v759 = vld [vmem:[#allocation8 + $0xeb8] sm:$0xff]
    %v760 = vld [vmem:[#allocation8 + $0xec0] sm:$0xff]
    %v761 = vld [vmem:[#allocation8 + $0xec8] sm:$0xff]
    %v762 = vld [vmem:[#allocation8 + $0xed0] sm:$0xff]
    %v763 = vld [vmem:[#allocation8 + $0xed8] sm:$0xff]
    %v764 = vld [vmem:[#allocation8 + $0xee0] sm:$0xff]
    %v765 = vld [vmem:[#allocation8 + $0xee8] sm:$0xff]
    %v766 = vld [vmem:[#allocation8 + $0xef0] sm:$0xff]
    %v767 = vld [vmem:[#allocation8 + $0xef8] sm:$0xff]
    %v768 = vld [vmem:[#allocation8 + $0xf00] sm:$0xff]
    %v769 = vld [vmem:[#allocation8 + $0xf08] sm:$0xff]
    %v770 = vld [vmem:[#allocation8 + $0xf10] sm:$0xff]
    %v771 = vld [vmem:[#allocation8 + $0xf18] sm:$0xff]
    %v772 = vld [vmem:[#allocation8 + $0xf20] sm:$0xff]
    %v773 = vld [vmem:[#allocation8 + $0xf28] sm:$0xff]
    %v774 = vld [vmem:[#allocation8 + $0xf30] sm:$0xff]
    %v775 = vld [vmem:[#allocation8 + $0xf38] sm:$0xff]
    %v776 = vld [vmem:[#allocation8 + $0xf40] sm:$0xff]
    %v777 = vld [vmem:[#allocation8 + $0xf48] sm:$0xff]
    %v778 = vld [vmem:[#allocation8 + $0xf50] sm:$0xff]
    %v779 = vld [vmem:[#allocation8 + $0xf58] sm:$0xff]
    %v780 = vld [vmem:[#allocation8 + $0xf60] sm:$0xff]
    %v781 = vld [vmem:[#allocation8 + $0xf68] sm:$0xff]
    %v782 = vld [vmem:[#allocation8 + $0xf70] sm:$0xff]
    %v783 = vld [vmem:[#allocation8 + $0xf78] sm:$0xff]
    %v784 = vld [vmem:[#allocation8 + $0xf80] sm:$0xff]
    %v785 = vld [vmem:[#allocation8 + $0xf88] sm:$0xff]
    %v786 = vld [vmem:[#allocation8 + $0xf90] sm:$0xff]
    %v787 = vld [vmem:[#allocation8 + $0xf98] sm:$0xff]
    %v788 = vld [vmem:[#allocation8 + $0xfa0] sm:$0xff]
    %v789 = vld [vmem:[#allocation8 + $0xfa8] sm:$0xff]
    %v790 = vld [vmem:[#allocation8 + $0xfb0] sm:$0xff]
    %v791 = vld [vmem:[#allocation8 + $0xfb8] sm:$0xff]
    %v792 = vld [vmem:[#allocation8 + $0xfc0] sm:$0xff]
    %v793 = vld [vmem:[#allocation8 + $0xfc8] sm:$0xff]
    %v794 = vld [vmem:[#allocation8 + $0xfd0] sm:$0xff]
    %v795 = vld [vmem:[#allocation8 + $0xfd8] sm:$0xff]
    %v796 = vld [vmem:[#allocation8 + $0xfe0] sm:$0xff]
    %v797 = vld [vmem:[#allocation8 + $0xfe8] sm:$0xff]
    %v798 = vld [vmem:[#allocation8 + $0xff0] sm:$0xff]
    %v799 = vld [vmem:[#allocation8 + $0xff8] sm:$0xff]
    %v800 = vld [vmem:[#allocation8 + $0x1000] sm:$0xff]
    %v801 = vld [vmem:[#allocation8 + $0x1008] sm:$0xff]
    %v802 = vld [vmem:[#allocation8 + $0x1010] sm:$0xff]
    %v803 = vld [vmem:[#allocation8 + $0x1018] sm:$0xff]
    %v804 = vld [vmem:[#allocation8 + $0x1020] sm:$0xff]
    %v805 = vld [vmem:[#allocation8 + $0x1028] sm:$0xff]
    %v806 = vld [vmem:[#allocation8 + $0x1030] sm:$0xff]
    %v807 = vld [vmem:[#allocation8 + $0x1038] sm:$0xff]
    %v808 = vld [vmem:[#allocation8 + $0x1040] sm:$0xff]
    %v809 = vld [vmem:[#allocation8 + $0x1048] sm:$0xff]
    %v810 = vld [vmem:[#allocation8 + $0x1050] sm:$0xff]
    %v811 = vld [vmem:[#allocation8 + $0x1058] sm:$0xff]
    %v812 = vld [vmem:[#allocation8 + $0x1060] sm:$0xff]
    %v813 = vld [vmem:[#allocation8 + $0x1068] sm:$0xff]
    %v814 = vld [vmem:[#allocation8 + $0x1070] sm:$0xff]
    %v815 = vld [vmem:[#allocation8 + $0x1078] sm:$0xff]
    %v816 = vld [vmem:[#allocation8 + $0x1080] sm:$0xff]
    %v817 = vld [vmem:[#allocation8 + $0x1088] sm:$0xff]
    %v818 = vld [vmem:[#allocation8 + $0x1090] sm:$0xff]
    %v819 = vld [vmem:[#allocation8 + $0x1098] sm:$0xff]
    %v820 = vld [vmem:[#allocation8 + $0x10a0] sm:$0xff]
    %v821 = vld [vmem:[#allocation8 + $0x10a8] sm:$0xff]
    %v822 = vld [vmem:[#allocation8 + $0x10b0] sm:$0xff]
    %v823 = vld [vmem:[#allocation8 + $0x10b8] sm:$0xff]
    %v824 = vld [vmem:[#allocation8 + $0x10c0] sm:$0xff]
    %v825 = vld [vmem:[#allocation8 + $0x10c8] sm:$0xff]
    %v826 = vld [vmem:[#allocation8 + $0x10d0] sm:$0xff]
    %v827 = vld [vmem:[#allocation8 + $0x10d8] sm:$0xff]
    %v828 = vld [vmem:[#allocation8 + $0x10e0] sm:$0xff]
    %v829 = vld [vmem:[#allocation8 + $0x10e8] sm:$0xff]
    %v830 = vld [vmem:[#allocation8 + $0x10f0] sm:$0xff]
    %v831 = vld [vmem:[#allocation8 + $0x10f8] sm:$0xff]
    %v832 = vld [vmem:[#allocation8 + $0x1100] sm:$0xff]
    %v833 = vld [vmem:[#allocation8 + $0x1108] sm:$0xff]
    %v834 = vld [vmem:[#allocation8 + $0x1110] sm:$0xff]
    %v835 = vld [vmem:[#allocation8 + $0x1118] sm:$0xff]
    %v836 = vld [vmem:[#allocation8 + $0x1120] sm:$0xff]
    %v837 = vld [vmem:[#allocation8 + $0x1128] sm:$0xff]
    %v838 = vld [vmem:[#allocation8 + $0x1130] sm:$0xff]
    %v839 = vld [vmem:[#allocation8 + $0x1138] sm:$0xff]
    %v840 = vld [vmem:[#allocation8 + $0x1140] sm:$0xff]
    %v841 = vld [vmem:[#allocation8 + $0x1148] sm:$0xff]
    %v842 = vld [vmem:[#allocation8 + $0x1150] sm:$0xff]
    %v843 = vld [vmem:[#allocation8 + $0x1158] sm:$0xff]
    %v844 = vld [vmem:[#allocation8 + $0x1160] sm:$0xff]
    %v845 = vld [vmem:[#allocation8 + $0x1168] sm:$0xff]
    %v846 = vld [vmem:[#allocation8 + $0x1170] sm:$0xff]
    %v847 = vld [vmem:[#allocation8 + $0x1178] sm:$0xff]
    %v848 = vld [vmem:[#allocation8 + $0x1180] sm:$0xff]
    %v849 = vld [vmem:[#allocation8 + $0x1188] sm:$0xff]
    %v850 = vld [vmem:[#allocation8 + $0x1190] sm:$0xff]
    %v851 = vld [vmem:[#allocation8 + $0x1198] sm:$0xff]
    %v852 = vld [vmem:[#allocation8 + $0x11a0] sm:$0xff]
    %v853 = vld [vmem:[#allocation8 + $0x11a8] sm:$0xff]
    %v854 = vld [vmem:[#allocation8 + $0x11b0] sm:$0xff]
    %v855 = vld [vmem:[#allocation8 + $0x11b8] sm:$0xff]
    %v856 = vld [vmem:[#allocation8 + $0x11c0] sm:$0xff]
    %v857 = vld [vmem:[#allocation8 + $0x11c8] sm:$0xff]
    %v858 = vld [vmem:[#allocation8 + $0x11d0] sm:$0xff]
    %v859 = vld [vmem:[#allocation8 + $0x11d8] sm:$0xff]
    %v860 = vld [vmem:[#allocation8 + $0x11e0] sm:$0xff]
    %v861 = vld [vmem:[#allocation8 + $0x11e8] sm:$0xff]
    %v862 = vld [vmem:[#allocation8 + $0x11f0] sm:$0xff]
    %v863 = vld [vmem:[#allocation8 + $0x11f8] sm:$0xff]
    %v864 = vld [vmem:[#allocation8 + $0x1200] sm:$0xff]
    %v865 = vld [vmem:[#allocation8 + $0x1208] sm:$0xff]
    %v866 = vld [vmem:[#allocation8 + $0x1210] sm:$0xff]
    %v867 = vld [vmem:[#allocation8 + $0x1218] sm:$0xff]
    %v868 = vld [vmem:[#allocation8 + $0x1220] sm:$0xff]
    %v869 = vld [vmem:[#allocation8 + $0x1228] sm:$0xff]
    %v870 = vld [vmem:[#allocation8 + $0x1230] sm:$0xff]
    %v871 = vld [vmem:[#allocation8 + $0x1238] sm:$0xff]
    %v872 = vld [vmem:[#allocation8 + $0x1240] sm:$0xff]
    %v873 = vld [vmem:[#allocation8 + $0x1248] sm:$0xff]
    %v874 = vld [vmem:[#allocation8 + $0x1250] sm:$0xff]
    %v875 = vld [vmem:[#allocation8 + $0x1258] sm:$0xff]
    %v876 = vld [vmem:[#allocation8 + $0x1260] sm:$0xff]
    %v877 = vld [vmem:[#allocation8 + $0x1268] sm:$0xff]
    %v878 = vld [vmem:[#allocation8 + $0x1270] sm:$0xff]
    %v879 = vld [vmem:[#allocation8 + $0x1278] sm:$0xff]
    %v880 = vld [vmem:[#allocation8 + $0x1280] sm:$0xff]
    %v881 = vld [vmem:[#allocation8 + $0x1288] sm:$0xff]
    %v882 = vld [vmem:[#allocation8 + $0x1290] sm:$0xff]
    %v883 = vld [vmem:[#allocation8 + $0x1298] sm:$0xff]
    %v884 = vld [vmem:[#allocation8 + $0x12a0] sm:$0xff]
    %v885 = vld [vmem:[#allocation8 + $0x12a8] sm:$0xff]
    %v886 = vld [vmem:[#allocation8 + $0x12b0] sm:$0xff]
    %v887 = vld [vmem:[#allocation8 + $0x12b8] sm:$0xff]
    %v888 = vld [vmem:[#allocation8 + $0x12c0] sm:$0xff]
    %v889 = vld [vmem:[#allocation8 + $0x12c8] sm:$0xff]
    %v890 = vld [vmem:[#allocation8 + $0x12d0] sm:$0xff]
    %v891 = vld [vmem:[#allocation8 + $0x12d8] sm:$0xff]
    %v892 = vld [vmem:[#allocation8 + $0x12e0] sm:$0xff]
    %v893 = vld [vmem:[#allocation8 + $0x12e8] sm:$0xff]
    %v894 = vld [vmem:[#allocation8 + $0x12f0] sm:$0xff]
    %v895 = vld [vmem:[#allocation8 + $0x12f8] sm:$0xff]
    %v896 = vld [vmem:[#allocation8 + $0x1300] sm:$0xff]
    %v897 = vld [vmem:[#allocation8 + $0x1308] sm:$0xff]
    %v898 = vld [vmem:[#allocation8 + $0x1310] sm:$0xff]
    %v899 = vld [vmem:[#allocation8 + $0x1318] sm:$0xff]
    %v900 = vld [vmem:[#allocation8 + $0x1320] sm:$0xff]
    %v901 = vld [vmem:[#allocation8 + $0x1328] sm:$0xff]
    %v902 = vld [vmem:[#allocation8 + $0x1330] sm:$0xff]
    %v903 = vld [vmem:[#allocation8 + $0x1338] sm:$0xff]
    %v904 = vld [vmem:[#allocation8 + $0x1340] sm:$0xff]
    %v905 = vld [vmem:[#allocation8 + $0x1348] sm:$0xff]
    %v906 = vld [vmem:[#allocation8 + $0x1350] sm:$0xff]
    %v907 = vld [vmem:[#allocation8 + $0x1358] sm:$0xff]
    %v908 = vld [vmem:[#allocation8 + $0x1360] sm:$0xff]
    %v909 = vld [vmem:[#allocation8 + $0x1368] sm:$0xff]
    %v910 = vld [vmem:[#allocation8 + $0x1370] sm:$0xff]
    %v911 = vld [vmem:[#allocation8 + $0x1378] sm:$0xff]
    %v912 = vld [vmem:[#allocation8 + $0x1380] sm:$0xff]
    %v913 = vld [vmem:[#allocation8 + $0x1388] sm:$0xff]
    %v914 = vld [vmem:[#allocation8 + $0x1390] sm:$0xff]
    %v915 = vld [vmem:[#allocation8 + $0x1398] sm:$0xff]
    %v916 = vld [vmem:[#allocation8 + $0x13a0] sm:$0xff]
    %v917 = vld [vmem:[#allocation8 + $0x13a8] sm:$0xff]
    %v918 = vld [vmem:[#allocation8 + $0x13b0] sm:$0xff]
    %v919 = vld [vmem:[#allocation8 + $0x13b8] sm:$0xff]
    %v920 = vld [vmem:[#allocation8 + $0x13c0] sm:$0xff]
    %v921 = vld [vmem:[#allocation8 + $0x13c8] sm:$0xff]
    %v922 = vld [vmem:[#allocation8 + $0x13d0] sm:$0xff]
    %v923 = vld [vmem:[#allocation8 + $0x13d8] sm:$0xff]
    %v924 = vld [vmem:[#allocation8 + $0x13e0] sm:$0xff]
    %v925 = vld [vmem:[#allocation8 + $0x13e8] sm:$0xff]
    %v926 = vld [vmem:[#allocation8 + $0x13f0] sm:$0xff]
    %v927 = vld [vmem:[#allocation8 + $0x13f8] sm:$0xff]
    %v928 = vld [vmem:[#allocation8 + $0x1400] sm:$0xff]
    %v929 = vld [vmem:[#allocation8 + $0x1408] sm:$0xff]
    %v930 = vld [vmem:[#allocation8 + $0x1410] sm:$0xff]
    %v931 = vld [vmem:[#allocation8 + $0x1418] sm:$0xff]
    %v932 = vld [vmem:[#allocation8 + $0x1420] sm:$0xff]
    %v933 = vld [vmem:[#allocation8 + $0x1428] sm:$0xff]
    %v934 = vld [vmem:[#allocation8 + $0x1430] sm:$0xff]
    %v935 = vld [vmem:[#allocation8 + $0x1438] sm:$0xff]
    %v936 = vld [vmem:[#allocation8 + $0x1440] sm:$0xff]
    %v937 = vld [vmem:[#allocation8 + $0x1448] sm:$0xff]
    %v938 = vld [vmem:[#allocation8 + $0x1450] sm:$0xff]
    %v939 = vld [vmem:[#allocation8 + $0x1458] sm:$0xff]
    %v940 = vld [vmem:[#allocation8 + $0x1460] sm:$0xff]
    %v941 = vld [vmem:[#allocation8 + $0x1468] sm:$0xff]
    %v942 = vld [vmem:[#allocation8 + $0x1470] sm:$0xff]
    %v943 = vld [vmem:[#allocation8 + $0x1478] sm:$0xff]
    %v944 = vld [vmem:[#allocation8 + $0x1480] sm:$0xff]
    %v945 = vld [vmem:[#allocation8 + $0x1488] sm:$0xff]
    %v946 = vld [vmem:[#allocation8 + $0x1490] sm:$0xff]
    %v947 = vld [vmem:[#allocation8 + $0x1498] sm:$0xff]
    %v948 = vld [vmem:[#allocation8 + $0x14a0] sm:$0xff]
    %v949 = vld [vmem:[#allocation8 + $0x14a8] sm:$0xff]
    %v950 = vld [vmem:[#allocation8 + $0x14b0] sm:$0xff]
    %v951 = vld [vmem:[#allocation8 + $0x14b8] sm:$0xff]
    %v952 = vld [vmem:[#allocation8 + $0x14c0] sm:$0xff]
    %v953 = vld [vmem:[#allocation8 + $0x14c8] sm:$0xff]
    %v954 = vld [vmem:[#allocation8 + $0x14d0] sm:$0xff]
    %v955 = vld [vmem:[#allocation8 + $0x14d8] sm:$0xff]
    %v956 = vld [vmem:[#allocation8 + $0x14e0] sm:$0xff]
    %v957 = vld [vmem:[#allocation8 + $0x14e8] sm:$0xff]
    %v958 = vld [vmem:[#allocation8 + $0x14f0] sm:$0xff]
    %v959 = vld [vmem:[#allocation8 + $0x14f8] sm:$0xff]
    %v960 = vld [vmem:[#allocation8 + $0x1500] sm:$0xff]
    %v961 = vld [vmem:[#allocation8 + $0x1508] sm:$0xff]
    %v962 = vld [vmem:[#allocation8 + $0x1510] sm:$0xff]
    %v963 = vld [vmem:[#allocation8 + $0x1518] sm:$0xff]
    %v964 = vld [vmem:[#allocation8 + $0x1520] sm:$0xff]
    %v965 = vld [vmem:[#allocation8 + $0x1528] sm:$0xff]
    %v966 = vld [vmem:[#allocation8 + $0x1530] sm:$0xff]
    %v967 = vld [vmem:[#allocation8 + $0x1538] sm:$0xff]
    %v968 = vld [vmem:[#allocation8 + $0x1540] sm:$0xff]
    %v969 = vld [vmem:[#allocation8 + $0x1548] sm:$0xff]
    %v970 = vld [vmem:[#allocation8 + $0x1550] sm:$0xff]
    %v971 = vld [vmem:[#allocation8 + $0x1558] sm:$0xff]
    %v972 = vld [vmem:[#allocation8 + $0x1560] sm:$0xff]
    %v973 = vld [vmem:[#allocation8 + $0x1568] sm:$0xff]
    %v974 = vld [vmem:[#allocation8 + $0x1570] sm:$0xff]
    %v975 = vld [vmem:[#allocation8 + $0x1578] sm:$0xff]
    %v976 = vld [vmem:[#allocation8 + $0x1580] sm:$0xff]
    %v977 = vld [vmem:[#allocation8 + $0x1588] sm:$0xff]
    %v978 = vld [vmem:[#allocation8 + $0x1590] sm:$0xff]
    %v979 = vld [vmem:[#allocation8 + $0x1598] sm:$0xff]
    %v980 = vld [vmem:[#allocation8 + $0x15a0] sm:$0xff]
    %v981 = vld [vmem:[#allocation8 + $0x15a8] sm:$0xff]
    %v982 = vld [vmem:[#allocation8 + $0x15b0] sm:$0xff]
    %v983 = vld [vmem:[#allocation8 + $0x15b8] sm:$0xff]
    %v984 = vld [vmem:[#allocation8 + $0x15c0] sm:$0xff]
    %v985 = vld [vmem:[#allocation8 + $0x15c8] sm:$0xff]
    %v986 = vld [vmem:[#allocation8 + $0x15d0] sm:$0xff]
    %v987 = vld [vmem:[#allocation8 + $0x15d8] sm:$0xff]
    %v988 = vld [vmem:[#allocation8 + $0x15e0] sm:$0xff]
    %v989 = vld [vmem:[#allocation8 + $0x15e8] sm:$0xff]
    %v990 = vld [vmem:[#allocation8 + $0x15f0] sm:$0xff]
    %v991 = vld [vmem:[#allocation8 + $0x15f8] sm:$0xff]
    %v992 = vld [vmem:[#allocation8 + $0x1600] sm:$0xff]
    %v993 = vld [vmem:[#allocation8 + $0x1608] sm:$0xff]
    %v994 = vld [vmem:[#allocation8 + $0x1610] sm:$0xff]
    %v995 = vld [vmem:[#allocation8 + $0x1618] sm:$0xff]
    %v996 = vld [vmem:[#allocation8 + $0x1620] sm:$0xff]
    %v997 = vld [vmem:[#allocation8 + $0x1628] sm:$0xff]
    %v998 = vld [vmem:[#allocation8 + $0x1630] sm:$0xff]
    %v999 = vld [vmem:[#allocation8 + $0x1638] sm:$0xff]
    %v1000 = vld [vmem:[#allocation8 + $0x1640] sm:$0xff]
    %v1001 = vld [vmem:[#allocation8 + $0x1648] sm:$0xff]
    %v1002 = vld [vmem:[#allocation8 + $0x1650] sm:$0xff]
    %v1003 = vld [vmem:[#allocation8 + $0x1658] sm:$0xff]
    %v1004 = vld [vmem:[#allocation8 + $0x1660] sm:$0xff]
    %v1005 = vld [vmem:[#allocation8 + $0x1668] sm:$0xff]
    %v1006 = vld [vmem:[#allocation8 + $0x1670] sm:$0xff]
    %v1007 = vld [vmem:[#allocation8 + $0x1678] sm:$0xff]
    %v1008 = vld [vmem:[#allocation8 + $0x1680] sm:$0xff]
    %v1009 = vld [vmem:[#allocation8 + $0x1688] sm:$0xff]
    %v1010 = vld [vmem:[#allocation8 + $0x1690] sm:$0xff]
    %v1011 = vld [vmem:[#allocation8 + $0x1698] sm:$0xff]
    %v1012 = vld [vmem:[#allocation8 + $0x16a0] sm:$0xff]
    %v1013 = vld [vmem:[#allocation8 + $0x16a8] sm:$0xff]
    %v1014 = vld [vmem:[#allocation8 + $0x16b0] sm:$0xff]
    %v1015 = vld [vmem:[#allocation8 + $0x16b8] sm:$0xff]
    %v1016 = vld [vmem:[#allocation8 + $0x16c0] sm:$0xff]
    %v1017 = vld [vmem:[#allocation8 + $0x16c8] sm:$0xff]
    %v1018 = vld [vmem:[#allocation8 + $0x16d0] sm:$0xff]
    %v1019 = vld [vmem:[#allocation8 + $0x16d8] sm:$0xff]
    %v1020 = vld [vmem:[#allocation8 + $0x16e0] sm:$0xff]
    %v1021 = vld [vmem:[#allocation8 + $0x16e8] sm:$0xff]
    %v1022 = vld [vmem:[#allocation8 + $0x16f0] sm:$0xff]
    %v1023 = vld [vmem:[#allocation8 + $0x16f8] sm:$0xff]
    %v1024 = vld [vmem:[#allocation8 + $0x1700] sm:$0xff]
    %v1025 = vld [vmem:[#allocation8 + $0x1708] sm:$0xff]
    %v1026 = vld [vmem:[#allocation8 + $0x1710] sm:$0xff]
    %v1027 = vld [vmem:[#allocation8 + $0x1718] sm:$0xff]
    %v1028 = vld [vmem:[#allocation8 + $0x1720] sm:$0xff]
    %v1029 = vld [vmem:[#allocation8 + $0x1728] sm:$0xff]
    %v1030 = vld [vmem:[#allocation8 + $0x1730] sm:$0xff]
    %v1031 = vld [vmem:[#allocation8 + $0x1738] sm:$0xff]
    %v1032 = vld [vmem:[#allocation8 + $0x1740] sm:$0xff]
    %v1033 = vld [vmem:[#allocation8 + $0x1748] sm:$0xff]
    %v1034 = vld [vmem:[#allocation8 + $0x1750] sm:$0xff]
    %v1035 = vld [vmem:[#allocation8 + $0x1758] sm:$0xff]
    %v1036 = vld [vmem:[#allocation8 + $0x1760] sm:$0xff]
    %v1037 = vld [vmem:[#allocation8 + $0x1768] sm:$0xff]
    %v1038 = vld [vmem:[#allocation8 + $0x1770] sm:$0xff]
    %v1039 = vld [vmem:[#allocation8 + $0x1778] sm:$0xff]
    %v1040 = vld [vmem:[#allocation8 + $0x1780] sm:$0xff]
    %v1041 = vld [vmem:[#allocation8 + $0x1788] sm:$0xff]
    %v1042 = vld [vmem:[#allocation8 + $0x1790] sm:$0xff]
    %v1043 = vld [vmem:[#allocation8 + $0x1798] sm:$0xff]
    %v1044 = vld [vmem:[#allocation8 + $0x17a0] sm:$0xff]
    %v1045 = vld [vmem:[#allocation8 + $0x17a8] sm:$0xff]
    %v1046 = vld [vmem:[#allocation8 + $0x17b0] sm:$0xff]
    %v1047 = vld [vmem:[#allocation8 + $0x17b8] sm:$0xff]
    %v1048 = vld [vmem:[#allocation8 + $0x17c0] sm:$0xff]
    %v1049 = vld [vmem:[#allocation8 + $0x17c8] sm:$0xff]
    %v1050 = vld [vmem:[#allocation8 + $0x17d0] sm:$0xff]
    %v1051 = vld [vmem:[#allocation8 + $0x17d8] sm:$0xff]
    %v1052 = vld [vmem:[#allocation8 + $0x17e0] sm:$0xff]
    %v1053 = vld [vmem:[#allocation8 + $0x17e8] sm:$0xff]
    %v1054 = vld [vmem:[#allocation8 + $0x17f0] sm:$0xff]
    %v1055 = vld [vmem:[#allocation8 + $0x17f8] sm:$0xff]
    %v1056 = vld [vmem:[#allocation8 + $0x1800] sm:$0xff]
    %v1057 = vld [vmem:[#allocation8 + $0x1808] sm:$0xff]
    %v1058 = vld [vmem:[#allocation8 + $0x1810] sm:$0xff]
    %v1059 = vld [vmem:[#allocation8 + $0x1818] sm:$0xff]
    %v1060 = vld [vmem:[#allocation8 + $0x1820] sm:$0xff]
    %v1061 = vld [vmem:[#allocation8 + $0x1828] sm:$0xff]
    %v1062 = vld [vmem:[#allocation8 + $0x1830] sm:$0xff]
    %v1063 = vld [vmem:[#allocation8 + $0x1838] sm:$0xff]
    %v1064 = vld [vmem:[#allocation8 + $0x1840] sm:$0xff]
    %v1065 = vld [vmem:[#allocation8 + $0x1848] sm:$0xff]
    %v1066 = vld [vmem:[#allocation8 + $0x1850] sm:$0xff]
    %v1067 = vld [vmem:[#allocation8 + $0x1858] sm:$0xff]
    %v1068 = vld [vmem:[#allocation8 + $0x1860] sm:$0xff]
    %v1069 = vld [vmem:[#allocation8 + $0x1868] sm:$0xff]
    %v1070 = vld [vmem:[#allocation8 + $0x1870] sm:$0xff]
    %v1071 = vld [vmem:[#allocation8 + $0x1878] sm:$0xff]
    %v1072 = vld [vmem:[#allocation8 + $0x1880] sm:$0xff]
    %v1073 = vld [vmem:[#allocation8 + $0x1888] sm:$0xff]
    %v1074 = vld [vmem:[#allocation8 + $0x1890] sm:$0xff]
    %v1075 = vld [vmem:[#allocation8 + $0x1898] sm:$0xff]
    %v1076 = vld [vmem:[#allocation8 + $0x18a0] sm:$0xff]
    %v1077 = vld [vmem:[#allocation8 + $0x18a8] sm:$0xff]
    %v1078 = vld [vmem:[#allocation8 + $0x18b0] sm:$0xff]
    %v1079 = vld [vmem:[#allocation8 + $0x18b8] sm:$0xff]
    %v1080 = vld [vmem:[#allocation8 + $0x18c0] sm:$0xff]
    %v1081 = vld [vmem:[#allocation8 + $0x18c8] sm:$0xff]
    %v1082 = vld [vmem:[#allocation8 + $0x18d0] sm:$0xff]
    %v1083 = vld [vmem:[#allocation8 + $0x18d8] sm:$0xff]
    %v1084 = vld [vmem:[#allocation8 + $0x18e0] sm:$0xff]
    %v1085 = vld [vmem:[#allocation8 + $0x18e8] sm:$0xff]
    %v1086 = vld [vmem:[#allocation8 + $0x18f0] sm:$0xff]
    %v1087 = vld [vmem:[#allocation8 + $0x18f8] sm:$0xff]
    %v1088 = vld [vmem:[#allocation8 + $0x1900] sm:$0xff]
    %v1089 = vld [vmem:[#allocation8 + $0x1908] sm:$0xff]
    %v1090 = vld [vmem:[#allocation8 + $0x1910] sm:$0xff]
    %v1091 = vld [vmem:[#allocation8 + $0x1918] sm:$0xff]
    %v1092 = vld [vmem:[#allocation8 + $0x1920] sm:$0xff]
    %v1093 = vld [vmem:[#allocation8 + $0x1928] sm:$0xff]
    %v1094 = vld [vmem:[#allocation8 + $0x1930] sm:$0xff]
    %v1095 = vld [vmem:[#allocation8 + $0x1938] sm:$0xff]
    %v1096 = vld [vmem:[#allocation8 + $0x1940] sm:$0xff]
    %v1097 = vld [vmem:[#allocation8 + $0x1948] sm:$0xff]
    %v1098 = vld [vmem:[#allocation8 + $0x1950] sm:$0xff]
    %v1099 = vld [vmem:[#allocation8 + $0x1958] sm:$0xff]
    %v1100 = vld [vmem:[#allocation8 + $0x1960] sm:$0xff]
    %v1101 = vld [vmem:[#allocation8 + $0x1968] sm:$0xff]
    %v1102 = vld [vmem:[#allocation8 + $0x1970] sm:$0xff]
    %v1103 = vld [vmem:[#allocation8 + $0x1978] sm:$0xff]
    %v1104 = vld [vmem:[#allocation8 + $0x1980] sm:$0xff]
    %v1105 = vld [vmem:[#allocation8 + $0x1988] sm:$0xff]
    %v1106 = vld [vmem:[#allocation8 + $0x1990] sm:$0xff]
    %v1107 = vld [vmem:[#allocation8 + $0x1998] sm:$0xff]
    %v1108 = vld [vmem:[#allocation8 + $0x19a0] sm:$0xff]
    %v1109 = vld [vmem:[#allocation8 + $0x19a8] sm:$0xff]
    %v1110 = vld [vmem:[#allocation8 + $0x19b0] sm:$0xff]
    %v1111 = vld [vmem:[#allocation8 + $0x19b8] sm:$0xff]
    %v1112 = vld [vmem:[#allocation8 + $0x19c0] sm:$0xff]
    %v1113 = vld [vmem:[#allocation8 + $0x19c8] sm:$0xff]
    %v1114 = vld [vmem:[#allocation8 + $0x19d0] sm:$0xff]
    %v1115 = vld [vmem:[#allocation8 + $0x19d8] sm:$0xff]
    %v1116 = vld [vmem:[#allocation8 + $0x19e0] sm:$0xff]
    %v1117 = vld [vmem:[#allocation8 + $0x19e8] sm:$0xff]
    %v1118 = vld [vmem:[#allocation8 + $0x19f0] sm:$0xff]
    %v1119 = vld [vmem:[#allocation8 + $0x19f8] sm:$0xff]
    %v1120 = vld [vmem:[#allocation8 + $0x1a00] sm:$0xff]
    %v1121 = vld [vmem:[#allocation8 + $0x1a08] sm:$0xff]
    %v1122 = vld [vmem:[#allocation8 + $0x1a10] sm:$0xff]
    %v1123 = vld [vmem:[#allocation8 + $0x1a18] sm:$0xff]
    %v1124 = vld [vmem:[#allocation8 + $0x1a20] sm:$0xff]
    %v1125 = vld [vmem:[#allocation8 + $0x1a28] sm:$0xff]
    %v1126 = vld [vmem:[#allocation8 + $0x1a30] sm:$0xff]
    %v1127 = vld [vmem:[#allocation8 + $0x1a38] sm:$0xff]
    %v1128 = vld [vmem:[#allocation8 + $0x1a40] sm:$0xff]
    %v1129 = vld [vmem:[#allocation8 + $0x1a48] sm:$0xff]
    %v1130 = vld [vmem:[#allocation8 + $0x1a50] sm:$0xff]
    %v1131 = vld [vmem:[#allocation8 + $0x1a58] sm:$0xff]
    %v1132 = vld [vmem:[#allocation8 + $0x1a60] sm:$0xff]
    %v1133 = vld [vmem:[#allocation8 + $0x1a68] sm:$0xff]
    %v1134 = vld [vmem:[#allocation8 + $0x1a70] sm:$0xff]
    %v1135 = vld [vmem:[#allocation8 + $0x1a78] sm:$0xff]
    %v1136 = vld [vmem:[#allocation8 + $0x1a80] sm:$0xff]
    %v1137 = vld [vmem:[#allocation8 + $0x1a88] sm:$0xff]
    %v1138 = vld [vmem:[#allocation8 + $0x1a90] sm:$0xff]
    %v1139 = vld [vmem:[#allocation8 + $0x1a98] sm:$0xff]
    %v1140 = vld [vmem:[#allocation8 + $0x1aa0] sm:$0xff]
    %v1141 = vld [vmem:[#allocation8 + $0x1aa8] sm:$0xff]
    %v1142 = vld [vmem:[#allocation8 + $0x1ab0] sm:$0xff]
    %v1143 = vld [vmem:[#allocation8 + $0x1ab8] sm:$0xff]
    %v1144 = vld [vmem:[#allocation8 + $0x1ac0] sm:$0xff]
    %v1145 = vld [vmem:[#allocation8 + $0x1ac8] sm:$0xff]
    %v1146 = vld [vmem:[#allocation8 + $0x1ad0] sm:$0xff]
    %v1147 = vld [vmem:[#allocation8 + $0x1ad8] sm:$0xff]
    %v1148 = vld [vmem:[#allocation8 + $0x1ae0] sm:$0xff]
    %v1149 = vld [vmem:[#allocation8 + $0x1ae8] sm:$0xff]
    %v1150 = vld [vmem:[#allocation8 + $0x1af0] sm:$0xff]
    %v1151 = vld [vmem:[#allocation8 + $0x1af8] sm:$0xff]
    %v1152 = vld [vmem:[#allocation8 + $0x1b00] sm:$0xff]
    %v1153 = vld [vmem:[#allocation8 + $0x1b08] sm:$0xff]
    %v1154 = vld [vmem:[#allocation8 + $0x1b10] sm:$0xff]
    %v1155 = vld [vmem:[#allocation8 + $0x1b18] sm:$0xff]
    %v1156 = vld [vmem:[#allocation8 + $0x1b20] sm:$0xff]
    %v1157 = vld [vmem:[#allocation8 + $0x1b28] sm:$0xff]
    %v1158 = vld [vmem:[#allocation8 + $0x1b30] sm:$0xff]
    %v1159 = vld [vmem:[#allocation8 + $0x1b38] sm:$0xff]
    %v1160 = vld [vmem:[#allocation8 + $0x1b40] sm:$0xff]
    %v1161 = vld [vmem:[#allocation8 + $0x1b48] sm:$0xff]
    %v1162 = vld [vmem:[#allocation8 + $0x1b50] sm:$0xff]
    %v1163 = vld [vmem:[#allocation8 + $0x1b58] sm:$0xff]
    %v1164 = vld [vmem:[#allocation8 + $0x1b60] sm:$0xff]
    %v1165 = vld [vmem:[#allocation8 + $0x1b68] sm:$0xff]
    %v1166 = vld [vmem:[#allocation8 + $0x1b70] sm:$0xff]
    %v1167 = vld [vmem:[#allocation8 + $0x1b78] sm:$0xff]
    %v1168 = vld [vmem:[#allocation8 + $0x1b80] sm:$0xff]
    %v1169 = vld [vmem:[#allocation8 + $0x1b88] sm:$0xff]
    %v1170 = vld [vmem:[#allocation8 + $0x1b90] sm:$0xff]
    %v1171 = vld [vmem:[#allocation8 + $0x1b98] sm:$0xff]
    %v1172 = vld [vmem:[#allocation8 + $0x1ba0] sm:$0xff]
    %v1173 = vld [vmem:[#allocation8 + $0x1ba8] sm:$0xff]
    %v1174 = vld [vmem:[#allocation8 + $0x1bb0] sm:$0xff]
    %v1175 = vld [vmem:[#allocation8 + $0x1bb8] sm:$0xff]
    %v1176 = vld [vmem:[#allocation8 + $0x1bc0] sm:$0xff]
    %v1177 = vld [vmem:[#allocation8 + $0x1bc8] sm:$0xff]
    %v1178 = vld [vmem:[#allocation8 + $0x1bd0] sm:$0xff]
    %v1179 = vld [vmem:[#allocation8 + $0x1bd8] sm:$0xff]
    %v1180 = vld [vmem:[#allocation8 + $0x1be0] sm:$0xff]
    %v1181 = vld [vmem:[#allocation8 + $0x1be8] sm:$0xff]
    %v1182 = vld [vmem:[#allocation8 + $0x1bf0] sm:$0xff]
    %v1183 = vld [vmem:[#allocation8 + $0x1bf8] sm:$0xff]
    %v1184 = vld [vmem:[#allocation8 + $0x1c00] sm:$0xff]
    %v1185 = vld [vmem:[#allocation8 + $0x1c08] sm:$0xff]
    %v1186 = vld [vmem:[#allocation8 + $0x1c10] sm:$0xff]
    %v1187 = vld [vmem:[#allocation8 + $0x1c18] sm:$0xff]
    %v1188 = vld [vmem:[#allocation8 + $0x1c20] sm:$0xff]
    %v1189 = vld [vmem:[#allocation8 + $0x1c28] sm:$0xff]
    %v1190 = vld [vmem:[#allocation8 + $0x1c30] sm:$0xff]
    %v1191 = vld [vmem:[#allocation8 + $0x1c38] sm:$0xff]
    %v1192 = vld [vmem:[#allocation8 + $0x1c40] sm:$0xff]
    %v1193 = vld [vmem:[#allocation8 + $0x1c48] sm:$0xff]
    %v1194 = vld [vmem:[#allocation8 + $0x1c50] sm:$0xff]
    %v1195 = vld [vmem:[#allocation8 + $0x1c58] sm:$0xff]
    %v1196 = vld [vmem:[#allocation8 + $0x1c60] sm:$0xff]
    %v1197 = vld [vmem:[#allocation8 + $0x1c68] sm:$0xff]
    %v1198 = vld [vmem:[#allocation8 + $0x1c70] sm:$0xff]
    %v1199 = vld [vmem:[#allocation8 + $0x1c78] sm:$0xff]
    %v1200 = vld [vmem:[#allocation8 + $0x1c80] sm:$0xff]
    %v1201 = vld [vmem:[#allocation8 + $0x1c88] sm:$0xff]
    %v1202 = vld [vmem:[#allocation8 + $0x1c90] sm:$0xff]
    %v1203 = vld [vmem:[#allocation8 + $0x1c98] sm:$0xff]
    %v1204 = vld [vmem:[#allocation8 + $0x1ca0] sm:$0xff]
    %v1205 = vld [vmem:[#allocation8 + $0x1ca8] sm:$0xff]
    %v1206 = vld [vmem:[#allocation8 + $0x1cb0] sm:$0xff]
    %v1207 = vld [vmem:[#allocation8 + $0x1cb8] sm:$0xff]
    %v1208 = vld [vmem:[#allocation8 + $0x1cc0] sm:$0xff]
    %v1209 = vld [vmem:[#allocation8 + $0x1cc8] sm:$0xff]
    %v1210 = vld [vmem:[#allocation8 + $0x1cd0] sm:$0xff]
    %v1211 = vld [vmem:[#allocation8 + $0x1cd8] sm:$0xff]
    %v1212 = vld [vmem:[#allocation8 + $0x1ce0] sm:$0xff]
    %v1213 = vld [vmem:[#allocation8 + $0x1ce8] sm:$0xff]
    %v1214 = vld [vmem:[#allocation8 + $0x1cf0] sm:$0xff]
    %v1215 = vld [vmem:[#allocation8 + $0x1cf8] sm:$0xff]
    %v1216 = vld [vmem:[#allocation8 + $0x1d00] sm:$0xff]
    %v1217 = vld [vmem:[#allocation8 + $0x1d08] sm:$0xff]
    %v1218 = vld [vmem:[#allocation8 + $0x1d10] sm:$0xff]
    %v1219 = vld [vmem:[#allocation8 + $0x1d18] sm:$0xff]
    %v1220 = vld [vmem:[#allocation8 + $0x1d20] sm:$0xff]
    %v1221 = vld [vmem:[#allocation8 + $0x1d28] sm:$0xff]
    %v1222 = vld [vmem:[#allocation8 + $0x1d30] sm:$0xff]
    %v1223 = vld [vmem:[#allocation8 + $0x1d38] sm:$0xff]
    %v1224 = vld [vmem:[#allocation8 + $0x1d40] sm:$0xff]
    %v1225 = vld [vmem:[#allocation8 + $0x1d48] sm:$0xff]
    %v1226 = vld [vmem:[#allocation8 + $0x1d50] sm:$0xff]
    %v1227 = vld [vmem:[#allocation8 + $0x1d58] sm:$0xff]
    %v1228 = vld [vmem:[#allocation8 + $0x1d60] sm:$0xff]
    %v1229 = vld [vmem:[#allocation8 + $0x1d68] sm:$0xff]
    %v1230 = vld [vmem:[#allocation8 + $0x1d70] sm:$0xff]
    %v1231 = vld [vmem:[#allocation8 + $0x1d78] sm:$0xff]
    %v1232 = vld [vmem:[#allocation8 + $0x1d80] sm:$0xff]
    %v1233 = vld [vmem:[#allocation8 + $0x1d88] sm:$0xff]
    %v1234 = vld [vmem:[#allocation8 + $0x1d90] sm:$0xff]
    %v1235 = vld [vmem:[#allocation8 + $0x1d98] sm:$0xff]
    %v1236 = vld [vmem:[#allocation8 + $0x1da0] sm:$0xff]
    %v1237 = vld [vmem:[#allocation8 + $0x1da8] sm:$0xff]
    %v1238 = vld [vmem:[#allocation8 + $0x1db0] sm:$0xff]
    %v1239 = vld [vmem:[#allocation8 + $0x1db8] sm:$0xff]
    %v1240 = vld [vmem:[#allocation8 + $0x1dc0] sm:$0xff]
    %v1241 = vld [vmem:[#allocation8 + $0x1dc8] sm:$0xff]
    %v1242 = vld [vmem:[#allocation8 + $0x1dd0] sm:$0xff]
    %v1243 = vld [vmem:[#allocation8 + $0x1dd8] sm:$0xff]
    %v1244 = vld [vmem:[#allocation8 + $0x1de0] sm:$0xff]
    %v1245 = vld [vmem:[#allocation8 + $0x1de8] sm:$0xff]
    %v1246 = vld [vmem:[#allocation8 + $0x1df0] sm:$0xff]
    %v1247 = vld [vmem:[#allocation8 + $0x1df8] sm:$0xff]
    %v1248 = vld [vmem:[#allocation8 + $0x1e00] sm:$0xff]
    %v1249 = vld [vmem:[#allocation8 + $0x1e08] sm:$0xff]
    %v1250 = vld [vmem:[#allocation8 + $0x1e10] sm:$0xff]
    %v1251 = vld [vmem:[#allocation8 + $0x1e18] sm:$0xff]
    %v1252 = vld [vmem:[#allocation8 + $0x1e20] sm:$0xff]
    %v1253 = vld [vmem:[#allocation8 + $0x1e28] sm:$0xff]
    %v1254 = vld [vmem:[#allocation8 + $0x1e30] sm:$0xff]
    %v1255 = vld [vmem:[#allocation8 + $0x1e38] sm:$0xff]
    %v1256 = vld [vmem:[#allocation8 + $0x1e40] sm:$0xff]
    %v1257 = vld [vmem:[#allocation8 + $0x1e48] sm:$0xff]
    %v1258 = vld [vmem:[#allocation8 + $0x1e50] sm:$0xff]
    %v1259 = vld [vmem:[#allocation8 + $0x1e58] sm:$0xff]
    %v1260 = vld [vmem:[#allocation8 + $0x1e60] sm:$0xff]
    %v1261 = vld [vmem:[#allocation8 + $0x1e68] sm:$0xff]
    %v1262 = vld [vmem:[#allocation8 + $0x1e70] sm:$0xff]
    %v1263 = vld [vmem:[#allocation8 + $0x1e78] sm:$0xff]
    %v1264 = vld [vmem:[#allocation8 + $0x1e80] sm:$0xff]
    %v1265 = vld [vmem:[#allocation8 + $0x1e88] sm:$0xff]
    %v1266 = vld [vmem:[#allocation8 + $0x1e90] sm:$0xff]
    %v1267 = vld [vmem:[#allocation8 + $0x1e98] sm:$0xff]
    %v1268 = vld [vmem:[#allocation8 + $0x1ea0] sm:$0xff]
    %v1269 = vld [vmem:[#allocation8 + $0x1ea8] sm:$0xff]
    %v1270 = vld [vmem:[#allocation8 + $0x1eb0] sm:$0xff]
    %v1271 = vld [vmem:[#allocation8 + $0x1eb8] sm:$0xff]
    %v1272 = vld [vmem:[#allocation8 + $0x1ec0] sm:$0xff]
    %v1273 = vld [vmem:[#allocation8 + $0x1ec8] sm:$0xff]
    %v1274 = vld [vmem:[#allocation8 + $0x1ed0] sm:$0xff]
    %v1275 = vld [vmem:[#allocation8 + $0x1ed8] sm:$0xff]
    %v1276 = vld [vmem:[#allocation8 + $0x1ee0] sm:$0xff]
    %v1277 = vld [vmem:[#allocation8 + $0x1ee8] sm:$0xff]
    %v1278 = vld [vmem:[#allocation8 + $0x1ef0] sm:$0xff]
    %v1279 = vld [vmem:[#allocation8 + $0x1ef8] sm:$0xff]
    %v1280 = vld [vmem:[#allocation8 + $0x1f00] sm:$0xff]
    %v1281 = vld [vmem:[#allocation8 + $0x1f08] sm:$0xff]
    %v1282 = vld [vmem:[#allocation8 + $0x1f10] sm:$0xff]
    %v1283 = vld [vmem:[#allocation8 + $0x1f18] sm:$0xff]
    %v1284 = vld [vmem:[#allocation8 + $0x1f20] sm:$0xff]
    %v1285 = vld [vmem:[#allocation8 + $0x1f28] sm:$0xff]
    %v1286 = vld [vmem:[#allocation8 + $0x1f30] sm:$0xff]
    %v1287 = vld [vmem:[#allocation8 + $0x1f38] sm:$0xff]
    %v1288 = vld [vmem:[#allocation8 + $0x1f40] sm:$0xff]
    %v1289 = vld [vmem:[#allocation8 + $0x1f48] sm:$0xff]
    %v1290 = vld [vmem:[#allocation8 + $0x1f50] sm:$0xff]
    %v1291 = vld [vmem:[#allocation8 + $0x1f58] sm:$0xff]
    %v1292 = vld [vmem:[#allocation8 + $0x1f60] sm:$0xff]
    %v1293 = vld [vmem:[#allocation8 + $0x1f68] sm:$0xff]
    %v1294 = vld [vmem:[#allocation8 + $0x1f70] sm:$0xff]
    %v1295 = vld [vmem:[#allocation8 + $0x1f78] sm:$0xff]
    %v1296 = vld [vmem:[#allocation8 + $0x1f80] sm:$0xff]
    %v1297 = vld [vmem:[#allocation8 + $0x1f88] sm:$0xff]
    %v1298 = vld [vmem:[#allocation8 + $0x1f90] sm:$0xff]
    %v1299 = vld [vmem:[#allocation8 + $0x1f98] sm:$0xff]
    %v1300 = vld [vmem:[#allocation8 + $0x1fa0] sm:$0xff]
    %v1301 = vld [vmem:[#allocation8 + $0x1fa8] sm:$0xff]
    %v1302 = vld [vmem:[#allocation8 + $0x1fb0] sm:$0xff]
    %v1303 = vld [vmem:[#allocation8 + $0x1fb8] sm:$0xff]
    %v1304 = vld [vmem:[#allocation8 + $0x1fc0] sm:$0xff]
    %v1305 = vld [vmem:[#allocation8 + $0x1fc8] sm:$0xff]
    %v1306 = vld [vmem:[#allocation8 + $0x1fd0] sm:$0xff]
    %v1307 = vld [vmem:[#allocation8 + $0x1fd8] sm:$0xff]
    %v1308 = vld [vmem:[#allocation8 + $0x1fe0] sm:$0xff]
    %v1309 = vld [vmem:[#allocation8 + $0x1fe8] sm:$0xff]
    %v1310 = vld [vmem:[#allocation8 + $0x1ff0] sm:$0xff]
    %v1311 = vld [vmem:[#allocation8 + $0x1ff8] sm:$0xff]
    %v1312 = vld [vmem:[#allocation8 + $0x2000] sm:$0xff]
    %v1313 = vld [vmem:[#allocation8 + $0x2008] sm:$0xff]
    %v1314 = vld [vmem:[#allocation8 + $0x2010] sm:$0xff]
    %v1315 = vld [vmem:[#allocation8 + $0x2018] sm:$0xff]
    %v1316 = vld [vmem:[#allocation8 + $0x2020] sm:$0xff]
    %v1317 = vld [vmem:[#allocation8 + $0x2028] sm:$0xff]
    %v1318 = vld [vmem:[#allocation8 + $0x2030] sm:$0xff]
    %v1319 = vld [vmem:[#allocation8 + $0x2038] sm:$0xff]
    %v1320 = vld [vmem:[#allocation8 + $0x2040] sm:$0xff]
    %v1321 = vld [vmem:[#allocation8 + $0x2048] sm:$0xff]
    %v1322 = vld [vmem:[#allocation8 + $0x2050] sm:$0xff]
    %v1323 = vld [vmem:[#allocation8 + $0x2058] sm:$0xff]
    %v1324 = vld [vmem:[#allocation8 + $0x2060] sm:$0xff]
    %v1325 = vld [vmem:[#allocation8 + $0x2068] sm:$0xff]
    %v1326 = vld [vmem:[#allocation8 + $0x2070] sm:$0xff]
    %v1327 = vld [vmem:[#allocation8 + $0x2078] sm:$0xff]
    %v1328 = vld [vmem:[#allocation8 + $0x2080] sm:$0xff]
    %v1329 = vld [vmem:[#allocation8 + $0x2088] sm:$0xff]
    %v1330 = vld [vmem:[#allocation8 + $0x2090] sm:$0xff]
    %v1331 = vld [vmem:[#allocation8 + $0x2098] sm:$0xff]
    %v1332 = vld [vmem:[#allocation8 + $0x20a0] sm:$0xff]
    %v1333 = vld [vmem:[#allocation8 + $0x20a8] sm:$0xff]
    %v1334 = vld [vmem:[#allocation8 + $0x20b0] sm:$0xff]
    %v1335 = vld [vmem:[#allocation8 + $0x20b8] sm:$0xff]
    %v1336 = vld [vmem:[#allocation8 + $0x20c0] sm:$0xff]
    %v1337 = vld [vmem:[#allocation8 + $0x20c8] sm:$0xff]
    %v1338 = vld [vmem:[#allocation8 + $0x20d0] sm:$0xff]
    %v1339 = vld [vmem:[#allocation8 + $0x20d8] sm:$0xff]
    %v1340 = vld [vmem:[#allocation8 + $0x20e0] sm:$0xff]
    %v1341 = vld [vmem:[#allocation8 + $0x20e8] sm:$0xff]
    %v1342 = vld [vmem:[#allocation8 + $0x20f0] sm:$0xff]
    %v1343 = vld [vmem:[#allocation8 + $0x20f8] sm:$0xff]
    %v1344 = vld [vmem:[#allocation8 + $0x2100] sm:$0xff]
    %v1345 = vld [vmem:[#allocation8 + $0x2108] sm:$0xff]
    %v1346 = vld [vmem:[#allocation8 + $0x2110] sm:$0xff]
    %v1347 = vld [vmem:[#allocation8 + $0x2118] sm:$0xff]
    %v1348 = vld [vmem:[#allocation8 + $0x2120] sm:$0xff]
    %v1349 = vld [vmem:[#allocation8 + $0x2128] sm:$0xff]
    %v1350 = vld [vmem:[#allocation8 + $0x2130] sm:$0xff]
    %v1351 = vld [vmem:[#allocation8 + $0x2138] sm:$0xff]
    %v1352 = vld [vmem:[#allocation8 + $0x2140] sm:$0xff]
    %v1353 = vld [vmem:[#allocation8 + $0x2148] sm:$0xff]
    %v1354 = vld [vmem:[#allocation8 + $0x2150] sm:$0xff]
    %v1355 = vld [vmem:[#allocation8 + $0x2158] sm:$0xff]
    %v1356 = vld [vmem:[#allocation8 + $0x2160] sm:$0xff]
    %v1357 = vld [vmem:[#allocation8 + $0x2168] sm:$0xff]
    %v1358 = vld [vmem:[#allocation8 + $0x2170] sm:$0xff]
    %v1359 = vld [vmem:[#allocation8 + $0x2178] sm:$0xff]
    %v1360 = vld [vmem:[#allocation8 + $0x2180] sm:$0xff]
    %v1361 = vld [vmem:[#allocation8 + $0x2188] sm:$0xff]
    %v1362 = vld [vmem:[#allocation8 + $0x2190] sm:$0xff]
    %v1363 = vld [vmem:[#allocation8 + $0x2198] sm:$0xff]
    %v1364 = vld [vmem:[#allocation8 + $0x21a0] sm:$0xff]
    %v1365 = vld [vmem:[#allocation8 + $0x21a8] sm:$0xff]
    %v1366 = vld [vmem:[#allocation8 + $0x21b0] sm:$0xff]
    %v1367 = vld [vmem:[#allocation8 + $0x21b8] sm:$0xff]
    %v1368 = vld [vmem:[#allocation8 + $0x21c0] sm:$0xff]
    %v1369 = vld [vmem:[#allocation8 + $0x21c8] sm:$0xff]
    %v1370 = vld [vmem:[#allocation8 + $0x21d0] sm:$0xff]
    %v1371 = vld [vmem:[#allocation8 + $0x21d8] sm:$0xff]
    %v1372 = vld [vmem:[#allocation8 + $0x21e0] sm:$0xff]
    %v1373 = vld [vmem:[#allocation8 + $0x21e8] sm:$0xff]
    %v1374 = vld [vmem:[#allocation8 + $0x21f0] sm:$0xff]
    %v1375 = vld [vmem:[#allocation8 + $0x21f8] sm:$0xff]
    %v1376 = vld [vmem:[#allocation8 + $0x2200] sm:$0xff]
    %v1377 = vld [vmem:[#allocation8 + $0x2208] sm:$0xff]
    %v1378 = vld [vmem:[#allocation8 + $0x2210] sm:$0xff]
    %v1379 = vld [vmem:[#allocation8 + $0x2218] sm:$0xff]
    %v1380 = vld [vmem:[#allocation8 + $0x2220] sm:$0xff]
    %v1381 = vld [vmem:[#allocation8 + $0x2228] sm:$0xff]
    %v1382 = vld [vmem:[#allocation8 + $0x2230] sm:$0xff]
    %v1383 = vld [vmem:[#allocation8 + $0x2238] sm:$0xff]
    %v1384 = vld [vmem:[#allocation8 + $0x2240] sm:$0xff]
    %v1385 = vld [vmem:[#allocation8 + $0x2248] sm:$0xff]
    %v1386 = vld [vmem:[#allocation8 + $0x2250] sm:$0xff]
    %v1387 = vld [vmem:[#allocation8 + $0x2258] sm:$0xff]
    %v1388 = vld [vmem:[#allocation8 + $0x2260] sm:$0xff]
    %v1389 = vld [vmem:[#allocation8 + $0x2268] sm:$0xff]
    %v1390 = vld [vmem:[#allocation8 + $0x2270] sm:$0xff]
    %v1391 = vld [vmem:[#allocation8 + $0x2278] sm:$0xff]
    %v1392 = vld [vmem:[#allocation8 + $0x2280] sm:$0xff]
    %v1393 = vld [vmem:[#allocation8 + $0x2288] sm:$0xff]
    %v1394 = vld [vmem:[#allocation8 + $0x2290] sm:$0xff]
    %v1395 = vld [vmem:[#allocation8 + $0x2298] sm:$0xff]
    %v1396 = vld [vmem:[#allocation8 + $0x22a0] sm:$0xff]
    %v1397 = vld [vmem:[#allocation8 + $0x22a8] sm:$0xff]
    %v1398 = vld [vmem:[#allocation8 + $0x22b0] sm:$0xff]
    %v1399 = vld [vmem:[#allocation8 + $0x22b8] sm:$0xff]
    %v1400 = vld [vmem:[#allocation8 + $0x22c0] sm:$0xff]
    %v1401 = vld [vmem:[#allocation8 + $0x22c8] sm:$0xff]
    %v1402 = vld [vmem:[#allocation8 + $0x22d0] sm:$0xff]
    %v1403 = vld [vmem:[#allocation8 + $0x22d8] sm:$0xff]
    %v1404 = vld [vmem:[#allocation8 + $0x22e0] sm:$0xff]
    %v1405 = vld [vmem:[#allocation8 + $0x22e8] sm:$0xff]
    %v1406 = vld [vmem:[#allocation8 + $0x22f0] sm:$0xff]
    %v1407 = vld [vmem:[#allocation8 + $0x22f8] sm:$0xff]
    %v1408 = vld [vmem:[#allocation8 + $0x2300] sm:$0xff]
    %v1409 = vld [vmem:[#allocation8 + $0x2308] sm:$0xff]
    %v1410 = vld [vmem:[#allocation8 + $0x2310] sm:$0xff]
    %v1411 = vld [vmem:[#allocation8 + $0x2318] sm:$0xff]
    %v1412 = vld [vmem:[#allocation8 + $0x2320] sm:$0xff]
    %v1413 = vld [vmem:[#allocation8 + $0x2328] sm:$0xff]
    %v1414 = vld [vmem:[#allocation8 + $0x2330] sm:$0xff]
    %v1415 = vld [vmem:[#allocation8 + $0x2338] sm:$0xff]
    %v1416 = vld [vmem:[#allocation8 + $0x2340] sm:$0xff]
    %v1417 = vld [vmem:[#allocation8 + $0x2348] sm:$0xff]
    %v1418 = vld [vmem:[#allocation8 + $0x2350] sm:$0xff]
    %v1419 = vld [vmem:[#allocation8 + $0x2358] sm:$0xff]
    %v1420 = vld [vmem:[#allocation8 + $0x2360] sm:$0xff]
    %v1421 = vld [vmem:[#allocation8 + $0x2368] sm:$0xff]
    %v1422 = vld [vmem:[#allocation8 + $0x2370] sm:$0xff]
    %v1423 = vld [vmem:[#allocation8 + $0x2378] sm:$0xff]
    %v1424 = vld [vmem:[#allocation8 + $0x2380] sm:$0xff]
    %v1425 = vld [vmem:[#allocation8 + $0x2388] sm:$0xff]
    %v1426 = vld [vmem:[#allocation8 + $0x2390] sm:$0xff]
    %v1427 = vld [vmem:[#allocation8 + $0x2398] sm:$0xff]
    %v1428 = vld [vmem:[#allocation8 + $0x23a0] sm:$0xff]
    %v1429 = vld [vmem:[#allocation8 + $0x23a8] sm:$0xff]
    %v1430 = vld [vmem:[#allocation8 + $0x23b0] sm:$0xff]
    %v1431 = vld [vmem:[#allocation8 + $0x23b8] sm:$0xff]
    %v1432 = vld [vmem:[#allocation8 + $0x23c0] sm:$0xff]
    %v1433 = vld [vmem:[#allocation8 + $0x23c8] sm:$0xff]
    %v1434 = vld [vmem:[#allocation8 + $0x23d0] sm:$0xff]
    %v1435 = vld [vmem:[#allocation8 + $0x23d8] sm:$0xff]
    %v1436 = vld [vmem:[#allocation8 + $0x23e0] sm:$0xff]
    %v1437 = vld [vmem:[#allocation8 + $0x23e8] sm:$0xff]
    %v1438 = vld [vmem:[#allocation8 + $0x23f0] sm:$0xff]
    %v1439 = vld [vmem:[#allocation8 + $0x23f8] sm:$0xff]
    %v1440 = vld [vmem:[#allocation10] sm:$0xff]
    %v1441 = vld [vmem:[#allocation10 + $0x8] sm:$0xff]
    %v1442 = vld [vmem:[#allocation10 + $0x10] sm:$0x3]
    %v1446 = vlaneseq
    %v1447 = vshrl.u32 %v1446, 7
    %v1448 = vsub.s32 0, %v1447
    %v1449 = vrot.slane %v1440, %v1448
    %v1450 = vlaneseq
    %v1451 = vshrl.u32 %v1450, 7
    %v1452 = vsub.s32 1, %v1451
    %v1453 = vrot.slane %v1440, %v1452
    %v1454 = vlaneseq
    %v1455 = vshrl.u32 %v1454, 7
    %v1456 = vsub.s32 2, %v1455
    %v1457 = vrot.slane %v1440, %v1456
    %v1458 = vlaneseq
    %v1459 = vshrl.u32 %v1458, 7
    %v1460 = vsub.s32 3, %v1459
    %v1461 = vrot.slane %v1440, %v1460
    %v1462 = vlaneseq
    %v1463 = vshrl.u32 %v1462, 7
    %v1464 = vsub.s32 4, %v1463
    %v1465 = vrot.slane %v1440, %v1464
    %v1466 = vlaneseq
    %v1467 = vshrl.u32 %v1466, 7
    %v1468 = vsub.s32 5, %v1467
    %v1469 = vrot.slane %v1440, %v1468
    %v1470 = vlaneseq
    %v1471 = vshrl.u32 %v1470, 7
    %v1472 = vsub.s32 6, %v1471
    %v1473 = vrot.slane %v1440, %v1472
    %v1474 = vlaneseq
    %v1475 = vshrl.u32 %v1474, 7
    %v1476 = vsub.s32 7, %v1475
    %v1477 = vrot.slane %v1440, %v1476
    %v1478 = vlaneseq
    %v1479 = vshrl.u32 %v1478, 7
    %v1480 = vsub.s32 0, %v1479
    %v1481 = vrot.slane %v1441, %v1480
    %v1482 = vlaneseq
    %v1483 = vshrl.u32 %v1482, 7
    %v1484 = vsub.s32 1, %v1483
    %v1485 = vrot.slane %v1441, %v1484
    %v1486 = vlaneseq
    %v1487 = vshrl.u32 %v1486, 7
    %v1488 = vsub.s32 2, %v1487
    %v1489 = vrot.slane %v1441, %v1488
    %v1490 = vlaneseq
    %v1491 = vshrl.u32 %v1490, 7
    %v1492 = vsub.s32 3, %v1491
    %v1493 = vrot.slane %v1441, %v1492
    %v1494 = vlaneseq
    %v1495 = vshrl.u32 %v1494, 7
    %v1496 = vsub.s32 4, %v1495
    %v1497 = vrot.slane %v1441, %v1496
    %v1498 = vlaneseq
    %v1499 = vshrl.u32 %v1498, 7
    %v1500 = vsub.s32 5, %v1499
    %v1501 = vrot.slane %v1441, %v1500
    %v1502 = vlaneseq
    %v1503 = vshrl.u32 %v1502, 7
    %v1504 = vsub.s32 6, %v1503
    %v1505 = vrot.slane %v1441, %v1504
    %v1506 = vlaneseq
    %v1507 = vshrl.u32 %v1506, 7
    %v1508 = vsub.s32 7, %v1507
    %v1509 = vrot.slane %v1441, %v1508
    %v1510 = vlaneseq
    %v1511 = vshrl.u32 %v1510, 7
    %v1512 = vsub.s32 0, %v1511
    %v1513 = vrot.slane %v1442, %v1512
    %v1514 = vlaneseq
    %v1515 = vshrl.u32 %v1514, 7
    %v1516 = vsub.s32 1, %v1515
    %v1517 = vrot.slane %v1442, %v1516
    %1536 = vmatprep.subr.mxu0 %v289
    %1537 = vmatpush1.msra.mxu0 %v288
    %1538 = vmatprep.subr.mxu0 %v307
    %1539 = vmatpush1.msra.mxu0 %v306
    %1540 = vmatprep.subr.mxu0 %v325
    %1541 = vmatpush1.msra.mxu0 %v324
    %1542 = vmatprep.subr.mxu0 %v343
    %1543 = vmatpush1.msra.mxu0 %v342
    %1544 = vmatprep.subr.mxu0 %v361
    %1545 = vmatpush1.msra.mxu0 %v360
    %1546 = vmatprep.subr.mxu0 %v379
    %1547 = vmatpush1.msra.mxu0 %v378
    %1548 = vmatprep.subr.mxu0 %v397
    %1549 = vmatpush1.msra.mxu0 %v396
    %1550 = vmatprep.subr.mxu0 %v415
    %1551 = vmatpush1.msra.mxu0 %v414
    %1552 = vmatprep.subr.mxu0 %v433
    %1553 = vmatpush1.msra.mxu0 %v432
    %1554 = vmatprep.subr.mxu0 %v451
    %1555 = vmatpush1.msra.mxu0 %v450
    %1556 = vmatprep.subr.mxu0 %v469
    %1557 = vmatpush1.msra.mxu0 %v468
    %1558 = vmatprep.subr.mxu0 %v487
    %1559 = vmatpush1.msra.mxu0 %v486
    %1560 = vmatprep.subr.mxu0 %v505
    %1561 = vmatpush1.msra.mxu0 %v504
    %1562 = vmatprep.subr.mxu0 %v523
    %1563 = vmatpush1.msra.mxu0 %v522
    %1564 = vmatprep.subr.mxu0 %v541
    %1565 = vmatpush1.msra.mxu0 %v540
    %1566 = vmatprep.subr.mxu0 %v559
    %1567 = vmatpush1.msra.mxu0 %v558
    %1568 = vmatprep.subr.mxu0 %v577
    %1569 = vmatpush1.msra.mxu0 %v576
    %1570 = vmatprep.subr.mxu0 %v595
    %1571 = vmatpush1.msra.mxu0 %v594
    %1572 = vmatprep.subr.mxu0 %v613
    %1573 = vmatpush1.msra.mxu0 %v612
    %1574 = vmatprep.subr.mxu0 %v631
    %1575 = vmatpush1.msra.mxu0 %v630
    %1576 = vmatprep.subr.mxu0 %v649
    %1577 = vmatpush1.msra.mxu0 %v648
    %1578 = vmatprep.subr.mxu0 %v667
    %1579 = vmatpush1.msra.mxu0 %v666
    %1580 = vmatprep.subr.mxu0 %v685
    %1581 = vmatpush1.msra.mxu0 %v684
    %1582 = vmatprep.subr.mxu0 %v703
    %1583 = vmatpush1.msra.mxu0 %v702
    %1584 = vmatprep.subr.mxu0 %v721
    %1585 = vmatpush1.msra.mxu0 %v720
    %1586 = vmatprep.subr.mxu0 %v739
    %1587 = vmatpush1.msra.mxu0 %v738
    %1588 = vmatprep.subr.mxu0 %v757
    %1589 = vmatpush1.msra.mxu0 %v756
    %1590 = vmatprep.subr.mxu0 %v775
    %1591 = vmatpush1.msra.mxu0 %v774
    %1592 = vmatprep.subr.mxu0 %v793
    %1593 = vmatpush1.msra.mxu0 %v792
    %1594 = vmatprep.subr.mxu0 %v811
    %1595 = vmatpush1.msra.mxu0 %v810
    %1596 = vmatprep.subr.mxu0 %v829
    %1597 = vmatpush1.msra.mxu0 %v828
    %1598 = vmatprep.subr.mxu0 %v847
    %1599 = vmatpush1.msra.mxu0 %v846
    %1600 = vmatprep.mubr.f32.mxu0 %v285
    %1601 = vmatmul.mubr.f32.gmra.mrb[0].mxu0 %v284
    %v1602 = vpop.f32.mrb[0].mxu0
    %v1603 = vadd.f32 %v1449, %v1602
    %v1604 = vpop.f32.mrb[0].mxu0
    %v1605 = vadd.f32 %v1453, %v1604
    %1606 = vdwg.mxu0
    %1607 = vmatprep.subr.mxu0 %v865
    %1608 = vmatpush1.msra.mxu0 %v864
    %1609 = vmatprep.subr.mxu0 %v883
    %1610 = vmatpush1.msra.mxu0 %v882
    %1611 = vmatprep.subr.mxu0 %v901
    %1612 = vmatpush1.msra.mxu0 %v900
    %1613 = vmatprep.subr.mxu0 %v919
    %1614 = vmatpush1.msra.mxu0 %v918
    %1615 = vmatprep.subr.mxu0 %v937
    %1616 = vmatpush1.msra.mxu0 %v936
    %1617 = vmatprep.subr.mxu0 %v955
    %1618 = vmatpush1.msra.mxu0 %v954
    %1619 = vmatprep.subr.mxu0 %v973
    %1620 = vmatpush1.msra.mxu0 %v972
    %1621 = vmatprep.subr.mxu0 %v991
    %1622 = vmatpush1.msra.mxu0 %v990
    %1623 = vmatprep.subr.mxu0 %v1009
    %1624 = vmatpush1.msra.mxu0 %v1008
    %1625 = vmatprep.subr.mxu0 %v1027
    %1626 = vmatpush1.msra.mxu0 %v1026
    %1627 = vmatprep.subr.mxu0 %v1045
    %1628 = vmatpush1.msra.mxu0 %v1044
    %1629 = vmatprep.subr.mxu0 %v1063
    %1630 = vmatpush1.msra.mxu0 %v1062
    %1631 = vmatprep.subr.mxu0 %v1081
    %1632 = vmatpush1.msra.mxu0 %v1080
    %1633 = vmatprep.subr.mxu0 %v1099
    %1634 = vmatpush1.msra.mxu0 %v1098
    %1635 = vmatprep.subr.mxu0 %v1117
    %1636 = vmatpush1.msra.mxu0 %v1116
    %1637 = vmatprep.subr.mxu0 %v1135
    %1638 = vmatpush1.msra.mxu0 %v1134
    %1639 = vmatprep.subr.mxu0 %v1153
    %1640 = vmatpush1.msra.mxu0 %v1152
    %1641 = vmatprep.subr.mxu0 %v1171
    %1642 = vmatpush1.msra.mxu0 %v1170
    %1643 = vmatprep.subr.mxu0 %v1189
    %1644 = vmatpush1.msra.mxu0 %v1188
    %1645 = vmatprep.subr.mxu0 %v1207
    %1646 = vmatpush1.msra.mxu0 %v1206
    %1647 = vmatprep.subr.mxu0 %v1225
    %1648 = vmatpush1.msra.mxu0 %v1224
    %1649 = vmatprep.subr.mxu0 %v1243
    %1650 = vmatpush1.msra.mxu0 %v1242
    %1651 = vmatprep.subr.mxu0 %v1261
    %1652 = vmatpush1.msra.mxu0 %v1260
    %1653 = vmatprep.subr.mxu0 %v1279
    %1654 = vmatpush1.msra.mxu0 %v1278
    %1655 = vmatprep.subr.mxu0 %v1297
    %1656 = vmatpush1.msra.mxu0 %v1296
    %1657 = vmatprep.subr.mxu0 %v1315
    %1658 = vmatpush1.msra.mxu0 %v1314
    %1659 = vmatprep.subr.mxu0 %v1333
    %1660 = vmatpush1.msra.mxu0 %v1332
    %1661 = vmatprep.subr.mxu0 %v1351
    %1662 = vmatpush1.msra.mxu0 %v1350
    %1663 = vmatprep.subr.mxu0 %v1369
    %1664 = vmatpush1.msra.mxu0 %v1368
    %1665 = vmatprep.subr.mxu0 %v1387
    %1666 = vmatpush1.msra.mxu0 %v1386
    %1667 = vmatprep.subr.mxu0 %v1405
    %1668 = vmatpush1.msra.mxu0 %v1404
    %1669 = vmatprep.subr.mxu0 %v1423
    %1670 = vmatpush1.msra.mxu0 %v1422
    %1671 = vmatprep.mubr.f32.mxu0 %v287
    %1672 = vmatmul.mubr.f32.gmra.mrb[0].mxu0 %v286
    %v1673 = vpop.f32.mrb[0].mxu0
    %v1674 = vadd.f32 %v1603, %v1673
    %v1675 = vpop.f32.mrb[0].mxu0
    %v1676 = vadd.f32 %v1605, %v1675
    %1677 = vdwg.mxu0
    %1678 = vmatprep.subr.mxu0 %v291
    %1679 = vmatpush1.msra.mxu0 %v290
    %1680 = vmatprep.subr.mxu0 %v309
    %1681 = vmatpush1.msra.mxu0 %v308
    %1682 = vmatprep.subr.mxu0 %v327
    %1683 = vmatpush1.msra.mxu0 %v326
    %1684 = vmatprep.subr.mxu0 %v345
    %1685 = vmatpush1.msra.mxu0 %v344
    %1686 = vmatprep.subr.mxu0 %v363
    %1687 = vmatpush1.msra.mxu0 %v362
    %1688 = vmatprep.subr.mxu0 %v381
    %1689 = vmatpush1.msra.mxu0 %v380
    %1690 = vmatprep.subr.mxu0 %v399
    %1691 = vmatpush1.msra.mxu0 %v398
    %1692 = vmatprep.subr.mxu0 %v417
    %1693 = vmatpush1.msra.mxu0 %v416
    %1694 = vmatprep.subr.mxu0 %v435
    %1695 = vmatpush1.msra.mxu0 %v434
    %1696 = vmatprep.subr.mxu0 %v453
    %1697 = vmatpush1.msra.mxu0 %v452
    %1698 = vmatprep.subr.mxu0 %v471
    %1699 = vmatpush1.msra.mxu0 %v470
    %1700 = vmatprep.subr.mxu0 %v489
    %1701 = vmatpush1.msra.mxu0 %v488
    %1702 = vmatprep.subr.mxu0 %v507
    %1703 = vmatpush1.msra.mxu0 %v506
    %1704 = vmatprep.subr.mxu0 %v525
    %1705 = vmatpush1.msra.mxu0 %v524
    %1706 = vmatprep.subr.mxu0 %v543
    %1707 = vmatpush1.msra.mxu0 %v542
    %1708 = vmatprep.subr.mxu0 %v561
    %1709 = vmatpush1.msra.mxu0 %v560
    %1710 = vmatprep.subr.mxu0 %v579
    %1711 = vmatpush1.msra.mxu0 %v578
    %1712 = vmatprep.subr.mxu0 %v597
    %1713 = vmatpush1.msra.mxu0 %v596
    %1714 = vmatprep.subr.mxu0 %v615
    %1715 = vmatpush1.msra.mxu0 %v614
    %1716 = vmatprep.subr.mxu0 %v633
    %1717 = vmatpush1.msra.mxu0 %v632
    %1718 = vmatprep.subr.mxu0 %v651
    %1719 = vmatpush1.msra.mxu0 %v650
    %1720 = vmatprep.subr.mxu0 %v669
    %1721 = vmatpush1.msra.mxu0 %v668
    %1722 = vmatprep.subr.mxu0 %v687
    %1723 = vmatpush1.msra.mxu0 %v686
    %1724 = vmatprep.subr.mxu0 %v705
    %1725 = vmatpush1.msra.mxu0 %v704
    %1726 = vmatprep.subr.mxu0 %v723
    %1727 = vmatpush1.msra.mxu0 %v722
    %1728 = vmatprep.subr.mxu0 %v741
    %1729 = vmatpush1.msra.mxu0 %v740
    %1730 = vmatprep.subr.mxu0 %v759
    %1731 = vmatpush1.msra.mxu0 %v758
    %1732 = vmatprep.subr.mxu0 %v777
    %1733 = vmatpush1.msra.mxu0 %v776
    %1734 = vmatprep.subr.mxu0 %v795
    %1735 = vmatpush1.msra.mxu0 %v794
    %1736 = vmatprep.subr.mxu0 %v813
    %1737 = vmatpush1.msra.mxu0 %v812
    %1738 = vmatprep.subr.mxu0 %v831
    %1739 = vmatpush1.msra.mxu0 %v830
    %1740 = vmatprep.subr.mxu0 %v849
    %1741 = vmatpush1.msra.mxu0 %v848
    %1742 = vmatprep.mubr.f32.mxu0 %v285
    %1743 = vmatmul.mubr.f32.gmra.mrb[0].mxu0 %v284
    %v1744 = vpop.f32.mrb[0].mxu0
    %v1745 = vadd.f32 %v1457, %v1744
    %v1746 = vpop.f32.mrb[0].mxu0
    %v1747 = vadd.f32 %v1461, %v1746
    %1748 = vdwg.mxu0
    %1749 = vmatprep.subr.mxu0 %v867
    %1750 = vmatpush1.msra.mxu0 %v866
    %1751 = vmatprep.subr.mxu0 %v885
    %1752 = vmatpush1.msra.mxu0 %v884
    %1753 = vmatprep.subr.mxu0 %v903
    %1754 = vmatpush1.msra.mxu0 %v902
    %1755 = vmatprep.subr.mxu0 %v921
    %1756 = vmatpush1.msra.mxu0 %v920
    %1757 = vmatprep.subr.mxu0 %v939
    %1758 = vmatpush1.msra.mxu0 %v938
    %1759 = vmatprep.subr.mxu0 %v957
    %1760 = vmatpush1.msra.mxu0 %v956
    %1761 = vmatprep.subr.mxu0 %v975
    %1762 = vmatpush1.msra.mxu0 %v974
    %1763 = vmatprep.subr.mxu0 %v993
    %1764 = vmatpush1.msra.mxu0 %v992
    %1765 = vmatprep.subr.mxu0 %v1011
    %1766 = vmatpush1.msra.mxu0 %v1010
    %1767 = vmatprep.subr.mxu0 %v1029
    %1768 = vmatpush1.msra.mxu0 %v1028
    %1769 = vmatprep.subr.mxu0 %v1047
    %1770 = vmatpush1.msra.mxu0 %v1046
    %1771 = vmatprep.subr.mxu0 %v1065
    %1772 = vmatpush1.msra.mxu0 %v1064
    %1773 = vmatprep.subr.mxu0 %v1083
    %1774 = vmatpush1.msra.mxu0 %v1082
    %1775 = vmatprep.subr.mxu0 %v1101
    %1776 = vmatpush1.msra.mxu0 %v1100
    %1777 = vmatprep.subr.mxu0 %v1119
    %1778 = vmatpush1.msra.mxu0 %v1118
    %1779 = vmatprep.subr.mxu0 %v1137
    %1780 = vmatpush1.msra.mxu0 %v1136
    %1781 = vmatprep.subr.mxu0 %v1155
    %1782 = vmatpush1.msra.mxu0 %v1154
    %1783 = vmatprep.subr.mxu0 %v1173
    %1784 = vmatpush1.msra.mxu0 %v1172
    %1785 = vmatprep.subr.mxu0 %v1191
    %1786 = vmatpush1.msra.mxu0 %v1190
    %1787 = vmatprep.subr.mxu0 %v1209
    %1788 = vmatpush1.msra.mxu0 %v1208
    %1789 = vmatprep.subr.mxu0 %v1227
    %1790 = vmatpush1.msra.mxu0 %v1226
    %1791 = vmatprep.subr.mxu0 %v1245
    %1792 = vmatpush1.msra.mxu0 %v1244
    %1793 = vmatprep.subr.mxu0 %v1263
    %1794 = vmatpush1.msra.mxu0 %v1262
    %1795 = vmatprep.subr.mxu0 %v1281
    %1796 = vmatpush1.msra.mxu0 %v1280
    %1797 = vmatprep.subr.mxu0 %v1299
    %1798 = vmatpush1.msra.mxu0 %v1298
    %1799 = vmatprep.subr.mxu0 %v1317
    %1800 = vmatpush1.msra.mxu0 %v1316
    %1801 = vmatprep.subr.mxu0 %v1335
    %1802 = vmatpush1.msra.mxu0 %v1334
    %1803 = vmatprep.subr.mxu0 %v1353
    %1804 = vmatpush1.msra.mxu0 %v1352
    %1805 = vmatprep.subr.mxu0 %v1371
    %1806 = vmatpush1.msra.mxu0 %v1370
    %1807 = vmatprep.subr.mxu0 %v1389
    %1808 = vmatpush1.msra.mxu0 %v1388
    %1809 = vmatprep.subr.mxu0 %v1407
    %1810 = vmatpush1.msra.mxu0 %v1406
    %1811 = vmatprep.subr.mxu0 %v1425
    %1812 = vmatpush1.msra.mxu0 %v1424
    %1813 = vmatprep.mubr.f32.mxu0 %v287
    %1814 = vmatmul.mubr.f32.gmra.mrb[0].mxu0 %v286
    %v1815 = vpop.f32.mrb[0].mxu0
    %v1816 = vadd.f32 %v1745, %v1815
    %v1817 = vpop.f32.mrb[0].mxu0
    %v1818 = vadd.f32 %v1747, %v1817
    %1819 = vdwg.mxu0
    %1820 = vmatprep.subr.mxu0 %v293
    %1821 = vmatpush1.msra.mxu0 %v292
    %1822 = vmatprep.subr.mxu0 %v311
    %1823 = vmatpush1.msra.mxu0 %v310
    %1824 = vmatprep.subr.mxu0 %v329
    %1825 = vmatpush1.msra.mxu0 %v328
    %1826 = vmatprep.subr.mxu0 %v347
    %1827 = vmatpush1.msra.mxu0 %v346
    %1828 = vmatprep.subr.mxu0 %v365
    %1829 = vmatpush1.msra.mxu0 %v364
    %1830 = vmatprep.subr.mxu0 %v383
    %1831 = vmatpush1.msra.mxu0 %v382
    %1832 = vmatprep.subr.mxu0 %v401
    %1833 = vmatpush1.msra.mxu0 %v400
    %1834 = vmatprep.subr.mxu0 %v419
    %1835 = vmatpush1.msra.mxu0 %v418
    %1836 = vmatprep.subr.mxu0 %v437
    %1837 = vmatpush1.msra.mxu0 %v436
    %1838 = vmatprep.subr.mxu0 %v455
    %1839 = vmatpush1.msra.mxu0 %v454
    %1840 = vmatprep.subr.mxu0 %v473
    %1841 = vmatpush1.msra.mxu0 %v472
    %1842 = vmatprep.subr.mxu0 %v491
    %1843 = vmatpush1.msra.mxu0 %v490
    %1844 = vmatprep.subr.mxu0 %v509
    %1845 = vmatpush1.msra.mxu0 %v508
    %1846 = vmatprep.subr.mxu0 %v527
    %1847 = vmatpush1.msra.mxu0 %v526
    %1848 = vmatprep.subr.mxu0 %v545
    %1849 = vmatpush1.msra.mxu0 %v544
    %1850 = vmatprep.subr.mxu0 %v563
    %1851 = vmatpush1.msra.mxu0 %v562
    %1852 = vmatprep.subr.mxu0 %v581
    %1853 = vmatpush1.msra.mxu0 %v580
    %1854 = vmatprep.subr.mxu0 %v599
    %1855 = vmatpush1.msra.mxu0 %v598
    %1856 = vmatprep.subr.mxu0 %v617
    %1857 = vmatpush1.msra.mxu0 %v616
    %1858 = vmatprep.subr.mxu0 %v635
    %1859 = vmatpush1.msra.mxu0 %v634
    %1860 = vmatprep.subr.mxu0 %v653
    %1861 = vmatpush1.msra.mxu0 %v652
    %1862 = vmatprep.subr.mxu0 %v671
    %1863 = vmatpush1.msra.mxu0 %v670
    %1864 = vmatprep.subr.mxu0 %v689
    %1865 = vmatpush1.msra.mxu0 %v688
    %1866 = vmatprep.subr.mxu0 %v707
    %1867 = vmatpush1.msra.mxu0 %v706
    %1868 = vmatprep.subr.mxu0 %v725
    %1869 = vmatpush1.msra.mxu0 %v724
    %1870 = vmatprep.subr.mxu0 %v743
    %1871 = vmatpush1.msra.mxu0 %v742
    %1872 = vmatprep.subr.mxu0 %v761
    %1873 = vmatpush1.msra.mxu0 %v760
    %1874 = vmatprep.subr.mxu0 %v779
    %1875 = vmatpush1.msra.mxu0 %v778
    %1876 = vmatprep.subr.mxu0 %v797
    %1877 = vmatpush1.msra.mxu0 %v796
    %1878 = vmatprep.subr.mxu0 %v815
    %1879 = vmatpush1.msra.mxu0 %v814
    %1880 = vmatprep.subr.mxu0 %v833
    %1881 = vmatpush1.msra.mxu0 %v832
    %1882 = vmatprep.subr.mxu0 %v851
    %1883 = vmatpush1.msra.mxu0 %v850
    %1884 = vmatprep.mubr.f32.mxu0 %v285
    %1885 = vmatmul.mubr.f32.gmra.mrb[0].mxu0 %v284
    %v1886 = vpop.f32.mrb[0].mxu0
    %v1887 = vadd.f32 %v1465, %v1886
    %v1888 = vpop.f32.mrb[0].mxu0
    %v1889 = vadd.f32 %v1469, %v1888
    %1890 = vdwg.mxu0
    %1891 = vmatprep.subr.mxu0 %v869
    %1892 = vmatpush1.msra.mxu0 %v868
    %1893 = vmatprep.subr.mxu0 %v887
    %1894 = vmatpush1.msra.mxu0 %v886
    %1895 = vmatprep.subr.mxu0 %v905
    %1896 = vmatpush1.msra.mxu0 %v904
    %1897 = vmatprep.subr.mxu0 %v923
    %1898 = vmatpush1.msra.mxu0 %v922
    %1899 = vmatprep.subr.mxu0 %v941
    %1900 = vmatpush1.msra.mxu0 %v940
    %1901 = vmatprep.subr.mxu0 %v959
    %1902 = vmatpush1.msra.mxu0 %v958
    %1903 = vmatprep.subr.mxu0 %v977
    %1904 = vmatpush1.msra.mxu0 %v976
    %1905 = vmatprep.subr.mxu0 %v995
    %1906 = vmatpush1.msra.mxu0 %v994
    %1907 = vmatprep.subr.mxu0 %v1013
    %1908 = vmatpush1.msra.mxu0 %v1012
    %1909 = vmatprep.subr.mxu0 %v1031
    %1910 = vmatpush1.msra.mxu0 %v1030
    %1911 = vmatprep.subr.mxu0 %v1049
    %1912 = vmatpush1.msra.mxu0 %v1048
    %1913 = vmatprep.subr.mxu0 %v1067
    %1914 = vmatpush1.msra.mxu0 %v1066
    %1915 = vmatprep.subr.mxu0 %v1085
    %1916 = vmatpush1.msra.mxu0 %v1084
    %1917 = vmatprep.subr.mxu0 %v1103
    %1918 = vmatpush1.msra.mxu0 %v1102
    %1919 = vmatprep.subr.mxu0 %v1121
    %1920 = vmatpush1.msra.mxu0 %v1120
    %1921 = vmatprep.subr.mxu0 %v1139
    %1922 = vmatpush1.msra.mxu0 %v1138
    %1923 = vmatprep.subr.mxu0 %v1157
    %1924 = vmatpush1.msra.mxu0 %v1156
    %1925 = vmatprep.subr.mxu0 %v1175
    %1926 = vmatpush1.msra.mxu0 %v1174
    %1927 = vmatprep.subr.mxu0 %v1193
    %1928 = vmatpush1.msra.mxu0 %v1192
    %1929 = vmatprep.subr.mxu0 %v1211
    %1930 = vmatpush1.msra.mxu0 %v1210
    %1931 = vmatprep.subr.mxu0 %v1229
    %1932 = vmatpush1.msra.mxu0 %v1228
    %1933 = vmatprep.subr.mxu0 %v1247
    %1934 = vmatpush1.msra.mxu0 %v1246
    %1935 = vmatprep.subr.mxu0 %v1265
    %1936 = vmatpush1.msra.mxu0 %v1264
    %1937 = vmatprep.subr.mxu0 %v1283
    %1938 = vmatpush1.msra.mxu0 %v1282
    %1939 = vmatprep.subr.mxu0 %v1301
    %1940 = vmatpush1.msra.mxu0 %v1300
    %1941 = vmatprep.subr.mxu0 %v1319
    %1942 = vmatpush1.msra.mxu0 %v1318
    %1943 = vmatprep.subr.mxu0 %v1337
    %1944 = vmatpush1.msra.mxu0 %v1336
    %1945 = vmatprep.subr.mxu0 %v1355
    %1946 = vmatpush1.msra.mxu0 %v1354
    %1947 = vmatprep.subr.mxu0 %v1373
    %1948 = vmatpush1.msra.mxu0 %v1372
    %1949 = vmatprep.subr.mxu0 %v1391
    %1950 = vmatpush1.msra.mxu0 %v1390
    %1951 = vmatprep.subr.mxu0 %v1409
    %1952 = vmatpush1.msra.mxu0 %v1408
    %1953 = vmatprep.subr.mxu0 %v1427
    %1954 = vmatpush1.msra.mxu0 %v1426
    %1955 = vmatprep.mubr.f32.mxu0 %v287
    %1956 = vmatmul.mubr.f32.gmra.mrb[0].mxu0 %v286
    %v1957 = vpop.f32.mrb[0].mxu0
    %v1958 = vadd.f32 %v1887, %v1957
    %v1959 = vpop.f32.mrb[0].mxu0
    %v1960 = vadd.f32 %v1889, %v1959
    %1961 = vdwg.mxu0
    %1962 = vmatprep.subr.mxu0 %v295
    %1963 = vmatpush1.msra.mxu0 %v294
    %1964 = vmatprep.subr.mxu0 %v313
    %1965 = vmatpush1.msra.mxu0 %v312
    %1966 = vmatprep.subr.mxu0 %v331
    %1967 = vmatpush1.msra.mxu0 %v330
    %1968 = vmatprep.subr.mxu0 %v349
    %1969 = vmatpush1.msra.mxu0 %v348
    %1970 = vmatprep.subr.mxu0 %v367
    %1971 = vmatpush1.msra.mxu0 %v366
    %1972 = vmatprep.subr.mxu0 %v385
    %1973 = vmatpush1.msra.mxu0 %v384
    %1974 = vmatprep.subr.mxu0 %v403
    %1975 = vmatpush1.msra.mxu0 %v402
    %1976 = vmatprep.subr.mxu0 %v421
    %1977 = vmatpush1.msra.mxu0 %v420
    %1978 = vmatprep.subr.mxu0 %v439
    %1979 = vmatpush1.msra.mxu0 %v438
    %1980 = vmatprep.subr.mxu0 %v457
    %1981 = vmatpush1.msra.mxu0 %v456
    %1982 = vmatprep.subr.mxu0 %v475
    %1983 = vmatpush1.msra.mxu0 %v474
    %1984 = vmatprep.subr.mxu0 %v493
    %1985 = vmatpush1.msra.mxu0 %v492
    %1986 = vmatprep.subr.mxu0 %v511
    %1987 = vmatpush1.msra.mxu0 %v510
    %1988 = vmatprep.subr.mxu0 %v529
    %1989 = vmatpush1.msra.mxu0 %v528
    %1990 = vmatprep.subr.mxu0 %v547
    %1991 = vmatpush1.msra.mxu0 %v546
    %1992 = vmatprep.subr.mxu0 %v565
    %1993 = vmatpush1.msra.mxu0 %v564
    %1994 = vmatprep.subr.mxu0 %v583
    %1995 = vmatpush1.msra.mxu0 %v582
    %1996 = vmatprep.subr.mxu0 %v601
    %1997 = vmatpush1.msra.mxu0 %v600
    %1998 = vmatprep.subr.mxu0 %v619
    %1999 = vmatpush1.msra.mxu0 %v618
    %2000 = vmatprep.subr.mxu0 %v637
    %2001 = vmatpush1.msra.mxu0 %v636
    %2002 = vmatprep.subr.mxu0 %v655
    %2003 = vmatpush1.msra.mxu0 %v654
    %2004 = vmatprep.subr.mxu0 %v673
    %2005 = vmatpush1.msra.mxu0 %v672
    %2006 = vmatprep.subr.mxu0 %v691
    %2007 = vmatpush1.msra.mxu0 %v690
    %2008 = vmatprep.subr.mxu0 %v709
    %2009 = vmatpush1.msra.mxu0 %v708
    %2010 = vmatprep.subr.mxu0 %v727
    %2011 = vmatpush1.msra.mxu0 %v726
    %2012 = vmatprep.subr.mxu0 %v745
    %2013 = vmatpush1.msra.mxu0 %v744
    %2014 = vmatprep.subr.mxu0 %v763
    %2015 = vmatpush1.msra.mxu0 %v762
    %2016 = vmatprep.subr.mxu0 %v781
    %2017 = vmatpush1.msra.mxu0 %v780
    %2018 = vmatprep.subr.mxu0 %v799
    %2019 = vmatpush1.msra.mxu0 %v798
    %2020 = vmatprep.subr.mxu0 %v817
    %2021 = vmatpush1.msra.mxu0 %v816
    %2022 = vmatprep.subr.mxu0 %v835
    %2023 = vmatpush1.msra.mxu0 %v834
    %2024 = vmatprep.subr.mxu0 %v853
    %2025 = vmatpush1.msra.mxu0 %v852
    %2026 = vmatprep.mubr.f32.mxu0 %v285
    %2027 = vmatmul.mubr.f32.gmra.mrb[0].mxu0 %v284
    %v2028 = vpop.f32.mrb[0].mxu0
    %v2029 = vadd.f32 %v1473, %v2028
    %v2030 = vpop.f32.mrb[0].mxu0
    %v2031 = vadd.f32 %v1477, %v2030
    %2032 = vdwg.mxu0
    %2033 = vmatprep.subr.mxu0 %v871
    %2034 = vmatpush1.msra.mxu0 %v870
    %2035 = vmatprep.subr.mxu0 %v889
    %2036 = vmatpush1.msra.mxu0 %v888
    %2037 = vmatprep.subr.mxu0 %v907
    %2038 = vmatpush1.msra.mxu0 %v906
    %2039 = vmatprep.subr.mxu0 %v925
    %2040 = vmatpush1.msra.mxu0 %v924
    %2041 = vmatprep.subr.mxu0 %v943
    %2042 = vmatpush1.msra.mxu0 %v942
    %2043 = vmatprep.subr.mxu0 %v961
    %2044 = vmatpush1.msra.mxu0 %v960
    %2045 = vmatprep.subr.mxu0 %v979
    %2046 = vmatpush1.msra.mxu0 %v978
    %2047 = vmatprep.subr.mxu0 %v997
    %2048 = vmatpush1.msra.mxu0 %v996
    %2049 = vmatprep.subr.mxu0 %v1015
    %2050 = vmatpush1.msra.mxu0 %v1014
    %2051 = vmatprep.subr.mxu0 %v1033
    %2052 = vmatpush1.msra.mxu0 %v1032
    %2053 = vmatprep.subr.mxu0 %v1051
    %2054 = vmatpush1.msra.mxu0 %v1050
    %2055 = vmatprep.subr.mxu0 %v1069
    %2056 = vmatpush1.msra.mxu0 %v1068
    %2057 = vmatprep.subr.mxu0 %v1087
    %2058 = vmatpush1.msra.mxu0 %v1086
    %2059 = vmatprep.subr.mxu0 %v1105
    %2060 = vmatpush1.msra.mxu0 %v1104
    %2061 = vmatprep.subr.mxu0 %v1123
    %2062 = vmatpush1.msra.mxu0 %v1122
    %2063 = vmatprep.subr.mxu0 %v1141
    %2064 = vmatpush1.msra.mxu0 %v1140
    %2065 = vmatprep.subr.mxu0 %v1159
    %2066 = vmatpush1.msra.mxu0 %v1158
    %2067 = vmatprep.subr.mxu0 %v1177
    %2068 = vmatpush1.msra.mxu0 %v1176
    %2069 = vmatprep.subr.mxu0 %v1195
    %2070 = vmatpush1.msra.mxu0 %v1194
    %2071 = vmatprep.subr.mxu0 %v1213
    %2072 = vmatpush1.msra.mxu0 %v1212
    %2073 = vmatprep.subr.mxu0 %v1231
    %2074 = vmatpush1.msra.mxu0 %v1230
    %2075 = vmatprep.subr.mxu0 %v1249
    %2076 = vmatpush1.msra.mxu0 %v1248
    %2077 = vmatprep.subr.mxu0 %v1267
    %2078 = vmatpush1.msra.mxu0 %v1266
    %2079 = vmatprep.subr.mxu0 %v1285
    %2080 = vmatpush1.msra.mxu0 %v1284
    %2081 = vmatprep.subr.mxu0 %v1303
    %2082 = vmatpush1.msra.mxu0 %v1302
    %2083 = vmatprep.subr.mxu0 %v1321
    %2084 = vmatpush1.msra.mxu0 %v1320
    %2085 = vmatprep.subr.mxu0 %v1339
    %2086 = vmatpush1.msra.mxu0 %v1338
    %2087 = vmatprep.subr.mxu0 %v1357
    %2088 = vmatpush1.msra.mxu0 %v1356
    %2089 = vmatprep.subr.mxu0 %v1375
    %2090 = vmatpush1.msra.mxu0 %v1374
    %2091 = vmatprep.subr.mxu0 %v1393
    %2092 = vmatpush1.msra.mxu0 %v1392
    %2093 = vmatprep.subr.mxu0 %v1411
    %2094 = vmatpush1.msra.mxu0 %v1410
    %2095 = vmatprep.subr.mxu0 %v1429
    %2096 = vmatpush1.msra.mxu0 %v1428
    %2097 = vmatprep.mubr.f32.mxu0 %v287
    %2098 = vmatmul.mubr.f32.gmra.mrb[0].mxu0 %v286
    %v2099 = vpop.f32.mrb[0].mxu0
    %v2100 = vadd.f32 %v2029, %v2099
    %v2101 = vpop.f32.mrb[0].mxu0
    %v2102 = vadd.f32 %v2031, %v2101
    %2103 = vdwg.mxu0
    %2104 = vmatprep.subr.mxu0 %v297
    %2105 = vmatpush1.msra.mxu0 %v296
    %2106 = vmatprep.subr.mxu0 %v315
    %2107 = vmatpush1.msra.mxu0 %v314
    %2108 = vmatprep.subr.mxu0 %v333
    %2109 = vmatpush1.msra.mxu0 %v332
    %2110 = vmatprep.subr.mxu0 %v351
    %2111 = vmatpush1.msra.mxu0 %v350
    %2112 = vmatprep.subr.mxu0 %v369
    %2113 = vmatpush1.msra.mxu0 %v368
    %2114 = vmatprep.subr.mxu0 %v387
    %2115 = vmatpush1.msra.mxu0 %v386
    %2116 = vmatprep.subr.mxu0 %v405
    %2117 = vmatpush1.msra.mxu0 %v404
    %2118 = vmatprep.subr.mxu0 %v423
    %2119 = vmatpush1.msra.mxu0 %v422
    %2120 = vmatprep.subr.mxu0 %v441
    %2121 = vmatpush1.msra.mxu0 %v440
    %2122 = vmatprep.subr.mxu0 %v459
    %2123 = vmatpush1.msra.mxu0 %v458
    %2124 = vmatprep.subr.mxu0 %v477
    %2125 = vmatpush1.msra.mxu0 %v476
    %2126 = vmatprep.subr.mxu0 %v495
    %2127 = vmatpush1.msra.mxu0 %v494
    %2128 = vmatprep.subr.mxu0 %v513
    %2129 = vmatpush1.msra.mxu0 %v512
    %2130 = vmatprep.subr.mxu0 %v531
    %2131 = vmatpush1.msra.mxu0 %v530
    %2132 = vmatprep.subr.mxu0 %v549
    %2133 = vmatpush1.msra.mxu0 %v548
    %2134 = vmatprep.subr.mxu0 %v567
    %2135 = vmatpush1.msra.mxu0 %v566
    %2136 = vmatprep.subr.mxu0 %v585
    %2137 = vmatpush1.msra.mxu0 %v584
    %2138 = vmatprep.subr.mxu0 %v603
    %2139 = vmatpush1.msra.mxu0 %v602
    %2140 = vmatprep.subr.mxu0 %v621
    %2141 = vmatpush1.msra.mxu0 %v620
    %2142 = vmatprep.subr.mxu0 %v639
    %2143 = vmatpush1.msra.mxu0 %v638
    %2144 = vmatprep.subr.mxu0 %v657
    %2145 = vmatpush1.msra.mxu0 %v656
    %2146 = vmatprep.subr.mxu0 %v675
    %2147 = vmatpush1.msra.mxu0 %v674
    %2148 = vmatprep.subr.mxu0 %v693
    %2149 = vmatpush1.msra.mxu0 %v692
    %2150 = vmatprep.subr.mxu0 %v711
    %2151 = vmatpush1.msra.mxu0 %v710
    %2152 = vmatprep.subr.mxu0 %v729
    %2153 = vmatpush1.msra.mxu0 %v728
    %2154 = vmatprep.subr.mxu0 %v747
    %2155 = vmatpush1.msra.mxu0 %v746
    %2156 = vmatprep.subr.mxu0 %v765
    %2157 = vmatpush1.msra.mxu0 %v764
    %2158 = vmatprep.subr.mxu0 %v783
    %2159 = vmatpush1.msra.mxu0 %v782
    %2160 = vmatprep.subr.mxu0 %v801
    %2161 = vmatpush1.msra.mxu0 %v800
    %2162 = vmatprep.subr.mxu0 %v819
    %2163 = vmatpush1.msra.mxu0 %v818
    %2164 = vmatprep.subr.mxu0 %v837
    %2165 = vmatpush1.msra.mxu0 %v836
    %2166 = vmatprep.subr.mxu0 %v855
    %2167 = vmatpush1.msra.mxu0 %v854
    %2168 = vmatprep.mubr.f32.mxu0 %v285
    %2169 = vmatmul.mubr.f32.gmra.mrb[0].mxu0 %v284
    %v2170 = vpop.f32.mrb[0].mxu0
    %v2171 = vadd.f32 %v1481, %v2170
    %v2172 = vpop.f32.mrb[0].mxu0
    %v2173 = vadd.f32 %v1485, %v2172
    %2174 = vdwg.mxu0
    %2175 = vmatprep.subr.mxu0 %v873
    %2176 = vmatpush1.msra.mxu0 %v872
    %2177 = vmatprep.subr.mxu0 %v891
    %2178 = vmatpush1.msra.mxu0 %v890
    %2179 = vmatprep.subr.mxu0 %v909
    %2180 = vmatpush1.msra.mxu0 %v908
    %2181 = vmatprep.subr.mxu0 %v927
    %2182 = vmatpush1.msra.mxu0 %v926
    %2183 = vmatprep.subr.mxu0 %v945
    %2184 = vmatpush1.msra.mxu0 %v944
    %2185 = vmatprep.subr.mxu0 %v963
    %2186 = vmatpush1.msra.mxu0 %v962
    %2187 = vmatprep.subr.mxu0 %v981
    %2188 = vmatpush1.msra.mxu0 %v980
    %2189 = vmatprep.subr.mxu0 %v999
    %2190 = vmatpush1.msra.mxu0 %v998
    %2191 = vmatprep.subr.mxu0 %v1017
    %2192 = vmatpush1.msra.mxu0 %v1016
    %2193 = vmatprep.subr.mxu0 %v1035
    %2194 = vmatpush1.msra.mxu0 %v1034
    %2195 = vmatprep.subr.mxu0 %v1053
    %2196 = vmatpush1.msra.mxu0 %v1052
    %2197 = vmatprep.subr.mxu0 %v1071
    %2198 = vmatpush1.msra.mxu0 %v1070
    %2199 = vmatprep.subr.mxu0 %v1089
    %2200 = vmatpush1.msra.mxu0 %v1088
    %2201 = vmatprep.subr.mxu0 %v1107
    %2202 = vmatpush1.msra.mxu0 %v1106
    %2203 = vmatprep.subr.mxu0 %v1125
    %2204 = vmatpush1.msra.mxu0 %v1124
    %2205 = vmatprep.subr.mxu0 %v1143
    %2206 = vmatpush1.msra.mxu0 %v1142
    %2207 = vmatprep.subr.mxu0 %v1161
    %2208 = vmatpush1.msra.mxu0 %v1160
    %2209 = vmatprep.subr.mxu0 %v1179
    %2210 = vmatpush1.msra.mxu0 %v1178
    %2211 = vmatprep.subr.mxu0 %v1197
    %2212 = vmatpush1.msra.mxu0 %v1196
    %2213 = vmatprep.subr.mxu0 %v1215
    %2214 = vmatpush1.msra.mxu0 %v1214
    %2215 = vmatprep.subr.mxu0 %v1233
    %2216 = vmatpush1.msra.mxu0 %v1232
    %2217 = vmatprep.subr.mxu0 %v1251
    %2218 = vmatpush1.msra.mxu0 %v1250
    %2219 = vmatprep.subr.mxu0 %v1269
    %2220 = vmatpush1.msra.mxu0 %v1268
    %2221 = vmatprep.subr.mxu0 %v1287
    %2222 = vmatpush1.msra.mxu0 %v1286
    %2223 = vmatprep.subr.mxu0 %v1305
    %2224 = vmatpush1.msra.mxu0 %v1304
    %2225 = vmatprep.subr.mxu0 %v1323
    %2226 = vmatpush1.msra.mxu0 %v1322
    %2227 = vmatprep.subr.mxu0 %v1341
    %2228 = vmatpush1.msra.mxu0 %v1340
    %2229 = vmatprep.subr.mxu0 %v1359
    %2230 = vmatpush1.msra.mxu0 %v1358
    %2231 = vmatprep.subr.mxu0 %v1377
    %2232 = vmatpush1.msra.mxu0 %v1376
    %2233 = vmatprep.subr.mxu0 %v1395
    %2234 = vmatpush1.msra.mxu0 %v1394
    %2235 = vmatprep.subr.mxu0 %v1413
    %2236 = vmatpush1.msra.mxu0 %v1412
    %2237 = vmatprep.subr.mxu0 %v1431
    %2238 = vmatpush1.msra.mxu0 %v1430
    %2239 = vmatprep.mubr.f32.mxu0 %v287
    %2240 = vmatmul.mubr.f32.gmra.mrb[0].mxu0 %v286
    %v2241 = vpop.f32.mrb[0].mxu0
    %v2242 = vadd.f32 %v2171, %v2241
    %v2243 = vpop.f32.mrb[0].mxu0
    %v2244 = vadd.f32 %v2173, %v2243
    %2245 = vdwg.mxu0
    %2246 = vmatprep.subr.mxu0 %v299
    %2247 = vmatpush1.msra.mxu0 %v298
    %2248 = vmatprep.subr.mxu0 %v317
    %2249 = vmatpush1.msra.mxu0 %v316
    %2250 = vmatprep.subr.mxu0 %v335
    %2251 = vmatpush1.msra.mxu0 %v334
    %2252 = vmatprep.subr.mxu0 %v353
    %2253 = vmatpush1.msra.mxu0 %v352
    %2254 = vmatprep.subr.mxu0 %v371
    %2255 = vmatpush1.msra.mxu0 %v370
    %2256 = vmatprep.subr.mxu0 %v389
    %2257 = vmatpush1.msra.mxu0 %v388
    %2258 = vmatprep.subr.mxu0 %v407
    %2259 = vmatpush1.msra.mxu0 %v406
    %2260 = vmatprep.subr.mxu0 %v425
    %2261 = vmatpush1.msra.mxu0 %v424
    %2262 = vmatprep.subr.mxu0 %v443
    %2263 = vmatpush1.msra.mxu0 %v442
    %2264 = vmatprep.subr.mxu0 %v461
    %2265 = vmatpush1.msra.mxu0 %v460
    %2266 = vmatprep.subr.mxu0 %v479
    %2267 = vmatpush1.msra.mxu0 %v478
    %2268 = vmatprep.subr.mxu0 %v497
    %2269 = vmatpush1.msra.mxu0 %v496
    %2270 = vmatprep.subr.mxu0 %v515
    %2271 = vmatpush1.msra.mxu0 %v514
    %2272 = vmatprep.subr.mxu0 %v533
    %2273 = vmatpush1.msra.mxu0 %v532
    %2274 = vmatprep.subr.mxu0 %v551
    %2275 = vmatpush1.msra.mxu0 %v550
    %2276 = vmatprep.subr.mxu0 %v569
    %2277 = vmatpush1.msra.mxu0 %v568
    %2278 = vmatprep.subr.mxu0 %v587
    %2279 = vmatpush1.msra.mxu0 %v586
    %2280 = vmatprep.subr.mxu0 %v605
    %2281 = vmatpush1.msra.mxu0 %v604
    %2282 = vmatprep.subr.mxu0 %v623
    %2283 = vmatpush1.msra.mxu0 %v622
    %2284 = vmatprep.subr.mxu0 %v641
    %2285 = vmatpush1.msra.mxu0 %v640
    %2286 = vmatprep.subr.mxu0 %v659
    %2287 = vmatpush1.msra.mxu0 %v658
    %2288 = vmatprep.subr.mxu0 %v677
    %2289 = vmatpush1.msra.mxu0 %v676
    %2290 = vmatprep.subr.mxu0 %v695
    %2291 = vmatpush1.msra.mxu0 %v694
    %2292 = vmatprep.subr.mxu0 %v713
    %2293 = vmatpush1.msra.mxu0 %v712
    %2294 = vmatprep.subr.mxu0 %v731
    %2295 = vmatpush1.msra.mxu0 %v730
    %2296 = vmatprep.subr.mxu0 %v749
    %2297 = vmatpush1.msra.mxu0 %v748
    %2298 = vmatprep.subr.mxu0 %v767
    %2299 = vmatpush1.msra.mxu0 %v766
    %2300 = vmatprep.subr.mxu0 %v785
    %2301 = vmatpush1.msra.mxu0 %v784
    %2302 = vmatprep.subr.mxu0 %v803
    %2303 = vmatpush1.msra.mxu0 %v802
    %2304 = vmatprep.subr.mxu0 %v821
    %2305 = vmatpush1.msra.mxu0 %v820
    %2306 = vmatprep.subr.mxu0 %v839
    %2307 = vmatpush1.msra.mxu0 %v838
    %2308 = vmatprep.subr.mxu0 %v857
    %2309 = vmatpush1.msra.mxu0 %v856
    %2310 = vmatprep.mubr.f32.mxu0 %v285
    %2311 = vmatmul.mubr.f32.gmra.mrb[0].mxu0 %v284
    %v2312 = vpop.f32.mrb[0].mxu0
    %v2313 = vadd.f32 %v1489, %v2312
    %v2314 = vpop.f32.mrb[0].mxu0
    %v2315 = vadd.f32 %v1493, %v2314
    %2316 = vdwg.mxu0
    %2317 = vmatprep.subr.mxu0 %v875
    %2318 = vmatpush1.msra.mxu0 %v874
    %2319 = vmatprep.subr.mxu0 %v893
    %2320 = vmatpush1.msra.mxu0 %v892
    %2321 = vmatprep.subr.mxu0 %v911
    %2322 = vmatpush1.msra.mxu0 %v910
    %2323 = vmatprep.subr.mxu0 %v929
    %2324 = vmatpush1.msra.mxu0 %v928
    %2325 = vmatprep.subr.mxu0 %v947
    %2326 = vmatpush1.msra.mxu0 %v946
    %2327 = vmatprep.subr.mxu0 %v965
    %2328 = vmatpush1.msra.mxu0 %v964
    %2329 = vmatprep.subr.mxu0 %v983
    %2330 = vmatpush1.msra.mxu0 %v982
    %2331 = vmatprep.subr.mxu0 %v1001
    %2332 = vmatpush1.msra.mxu0 %v1000
    %2333 = vmatprep.subr.mxu0 %v1019
    %2334 = vmatpush1.msra.mxu0 %v1018
    %2335 = vmatprep.subr.mxu0 %v1037
    %2336 = vmatpush1.msra.mxu0 %v1036
    %2337 = vmatprep.subr.mxu0 %v1055
    %2338 = vmatpush1.msra.mxu0 %v1054
    %2339 = vmatprep.subr.mxu0 %v1073
    %2340 = vmatpush1.msra.mxu0 %v1072
    %2341 = vmatprep.subr.mxu0 %v1091
    %2342 = vmatpush1.msra.mxu0 %v1090
    %2343 = vmatprep.subr.mxu0 %v1109
    %2344 = vmatpush1.msra.mxu0 %v1108
    %2345 = vmatprep.subr.mxu0 %v1127
    %2346 = vmatpush1.msra.mxu0 %v1126
    %2347 = vmatprep.subr.mxu0 %v1145
    %2348 = vmatpush1.msra.mxu0 %v1144
    %2349 = vmatprep.subr.mxu0 %v1163
    %2350 = vmatpush1.msra.mxu0 %v1162
    %2351 = vmatprep.subr.mxu0 %v1181
    %2352 = vmatpush1.msra.mxu0 %v1180
    %2353 = vmatprep.subr.mxu0 %v1199
    %2354 = vmatpush1.msra.mxu0 %v1198
    %2355 = vmatprep.subr.mxu0 %v1217
    %2356 = vmatpush1.msra.mxu0 %v1216
    %2357 = vmatprep.subr.mxu0 %v1235
    %2358 = vmatpush1.msra.mxu0 %v1234
    %2359 = vmatprep.subr.mxu0 %v1253
    %2360 = vmatpush1.msra.mxu0 %v1252
    %2361 = vmatprep.subr.mxu0 %v1271
    %2362 = vmatpush1.msra.mxu0 %v1270
    %2363 = vmatprep.subr.mxu0 %v1289
    %2364 = vmatpush1.msra.mxu0 %v1288
    %2365 = vmatprep.subr.mxu0 %v1307
    %2366 = vmatpush1.msra.mxu0 %v1306
    %2367 = vmatprep.subr.mxu0 %v1325
    %2368 = vmatpush1.msra.mxu0 %v1324
    %2369 = vmatprep.subr.mxu0 %v1343
    %2370 = vmatpush1.msra.mxu0 %v1342
    %2371 = vmatprep.subr.mxu0 %v1361
    %2372 = vmatpush1.msra.mxu0 %v1360
    %2373 = vmatprep.subr.mxu0 %v1379
    %2374 = vmatpush1.msra.mxu0 %v1378
    %2375 = vmatprep.subr.mxu0 %v1397
    %2376 = vmatpush1.msra.mxu0 %v1396
    %2377 = vmatprep.subr.mxu0 %v1415
    %2378 = vmatpush1.msra.mxu0 %v1414
    %2379 = vmatprep.subr.mxu0 %v1433
    %2380 = vmatpush1.msra.mxu0 %v1432
    %2381 = vmatprep.mubr.f32.mxu0 %v287
    %2382 = vmatmul.mubr.f32.gmra.mrb[0].mxu0 %v286
    %v2383 = vpop.f32.mrb[0].mxu0
    %v2384 = vadd.f32 %v2313, %v2383
    %v2385 = vpop.f32.mrb[0].mxu0
    %v2386 = vadd.f32 %v2315, %v2385
    %2387 = vdwg.mxu0
    %2388 = vmatprep.subr.mxu0 %v301
    %2389 = vmatpush1.msra.mxu0 %v300
    %2390 = vmatprep.subr.mxu0 %v319
    %2391 = vmatpush1.msra.mxu0 %v318
    %2392 = vmatprep.subr.mxu0 %v337
    %2393 = vmatpush1.msra.mxu0 %v336
    %2394 = vmatprep.subr.mxu0 %v355
    %2395 = vmatpush1.msra.mxu0 %v354
    %2396 = vmatprep.subr.mxu0 %v373
    %2397 = vmatpush1.msra.mxu0 %v372
    %2398 = vmatprep.subr.mxu0 %v391
    %2399 = vmatpush1.msra.mxu0 %v390
    %2400 = vmatprep.subr.mxu0 %v409
    %2401 = vmatpush1.msra.mxu0 %v408
    %2402 = vmatprep.subr.mxu0 %v427
    %2403 = vmatpush1.msra.mxu0 %v426
    %2404 = vmatprep.subr.mxu0 %v445
    %2405 = vmatpush1.msra.mxu0 %v444
    %2406 = vmatprep.subr.mxu0 %v463
    %2407 = vmatpush1.msra.mxu0 %v462
    %2408 = vmatprep.subr.mxu0 %v481
    %2409 = vmatpush1.msra.mxu0 %v480
    %2410 = vmatprep.subr.mxu0 %v499
    %2411 = vmatpush1.msra.mxu0 %v498
    %2412 = vmatprep.subr.mxu0 %v517
    %2413 = vmatpush1.msra.mxu0 %v516
    %2414 = vmatprep.subr.mxu0 %v535
    %2415 = vmatpush1.msra.mxu0 %v534
    %2416 = vmatprep.subr.mxu0 %v553
    %2417 = vmatpush1.msra.mxu0 %v552
    %2418 = vmatprep.subr.mxu0 %v571
    %2419 = vmatpush1.msra.mxu0 %v570
    %2420 = vmatprep.subr.mxu0 %v589
    %2421 = vmatpush1.msra.mxu0 %v588
    %2422 = vmatprep.subr.mxu0 %v607
    %2423 = vmatpush1.msra.mxu0 %v606
    %2424 = vmatprep.subr.mxu0 %v625
    %2425 = vmatpush1.msra.mxu0 %v624
    %2426 = vmatprep.subr.mxu0 %v643
    %2427 = vmatpush1.msra.mxu0 %v642
    %2428 = vmatprep.subr.mxu0 %v661
    %2429 = vmatpush1.msra.mxu0 %v660
    %2430 = vmatprep.subr.mxu0 %v679
    %2431 = vmatpush1.msra.mxu0 %v678
    %2432 = vmatprep.subr.mxu0 %v697
    %2433 = vmatpush1.msra.mxu0 %v696
    %2434 = vmatprep.subr.mxu0 %v715
    %2435 = vmatpush1.msra.mxu0 %v714
    %2436 = vmatprep.subr.mxu0 %v733
    %2437 = vmatpush1.msra.mxu0 %v732
    %2438 = vmatprep.subr.mxu0 %v751
    %2439 = vmatpush1.msra.mxu0 %v750
    %2440 = vmatprep.subr.mxu0 %v769
    %2441 = vmatpush1.msra.mxu0 %v768
    %2442 = vmatprep.subr.mxu0 %v787
    %2443 = vmatpush1.msra.mxu0 %v786
    %2444 = vmatprep.subr.mxu0 %v805
    %2445 = vmatpush1.msra.mxu0 %v804
    %2446 = vmatprep.subr.mxu0 %v823
    %2447 = vmatpush1.msra.mxu0 %v822
    %2448 = vmatprep.subr.mxu0 %v841
    %2449 = vmatpush1.msra.mxu0 %v840
    %2450 = vmatprep.subr.mxu0 %v859
    %2451 = vmatpush1.msra.mxu0 %v858
    %2452 = vmatprep.mubr.f32.mxu0 %v285
    %2453 = vmatmul.mubr.f32.gmra.mrb[0].mxu0 %v284
    %v2454 = vpop.f32.mrb[0].mxu0
    %v2455 = vadd.f32 %v1497, %v2454
    %v2456 = vpop.f32.mrb[0].mxu0
    %v2457 = vadd.f32 %v1501, %v2456
    %2458 = vdwg.mxu0
    %2459 = vmatprep.subr.mxu0 %v877
    %2460 = vmatpush1.msra.mxu0 %v876
    %2461 = vmatprep.subr.mxu0 %v895
    %2462 = vmatpush1.msra.mxu0 %v894
    %2463 = vmatprep.subr.mxu0 %v913
    %2464 = vmatpush1.msra.mxu0 %v912
    %2465 = vmatprep.subr.mxu0 %v931
    %2466 = vmatpush1.msra.mxu0 %v930
    %2467 = vmatprep.subr.mxu0 %v949
    %2468 = vmatpush1.msra.mxu0 %v948
    %2469 = vmatprep.subr.mxu0 %v967
    %2470 = vmatpush1.msra.mxu0 %v966
    %2471 = vmatprep.subr.mxu0 %v985
    %2472 = vmatpush1.msra.mxu0 %v984
    %2473 = vmatprep.subr.mxu0 %v1003
    %2474 = vmatpush1.msra.mxu0 %v1002
    %2475 = vmatprep.subr.mxu0 %v1021
    %2476 = vmatpush1.msra.mxu0 %v1020
    %2477 = vmatprep.subr.mxu0 %v1039
    %2478 = vmatpush1.msra.mxu0 %v1038
    %2479 = vmatprep.subr.mxu0 %v1057
    %2480 = vmatpush1.msra.mxu0 %v1056
    %2481 = vmatprep.subr.mxu0 %v1075
    %2482 = vmatpush1.msra.mxu0 %v1074
    %2483 = vmatprep.subr.mxu0 %v1093
    %2484 = vmatpush1.msra.mxu0 %v1092
    %2485 = vmatprep.subr.mxu0 %v1111
    %2486 = vmatpush1.msra.mxu0 %v1110
    %2487 = vmatprep.subr.mxu0 %v1129
    %2488 = vmatpush1.msra.mxu0 %v1128
    %2489 = vmatprep.subr.mxu0 %v1147
    %2490 = vmatpush1.msra.mxu0 %v1146
    %2491 = vmatprep.subr.mxu0 %v1165
    %2492 = vmatpush1.msra.mxu0 %v1164
    %2493 = vmatprep.subr.mxu0 %v1183
    %2494 = vmatpush1.msra.mxu0 %v1182
    %2495 = vmatprep.subr.mxu0 %v1201
    %2496 = vmatpush1.msra.mxu0 %v1200
    %2497 = vmatprep.subr.mxu0 %v1219
    %2498 = vmatpush1.msra.mxu0 %v1218
    %2499 = vmatprep.subr.mxu0 %v1237
    %2500 = vmatpush1.msra.mxu0 %v1236
    %2501 = vmatprep.subr.mxu0 %v1255
    %2502 = vmatpush1.msra.mxu0 %v1254
    %2503 = vmatprep.subr.mxu0 %v1273
    %2504 = vmatpush1.msra.mxu0 %v1272
    %2505 = vmatprep.subr.mxu0 %v1291
    %2506 = vmatpush1.msra.mxu0 %v1290
    %2507 = vmatprep.subr.mxu0 %v1309
    %2508 = vmatpush1.msra.mxu0 %v1308
    %2509 = vmatprep.subr.mxu0 %v1327
    %2510 = vmatpush1.msra.mxu0 %v1326
    %2511 = vmatprep.subr.mxu0 %v1345
    %2512 = vmatpush1.msra.mxu0 %v1344
    %2513 = vmatprep.subr.mxu0 %v1363
    %2514 = vmatpush1.msra.mxu0 %v1362
    %2515 = vmatprep.subr.mxu0 %v1381
    %2516 = vmatpush1.msra.mxu0 %v1380
    %2517 = vmatprep.subr.mxu0 %v1399
    %2518 = vmatpush1.msra.mxu0 %v1398
    %2519 = vmatprep.subr.mxu0 %v1417
    %2520 = vmatpush1.msra.mxu0 %v1416
    %2521 = vmatprep.subr.mxu0 %v1435
    %2522 = vmatpush1.msra.mxu0 %v1434
    %2523 = vmatprep.mubr.f32.mxu0 %v287
    %2524 = vmatmul.mubr.f32.gmra.mrb[0].mxu0 %v286
    %v2525 = vpop.f32.mrb[0].mxu0
    %v2526 = vadd.f32 %v2455, %v2525
    %v2527 = vpop.f32.mrb[0].mxu0
    %v2528 = vadd.f32 %v2457, %v2527
    %2529 = vdwg.mxu0
    %2530 = vmatprep.subr.mxu0 %v303
    %2531 = vmatpush1.msra.mxu0 %v302
    %2532 = vmatprep.subr.mxu0 %v321
    %2533 = vmatpush1.msra.mxu0 %v320
    %2534 = vmatprep.subr.mxu0 %v339
    %2535 = vmatpush1.msra.mxu0 %v338
    %2536 = vmatprep.subr.mxu0 %v357
    %2537 = vmatpush1.msra.mxu0 %v356
    %2538 = vmatprep.subr.mxu0 %v375
    %2539 = vmatpush1.msra.mxu0 %v374
    %2540 = vmatprep.subr.mxu0 %v393
    %2541 = vmatpush1.msra.mxu0 %v392
    %2542 = vmatprep.subr.mxu0 %v411
    %2543 = vmatpush1.msra.mxu0 %v410
    %2544 = vmatprep.subr.mxu0 %v429
    %2545 = vmatpush1.msra.mxu0 %v428
    %2546 = vmatprep.subr.mxu0 %v447
    %2547 = vmatpush1.msra.mxu0 %v446
    %2548 = vmatprep.subr.mxu0 %v465
    %2549 = vmatpush1.msra.mxu0 %v464
    %2550 = vmatprep.subr.mxu0 %v483
    %2551 = vmatpush1.msra.mxu0 %v482
    %2552 = vmatprep.subr.mxu0 %v501
    %2553 = vmatpush1.msra.mxu0 %v500
    %2554 = vmatprep.subr.mxu0 %v519
    %2555 = vmatpush1.msra.mxu0 %v518
    %2556 = vmatprep.subr.mxu0 %v537
    %2557 = vmatpush1.msra.mxu0 %v536
    %2558 = vmatprep.subr.mxu0 %v555
    %2559 = vmatpush1.msra.mxu0 %v554
    %2560 = vmatprep.subr.mxu0 %v573
    %2561 = vmatpush1.msra.mxu0 %v572
    %2562 = vmatprep.subr.mxu0 %v591
    %2563 = vmatpush1.msra.mxu0 %v590
    %2564 = vmatprep.subr.mxu0 %v609
    %2565 = vmatpush1.msra.mxu0 %v608
    %2566 = vmatprep.subr.mxu0 %v627
    %2567 = vmatpush1.msra.mxu0 %v626
    %2568 = vmatprep.subr.mxu0 %v645
    %2569 = vmatpush1.msra.mxu0 %v644
    %2570 = vmatprep.subr.mxu0 %v663
    %2571 = vmatpush1.msra.mxu0 %v662
    %2572 = vmatprep.subr.mxu0 %v681
    %2573 = vmatpush1.msra.mxu0 %v680
    %2574 = vmatprep.subr.mxu0 %v699
    %2575 = vmatpush1.msra.mxu0 %v698
    %2576 = vmatprep.subr.mxu0 %v717
    %2577 = vmatpush1.msra.mxu0 %v716
    %2578 = vmatprep.subr.mxu0 %v735
    %2579 = vmatpush1.msra.mxu0 %v734
    %2580 = vmatprep.subr.mxu0 %v753
    %2581 = vmatpush1.msra.mxu0 %v752
    %2582 = vmatprep.subr.mxu0 %v771
    %2583 = vmatpush1.msra.mxu0 %v770
    %2584 = vmatprep.subr.mxu0 %v789
    %2585 = vmatpush1.msra.mxu0 %v788
    %2586 = vmatprep.subr.mxu0 %v807
    %2587 = vmatpush1.msra.mxu0 %v806
    %2588 = vmatprep.subr.mxu0 %v825
    %2589 = vmatpush1.msra.mxu0 %v824
    %2590 = vmatprep.subr.mxu0 %v843
    %2591 = vmatpush1.msra.mxu0 %v842
    %2592 = vmatprep.subr.mxu0 %v861
    %2593 = vmatpush1.msra.mxu0 %v860
    %2594 = vmatprep.mubr.f32.mxu0 %v285
    %2595 = vmatmul.mubr.f32.gmra.mrb[0].mxu0 %v284
    %v2596 = vpop.f32.mrb[0].mxu0
    %v2597 = vadd.f32 %v1505, %v2596
    %v2598 = vpop.f32.mrb[0].mxu0
    %v2599 = vadd.f32 %v1509, %v2598
    %2600 = vdwg.mxu0
    %2601 = vmatprep.subr.mxu0 %v879
    %2602 = vmatpush1.msra.mxu0 %v878
    %2603 = vmatprep.subr.mxu0 %v897
    %2604 = vmatpush1.msra.mxu0 %v896
    %2605 = vmatprep.subr.mxu0 %v915
    %2606 = vmatpush1.msra.mxu0 %v914
    %2607 = vmatprep.subr.mxu0 %v933
    %2608 = vmatpush1.msra.mxu0 %v932
    %2609 = vmatprep.subr.mxu0 %v951
    %2610 = vmatpush1.msra.mxu0 %v950
    %2611 = vmatprep.subr.mxu0 %v969
    %2612 = vmatpush1.msra.mxu0 %v968
    %2613 = vmatprep.subr.mxu0 %v987
    %2614 = vmatpush1.msra.mxu0 %v986
    %2615 = vmatprep.subr.mxu0 %v1005
    %2616 = vmatpush1.msra.mxu0 %v1004
    %2617 = vmatprep.subr.mxu0 %v1023
    %2618 = vmatpush1.msra.mxu0 %v1022
    %2619 = vmatprep.subr.mxu0 %v1041
    %2620 = vmatpush1.msra.mxu0 %v1040
    %2621 = vmatprep.subr.mxu0 %v1059
    %2622 = vmatpush1.msra.mxu0 %v1058
    %2623 = vmatprep.subr.mxu0 %v1077
    %2624 = vmatpush1.msra.mxu0 %v1076
    %2625 = vmatprep.subr.mxu0 %v1095
    %2626 = vmatpush1.msra.mxu0 %v1094
    %2627 = vmatprep.subr.mxu0 %v1113
    %2628 = vmatpush1.msra.mxu0 %v1112
    %2629 = vmatprep.subr.mxu0 %v1131
    %2630 = vmatpush1.msra.mxu0 %v1130
    %2631 = vmatprep.subr.mxu0 %v1149
    %2632 = vmatpush1.msra.mxu0 %v1148
    %2633 = vmatprep.subr.mxu0 %v1167
    %2634 = vmatpush1.msra.mxu0 %v1166
    %2635 = vmatprep.subr.mxu0 %v1185
    %2636 = vmatpush1.msra.mxu0 %v1184
    %2637 = vmatprep.subr.mxu0 %v1203
    %2638 = vmatpush1.msra.mxu0 %v1202
    %2639 = vmatprep.subr.mxu0 %v1221
    %2640 = vmatpush1.msra.mxu0 %v1220
    %2641 = vmatprep.subr.mxu0 %v1239
    %2642 = vmatpush1.msra.mxu0 %v1238
    %2643 = vmatprep.subr.mxu0 %v1257
    %2644 = vmatpush1.msra.mxu0 %v1256
    %2645 = vmatprep.subr.mxu0 %v1275
    %2646 = vmatpush1.msra.mxu0 %v1274
    %2647 = vmatprep.subr.mxu0 %v1293
    %2648 = vmatpush1.msra.mxu0 %v1292
    %2649 = vmatprep.subr.mxu0 %v1311
    %2650 = vmatpush1.msra.mxu0 %v1310
    %2651 = vmatprep.subr.mxu0 %v1329
    %2652 = vmatpush1.msra.mxu0 %v1328
    %2653 = vmatprep.subr.mxu0 %v1347
    %2654 = vmatpush1.msra.mxu0 %v1346
    %2655 = vmatprep.subr.mxu0 %v1365
    %2656 = vmatpush1.msra.mxu0 %v1364
    %2657 = vmatprep.subr.mxu0 %v1383
    %2658 = vmatpush1.msra.mxu0 %v1382
    %2659 = vmatprep.subr.mxu0 %v1401
    %2660 = vmatpush1.msra.mxu0 %v1400
    %2661 = vmatprep.subr.mxu0 %v1419
    %2662 = vmatpush1.msra.mxu0 %v1418
    %2663 = vmatprep.subr.mxu0 %v1437
    %2664 = vmatpush1.msra.mxu0 %v1436
    %2665 = vmatprep.mubr.f32.mxu0 %v287
    %2666 = vmatmul.mubr.f32.gmra.mrb[0].mxu0 %v286
    %v2667 = vpop.f32.mrb[0].mxu0
    %v2668 = vadd.f32 %v2597, %v2667
    %v2669 = vpop.f32.mrb[0].mxu0
    %v2670 = vadd.f32 %v2599, %v2669
    %2671 = vdwg.mxu0
    %2672 = vmatprep.subr.mxu0 %v305
    %2673 = vmatpush1.msra.mxu0 %v304
    %2674 = vmatprep.subr.mxu0 %v323
    %2675 = vmatpush1.msra.mxu0 %v322
    %2676 = vmatprep.subr.mxu0 %v341
    %2677 = vmatpush1.msra.mxu0 %v340
    %2678 = vmatprep.subr.mxu0 %v359
    %2679 = vmatpush1.msra.mxu0 %v358
    %2680 = vmatprep.subr.mxu0 %v377
    %2681 = vmatpush1.msra.mxu0 %v376
    %2682 = vmatprep.subr.mxu0 %v395
    %2683 = vmatpush1.msra.mxu0 %v394
    %2684 = vmatprep.subr.mxu0 %v413
    %2685 = vmatpush1.msra.mxu0 %v412
    %2686 = vmatprep.subr.mxu0 %v431
    %2687 = vmatpush1.msra.mxu0 %v430
    %2688 = vmatprep.subr.mxu0 %v449
    %2689 = vmatpush1.msra.mxu0 %v448
    %2690 = vmatprep.subr.mxu0 %v467
    %2691 = vmatpush1.msra.mxu0 %v466
    %2692 = vmatprep.subr.mxu0 %v485
    %2693 = vmatpush1.msra.mxu0 %v484
    %2694 = vmatprep.subr.mxu0 %v503
    %2695 = vmatpush1.msra.mxu0 %v502
    %2696 = vmatprep.subr.mxu0 %v521
    %2697 = vmatpush1.msra.mxu0 %v520
    %2698 = vmatprep.subr.mxu0 %v539
    %2699 = vmatpush1.msra.mxu0 %v538
    %2700 = vmatprep.subr.mxu0 %v557
    %2701 = vmatpush1.msra.mxu0 %v556
    %2702 = vmatprep.subr.mxu0 %v575
    %2703 = vmatpush1.msra.mxu0 %v574
    %2704 = vmatprep.subr.mxu0 %v593
    %2705 = vmatpush1.msra.mxu0 %v592
    %2706 = vmatprep.subr.mxu0 %v611
    %2707 = vmatpush1.msra.mxu0 %v610
    %2708 = vmatprep.subr.mxu0 %v629
    %2709 = vmatpush1.msra.mxu0 %v628
    %2710 = vmatprep.subr.mxu0 %v647
    %2711 = vmatpush1.msra.mxu0 %v646
    %2712 = vmatprep.subr.mxu0 %v665
    %2713 = vmatpush1.msra.mxu0 %v664
    %2714 = vmatprep.subr.mxu0 %v683
    %2715 = vmatpush1.msra.mxu0 %v682
    %2716 = vmatprep.subr.mxu0 %v701
    %2717 = vmatpush1.msra.mxu0 %v700
    %2718 = vmatprep.subr.mxu0 %v719
    %2719 = vmatpush1.msra.mxu0 %v718
    %2720 = vmatprep.subr.mxu0 %v737
    %2721 = vmatpush1.msra.mxu0 %v736
    %2722 = vmatprep.subr.mxu0 %v755
    %2723 = vmatpush1.msra.mxu0 %v754
    %2724 = vmatprep.subr.mxu0 %v773
    %2725 = vmatpush1.msra.mxu0 %v772
    %2726 = vmatprep.subr.mxu0 %v791
    %2727 = vmatpush1.msra.mxu0 %v790
    %2728 = vmatprep.subr.mxu0 %v809
    %2729 = vmatpush1.msra.mxu0 %v808
    %2730 = vmatprep.subr.mxu0 %v827
    %2731 = vmatpush1.msra.mxu0 %v826
    %2732 = vmatprep.subr.mxu0 %v845
    %2733 = vmatpush1.msra.mxu0 %v844
    %2734 = vmatprep.subr.mxu0 %v863
    %2735 = vmatpush1.msra.mxu0 %v862
    %2736 = vmatprep.mubr.f32.mxu0 %v285
    %2737 = vmatmul.mubr.f32.gmra.mrb[0].mxu0 %v284
    %v2738 = vpop.f32.mrb[0].mxu0
    %v2739 = vadd.f32 %v1513, %v2738
    %v2740 = vpop.f32.mrb[0].mxu0
    %v2741 = vadd.f32 %v1517, %v2740
    %2742 = vdwg.mxu0
    %2743 = vmatprep.subr.mxu0 %v881
    %2744 = vmatpush1.msra.mxu0 %v880
    %2745 = vmatprep.subr.mxu0 %v899
    %2746 = vmatpush1.msra.mxu0 %v898
    %2747 = vmatprep.subr.mxu0 %v917
    %2748 = vmatpush1.msra.mxu0 %v916
    %2749 = vmatprep.subr.mxu0 %v935
    %2750 = vmatpush1.msra.mxu0 %v934
    %2751 = vmatprep.subr.mxu0 %v953
    %2752 = vmatpush1.msra.mxu0 %v952
    %2753 = vmatprep.subr.mxu0 %v971
    %2754 = vmatpush1.msra.mxu0 %v970
    %2755 = vmatprep.subr.mxu0 %v989
    %2756 = vmatpush1.msra.mxu0 %v988
    %2757 = vmatprep.subr.mxu0 %v1007
    %2758 = vmatpush1.msra.mxu0 %v1006
    %2759 = vmatprep.subr.mxu0 %v1025
    %2760 = vmatpush1.msra.mxu0 %v1024
    %2761 = vmatprep.subr.mxu0 %v1043
    %2762 = vmatpush1.msra.mxu0 %v1042
    %2763 = vmatprep.subr.mxu0 %v1061
    %2764 = vmatpush1.msra.mxu0 %v1060
    %2765 = vmatprep.subr.mxu0 %v1079
    %2766 = vmatpush1.msra.mxu0 %v1078
    %2767 = vmatprep.subr.mxu0 %v1097
    %2768 = vmatpush1.msra.mxu0 %v1096
    %2769 = vmatprep.subr.mxu0 %v1115
    %2770 = vmatpush1.msra.mxu0 %v1114
    %2771 = vmatprep.subr.mxu0 %v1133
    %2772 = vmatpush1.msra.mxu0 %v1132
    %2773 = vmatprep.subr.mxu0 %v1151
    %2774 = vmatpush1.msra.mxu0 %v1150
    %2775 = vmatprep.subr.mxu0 %v1169
    %2776 = vmatpush1.msra.mxu0 %v1168
    %2777 = vmatprep.subr.mxu0 %v1187
    %2778 = vmatpush1.msra.mxu0 %v1186
    %2779 = vmatprep.subr.mxu0 %v1205
    %2780 = vmatpush1.msra.mxu0 %v1204
    %2781 = vmatprep.subr.mxu0 %v1223
    %2782 = vmatpush1.msra.mxu0 %v1222
    %2783 = vmatprep.subr.mxu0 %v1241
    %2784 = vmatpush1.msra.mxu0 %v1240
    %2785 = vmatprep.subr.mxu0 %v1259
    %2786 = vmatpush1.msra.mxu0 %v1258
    %2787 = vmatprep.subr.mxu0 %v1277
    %2788 = vmatpush1.msra.mxu0 %v1276
    %2789 = vmatprep.subr.mxu0 %v1295
    %2790 = vmatpush1.msra.mxu0 %v1294
    %2791 = vmatprep.subr.mxu0 %v1313
    %2792 = vmatpush1.msra.mxu0 %v1312
    %2793 = vmatprep.subr.mxu0 %v1331
    %2794 = vmatpush1.msra.mxu0 %v1330
    %2795 = vmatprep.subr.mxu0 %v1349
    %2796 = vmatpush1.msra.mxu0 %v1348
    %2797 = vmatprep.subr.mxu0 %v1367
    %2798 = vmatpush1.msra.mxu0 %v1366
    %2799 = vmatprep.subr.mxu0 %v1385
    %2800 = vmatpush1.msra.mxu0 %v1384
    %2801 = vmatprep.subr.mxu0 %v1403
    %2802 = vmatpush1.msra.mxu0 %v1402
    %2803 = vmatprep.subr.mxu0 %v1421
    %2804 = vmatpush1.msra.mxu0 %v1420
    %2805 = vmatprep.subr.mxu0 %v1439
    %2806 = vmatpush1.msra.mxu0 %v1438
    %2807 = vmatprep.mubr.f32.mxu0 %v287
    %2808 = vmatmul.mubr.f32.gmra.mrb[0].mxu0 %v286
    %v2809 = vpop.f32.mrb[0].mxu0
    %v2810 = vadd.f32 %v2739, %v2809
    %v2811 = vpop.f32.mrb[0].mxu0
    %v2812 = vadd.f32 %v2741, %v2811
    %2813 = vdwg.mxu0
    %2814 = vst [vmem:[#allocation11] sm:$0xff] %v1674
    %2815 = vst [vmem:[#allocation11 + $0x8] sm:$0xff] %v1676
    %2816 = vst [vmem:[#allocation11 + $0x10] sm:$0xff] %v1816
    %2817 = vst [vmem:[#allocation11 + $0x18] sm:$0xff] %v1818
    %2818 = vst [vmem:[#allocation11 + $0x20] sm:$0xff] %v1958
    %2819 = vst [vmem:[#allocation11 + $0x28] sm:$0xff] %v1960
    %2820 = vst [vmem:[#allocation11 + $0x30] sm:$0xff] %v2100
    %2821 = vst [vmem:[#allocation11 + $0x38] sm:$0xff] %v2102
    %2822 = vst [vmem:[#allocation11 + $0x40] sm:$0xff] %v2242
    %2823 = vst [vmem:[#allocation11 + $0x48] sm:$0xff] %v2244
    %2824 = vst [vmem:[#allocation11 + $0x50] sm:$0xff] %v2384
    %2825 = vst [vmem:[#allocation11 + $0x58] sm:$0xff] %v2386
    %2826 = vst [vmem:[#allocation11 + $0x60] sm:$0xff] %v2526
    %2827 = vst [vmem:[#allocation11 + $0x68] sm:$0xff] %v2528
    %2828 = vst [vmem:[#allocation11 + $0x70] sm:$0xff] %v2668
    %2829 = vst [vmem:[#allocation11 + $0x78] sm:$0xff] %v2670
    %2830 = vst [vmem:[#allocation11 + $0x80] sm:$0xff] %v2810
    %2831 = vst [vmem:[#allocation11 + $0x88] sm:$0xff] %v2812
    // Predicated region
    $region42: #{tpu_custom_call.1} parent=1 // pred_check
      _
    $region43: #{tpu_custom_call.1} parent=1 // pred_check_branch
      %2833 = sbr.rel (0) target = $region45
    $region44: #{tpu_custom_call.1} parent=1 // pred_region
      %s2835 = ssub.s32 2304, 2304
      %2836 = vsyncadd [#allocation4], %s2835
      %s2838 = sshll.u32 [#allocation11], 4
      %s2839 = int_to_ptr.vmem [resolvable:$true] %s2838
      %2841 = dma.vmem_to_hbm [thread:$0]  %s2839, 2304, %s5, [#allocation4]
    $region45: #{tpu_custom_call.1} parent=1 // pred_fallthru
      _
    // Predicated region
    $region46: #{tpu_custom_call.1} parent=1 // pred_check
      _
    $region47: #{tpu_custom_call.1} parent=1 // pred_check_branch
      %2843 = sbr.rel (0) target = $region49
    $region48: #{tpu_custom_call.1} parent=1 // pred_region
      %2844 = dma.done [#allocation4], 2304
    $region49: #{tpu_custom_call.1} parent=1 // pred_fallthru
      _
    %2845 = vsyncpa [#allocation3], 1
    %2846 = vsyncpa [#allocation6], 1
    %2847 = vsyncpa [#allocation9], 1
    %2848 = vsyncpa [#allocation4], 1

</llo_original>
